<compile_context>
chip_gen: v6e
topology: v6e:2x2x1
jax: 0.10.0
libtpu: 0.0.40
codegen_flags: <defaults>
</compile_context>

<pallas_src>
import jax
import jax.numpy as jnp
from jax.experimental import pallas as pl
from jax.experimental.pallas import tpu as pltpu

EXPANSION = 4
KSIZE = 7
PAD = 3


def bottleneck_kernel(x_ref, w1_ref, s1_ref, b1_ref,
                      w2_ref, s2_ref, b2_ref,
                      w3_ref, s3_ref, b3_ref,
                      wse1_ref, wse2_ref,
                      out_ref, pad_ref):
    Bt, L, C = x_ref.shape
    P = w1_ref.shape[1]
    P4 = w3_ref.shape[1]

    # ---- conv1 (1x1) + bn1 + relu: one matmul over Bt*L rows --------------
    x16 = x_ref[...].reshape(Bt * L, C).astype(jnp.bfloat16)
    h1 = jnp.dot(x16, w1_ref[...], preferred_element_type=jnp.float32)
    h1 = jnp.maximum(h1 * s1_ref[...] + b1_ref[...], 0.0)            # (Bt*L, P) f32

    # ---- conv2 (k=7, pad=3, stride=1) + bn2 + relu: ONE im2col matmul -----
    # Zero only the 2*PAD halo rows; interior rows are overwritten each step.
    # (Not gated on program_id==0: with a "parallel" grid axis each core has
    #  its own scratch, so a step-0 gate would leave other cores' halos
    #  undefined.)
    zero_halo = jnp.zeros((Bt, PAD, P), jnp.float32)
    pad_ref[:, 0:PAD, :] = zero_halo
    pad_ref[:, PAD + L:PAD + L + PAD, :] = zero_halo
    pad_ref[:, PAD:PAD + L, :] = h1.reshape(Bt, L, P)

    # im2col: tap k occupies the 128-aligned lane block [k*P, (k+1)*P).
    cols = jnp.concatenate([pad_ref[:, k:k + L, :] for k in range(KSIZE)],
                           axis=-1).reshape(Bt * L, KSIZE * P)
    h2 = jnp.dot(cols.astype(jnp.bfloat16), w2_ref[...],
                 preferred_element_type=jnp.float32)                 # (Bt*L, P)
    h2 = jnp.maximum(h2 * s2_ref[...] + b2_ref[...], 0.0)
    # dropout (p=0.2) is identity in eval mode.
    # TODO(synk): training-mode dropout / batch-stats BN not implemented (inference semantics).

    # ---- conv3 (1x1) + bn3 -------------------------------------------------
    h3 = jnp.dot(h2.astype(jnp.bfloat16), w3_ref[...],
                 preferred_element_type=jnp.float32)                 # (Bt*L, P4)
    h3 = (h3 * s3_ref[...] + b3_ref[...]).reshape(Bt, L, P4)

    # ---- SE gate: GAP over L + two tiny FCs kept off the MXU (VPU/XLU) ----
    m = jnp.mean(h3, axis=1)                                         # (Bt, P4)
    z = jnp.maximum(
        jnp.sum(m[:, None, :] * wse1_ref[...][None, :, :], axis=-1), 0.0)   # (Bt, Cr)
    gate = jax.nn.sigmoid(
        jnp.sum(z[:, :, None] * wse2_ref[...][None, :, :], axis=1))         # (Bt, P4)

    # ---- SE scale + identity residual (downsample=None, stride=1) + relu --
    out_ref[...] = jnp.maximum(h3 * gate[:, None, :] + x_ref[...], 0.0)


def _pick_batch_tile(B, L):
    """Largest divisor of B that keeps M = Bt*L moderate and leaves >= 2 grid
    steps (so both v7x TensorCores get work when B permits)."""
    best = 1
    for d in range(1, B + 1):
        if B % d == 0 and d * L <= 512 and (B // d >= 2 or B == 1):
            best = d
    return best


def bottleneck_forward(x_ncl, params, batch_tile=None):
    """x_ncl: (B, C, L) float32 with C == planes*4.  Returns (B, C, L) float32."""
    w1, s1, b1, w2, s2, b2, w3, s3, b3, wse1, wse2 = params
    B, C, L = x_ncl.shape
    P = w1.shape[1]
    P4 = w3.shape[1]
    Cr = wse1.shape[0]
    assert C == P4, "identity residual requires inplanes == planes*expansion"
    assert L % 8 == 0, "kernel assumes L is a multiple of 8 (clean sublane reshapes)"
    Bt = batch_tile if batch_tile is not None else _pick_batch_tile(B, L)
    assert B % Bt == 0

    x = jnp.transpose(x_ncl, (0, 2, 1))                              # (B, L, C)

    out = pl.pallas_call(
        bottleneck_kernel,
        out_shape=jax.ShapeDtypeStruct((B, L, P4), jnp.float32),
        grid_spec=pltpu.PrefetchScalarGridSpec(
            num_scalar_prefetch=0,
            grid=(B // Bt,),
            in_specs=[
                pl.BlockSpec((Bt, L, C), lambda b: (b, 0, 0)),        # x
                pl.BlockSpec((C, P), lambda b: (0, 0)),               # w1   (Cin, P)   bf16
                pl.BlockSpec((1, P), lambda b: (0, 0)),               # bn1 scale
                pl.BlockSpec((1, P), lambda b: (0, 0)),               # bn1 bias
                pl.BlockSpec((KSIZE * P, P), lambda b: (0, 0)),       # w2   (K*P, P)   bf16 (im2col)
                pl.BlockSpec((1, P), lambda b: (0, 0)),               # bn2 scale
                pl.BlockSpec((1, P), lambda b: (0, 0)),               # bn2 bias
                pl.BlockSpec((P, P4), lambda b: (0, 0)),              # w3   (P, P4)    bf16
                pl.BlockSpec((1, P4), lambda b: (0, 0)),              # bn3 scale
                pl.BlockSpec((1, P4), lambda b: (0, 0)),              # bn3 bias
                pl.BlockSpec((Cr, P4), lambda b: (0, 0)),             # SE fc1          f32
                pl.BlockSpec((Cr, P4), lambda b: (0, 0)),             # SE fc2 (pre-T)  f32
            ],
            out_specs=pl.BlockSpec((Bt, L, P4), lambda b: (b, 0, 0)),
            scratch_shapes=[pltpu.VMEM((Bt, L + 2 * PAD, P), jnp.float32)],
        ),
        compiler_params=pltpu.CompilerParams(
            dimension_semantics=("parallel",),
            vmem_limit_bytes=32 * 1024 * 1024),
    )(x, w1, s1, b1, w2, s2, b2, w3, s3, b3, wse1, wse2)

    return jnp.transpose(out, (0, 2, 1))                             # (B, C, L)


def init_params(key, inplanes, planes, reduction=16):
    P = planes
    P4 = planes * EXPANSION
    Cr = P4 // reduction
    keys = jax.random.split(key, 17)

    def fold_bn(kg, kb, km, kv, n):
        gamma = (1.0 + 0.1 * jax.random.normal(kg, (n,))).astype(jnp.float32)
        beta = (0.1 * jax.random.normal(kb, (n,))).astype(jnp.float32)
        mean = (0.1 * jax.random.normal(km, (n,))).astype(jnp.float32)
        var = (jnp.abs(jax.random.normal(kv, (n,))) + 0.5).astype(jnp.float32)
        scale = gamma / jnp.sqrt(var + 1e-5)
        bias = beta - mean * scale
        return scale.reshape(1, n), bias.reshape(1, n)

    # PyTorch-layout weights ...
    w1_oi = 0.05 * jax.random.normal(keys[0], (P, inplanes), jnp.float32)    # conv1 (out, in)
    s1, b1 = fold_bn(keys[1], keys[2], keys[3], keys[4], P)
    w2_oik = 0.05 * jax.random.normal(keys[5], (P, P, KSIZE), jnp.float32)   # conv2 (out, in, k)
    s2, b2 = fold_bn(keys[6], keys[7], keys[8], keys[9], P)
    w3_oi = 0.05 * jax.random.normal(keys[10], (P4, P), jnp.float32)         # conv3 (out, in)
    s3, b3 = fold_bn(keys[11], keys[12], keys[13], keys[14], P4)
    wse1_oi = 0.2 * jax.random.normal(keys[15], (Cr, P4), jnp.float32)       # SE fc1 (out, in)
    wse2_oi = 0.2 * jax.random.normal(keys[16], (P4, Cr), jnp.float32)       # SE fc2 (out, in)

    # ... converted ONCE to the kernel's MXU/VPU-native layouts.
    w1 = jnp.transpose(w1_oi).astype(jnp.bfloat16)                           # (Cin, P)
    w2 = jnp.transpose(w2_oik, (2, 1, 0)).reshape(KSIZE * P, P).astype(jnp.bfloat16)
    w3 = jnp.transpose(w3_oi).astype(jnp.bfloat16)                           # (P, P4)
    wse1 = wse1_oi                                                           # (Cr, P4) f32 (VPU)
    wse2 = jnp.transpose(wse2_oi)                                            # (Cr, P4) f32 (VPU)
    return (w1, s1, b1, w2, s2, b2, w3, s3, b3, wse1, wse2)


def reference_forward(x_ncl, params):
    """Pure-JAX reference doing identical (bf16-matmul, f32-accumulate) math."""
    w1, s1, b1, w2, s2, b2, w3, s3, b3, wse1, wse2 = params
    x = jnp.transpose(x_ncl, (0, 2, 1))                              # (B, L, C)
    B, L, C = x.shape
    h1 = jnp.einsum('blc,cp->blp', x.astype(jnp.bfloat16), w1,
                    preferred_element_type=jnp.float32)
    h1 = jnp.maximum(h1 * s1 + b1, 0.0)
    h1p = jnp.pad(h1, ((0, 0), (PAD, PAD), (0, 0)))
    cols = jnp.concatenate([h1p[:, k:k + L, :] for k in range(KSIZE)], axis=-1)
    h2 = jnp.einsum('blk,kp->blp', cols.astype(jnp.bfloat16), w2,
                    preferred_element_type=jnp.float32)
    h2 = jnp.maximum(h2 * s2 + b2, 0.0)
    h3 = jnp.einsum('blp,pq->blq', h2.astype(jnp.bfloat16), w3,
                    preferred_element_type=jnp.float32)
    h3 = h3 * s3 + b3
    m = jnp.mean(h3, axis=1)                                         # (B, P4)
    z = jnp.maximum(jnp.sum(m[:, None, :] * wse1[None], axis=-1), 0.0)
    gate = jax.nn.sigmoid(jnp.sum(z[:, :, None] * wse2[None], axis=1))
    out = jnp.maximum(h3 * gate[:, None, :] + x, 0.0)
    return jnp.transpose(out, (0, 2, 1))


if __name__ == "__main__":
    # SE-ResNet-50 style block: inplanes == planes*4 so the identity residual
    # is valid; planes*4 = 512 keeps every channel access 128-lane dense.
    B, inplanes, planes, L = 4, 512, 128, 64
    key = jax.random.PRNGKey(0)
    kx, kp = jax.random.split(key)
    x = jax.random.normal(kx, (B, inplanes, L), jnp.float32)
    params = init_params(kp, inplanes, planes)

    out = jax.block_until_ready(bottleneck_forward(x, params))
    assert out.shape == (B, planes * EXPANSION, L)

    ref = reference_forward(x, params)
    assert jnp.allclose(out, ref, rtol=5e-3, atol=5e-3), "mismatch vs reference"
    print("KERNEL_OK")
</pallas_src>

<mosaic_0001>
module attributes {stable_mosaic.version = 11 : i64} {
  func.func @bottleneck_kernel(%arg0: i32, %arg1: memref<2x64x512xf32, #tpu.memory_space<vmem>>, %arg2: memref<512x128xbf16, #tpu.memory_space<vmem>>, %arg3: memref<1x128xf32, #tpu.memory_space<vmem>>, %arg4: memref<1x128xf32, #tpu.memory_space<vmem>>, %arg5: memref<896x128xbf16, #tpu.memory_space<vmem>>, %arg6: memref<1x128xf32, #tpu.memory_space<vmem>>, %arg7: memref<1x128xf32, #tpu.memory_space<vmem>>, %arg8: memref<128x512xbf16, #tpu.memory_space<vmem>>, %arg9: memref<1x512xf32, #tpu.memory_space<vmem>>, %arg10: memref<1x512xf32, #tpu.memory_space<vmem>>, %arg11: memref<32x512xf32, #tpu.memory_space<vmem>>, %arg12: memref<32x512xf32, #tpu.memory_space<vmem>>, %arg13: memref<2x64x512xf32, #tpu.memory_space<vmem>>, %arg14: memref<2x70x128xf32, #tpu.memory_space<vmem>>) attributes {dimension_semantics = [#tpu.dimension_semantics<parallel>], iteration_bounds = array<i64: 2>, scalar_prefetch = 0 : i64, scratch_operands = 1 : i64, tpu.core_type = #tpu.core_type<tc>, window_params = [{transform_indices = @transform_0, window_bounds = array<i64: 2, 64, 512>}, {pipeline_mode = #tpu.pipeline_mode<synchronous>, transform_indices = @transform_1, window_bounds = array<i64: 512, 128>}, {pipeline_mode = #tpu.pipeline_mode<synchronous>, transform_indices = @transform_2, window_bounds = array<i64: 1, 128>}, {pipeline_mode = #tpu.pipeline_mode<synchronous>, transform_indices = @transform_3, window_bounds = array<i64: 1, 128>}, {pipeline_mode = #tpu.pipeline_mode<synchronous>, transform_indices = @transform_4, window_bounds = array<i64: 896, 128>}, {pipeline_mode = #tpu.pipeline_mode<synchronous>, transform_indices = @transform_5, window_bounds = array<i64: 1, 128>}, {pipeline_mode = #tpu.pipeline_mode<synchronous>, transform_indices = @transform_6, window_bounds = array<i64: 1, 128>}, {pipeline_mode = #tpu.pipeline_mode<synchronous>, transform_indices = @transform_7, window_bounds = array<i64: 128, 512>}, {pipeline_mode = #tpu.pipeline_mode<synchronous>, transform_indices = @transform_8, window_bounds = array<i64: 1, 512>}, {pipeline_mode = #tpu.pipeline_mode<synchronous>, transform_indices = @transform_9, window_bounds = array<i64: 1, 512>}, {pipeline_mode = #tpu.pipeline_mode<synchronous>, transform_indices = @transform_10, window_bounds = array<i64: 32, 512>}, {pipeline_mode = #tpu.pipeline_mode<synchronous>, transform_indices = @transform_11, window_bounds = array<i64: 32, 512>}, {transform_indices = @transform_12, window_bounds = array<i64: 2, 64, 512>}]} {
    %c0 = arith.constant 0 : index
    %c0_0 = arith.constant 0 : index
    %c0_1 = arith.constant 0 : index
    %0 = vector.load %arg1[%c0, %c0_0, %c0_1] : memref<2x64x512xf32, #tpu.memory_space<vmem>>, vector<2x64x512xf32>
    %1 = vector.shape_cast %0 : vector<2x64x512xf32> to vector<128x512xf32>
    %2 = arith.truncf %1 : vector<128x512xf32> to vector<128x512xbf16>
    %c0_2 = arith.constant 0 : index
    %c0_3 = arith.constant 0 : index
    %3 = vector.load %arg2[%c0_2, %c0_3] : memref<512x128xbf16, #tpu.memory_space<vmem>>, vector<512x128xbf16>
    %cst = arith.constant dense<0.000000e+00> : vector<128x128xf32>
    %4 = tpu.matmul %2, %3, %cst {dimension_numbers = #tpu.dot_dimension_numbers<[1], [0], [0], [1], [0, 0, 1, 1], [], []>} : vector<128x512xbf16>, vector<512x128xbf16>, vector<128x128xf32> -> vector<128x128xf32>
    %c0_4 = arith.constant 0 : index
    %c0_5 = arith.constant 0 : index
    %5 = vector.load %arg3[%c0_4, %c0_5] : memref<1x128xf32, #tpu.memory_space<vmem>>, vector<1x128xf32>
    %6 = vector.broadcast %5 : vector<1x128xf32> to vector<128x128xf32>
    %7 = arith.mulf %4, %6 : vector<128x128xf32>
    %c0_6 = arith.constant 0 : index
    %c0_7 = arith.constant 0 : index
    %8 = vector.load %arg4[%c0_6, %c0_7] : memref<1x128xf32, #tpu.memory_space<vmem>>, vector<1x128xf32>
    %9 = vector.broadcast %8 : vector<1x128xf32> to vector<128x128xf32>
    %10 = arith.addf %7, %9 : vector<128x128xf32>
    %cst_8 = arith.constant 0.000000e+00 : f32
    %11 = vector.broadcast %cst_8 : f32 to vector<128x128xf32>
    %12 = arith.maximumf %10, %11 : vector<128x128xf32>
    %cst_9 = arith.constant 0.000000e+00 : f32
    %13 = vector.broadcast %cst_9 : f32 to vector<2x3x128xf32>
    %c0_10 = arith.constant 0 : index
    %c0_11 = arith.constant 0 : index
    %c0_12 = arith.constant 0 : index
    %14 = vector.load %arg14[%c0_10, %c0_11, %c0_12] : memref<2x70x128xf32, #tpu.memory_space<vmem>>, vector<2x3x128xf32>
    tpu.vector_store %arg14[%c0_10, %c0_11, %c0_12], %13 {strides = array<i32>} : memref<2x70x128xf32, #tpu.memory_space<vmem>>, vector<2x3x128xf32>,
    %c0_13 = arith.constant 0 : index
    %c67 = arith.constant 67 : index
    %c0_14 = arith.constant 0 : index
    %15 = vector.load %arg14[%c0_13, %c67, %c0_14] : memref<2x70x128xf32, #tpu.memory_space<vmem>>, vector<2x3x128xf32>
    tpu.vector_store %arg14[%c0_13, %c67, %c0_14], %13 {strides = array<i32>} : memref<2x70x128xf32, #tpu.memory_space<vmem>>, vector<2x3x128xf32>,
    %16 = vector.shape_cast %12 : vector<128x128xf32> to vector<2x64x128xf32>
    %c0_15 = arith.constant 0 : index
    %c3 = arith.constant 3 : index
    %c0_16 = arith.constant 0 : index
    %17 = vector.load %arg14[%c0_15, %c3, %c0_16] : memref<2x70x128xf32, #tpu.memory_space<vmem>>, vector<2x64x128xf32>
    tpu.vector_store %arg14[%c0_15, %c3, %c0_16], %16 {strides = array<i32>} : memref<2x70x128xf32, #tpu.memory_space<vmem>>, vector<2x64x128xf32>,
    %c0_17 = arith.constant 0 : index
    %c0_18 = arith.constant 0 : index
    %c0_19 = arith.constant 0 : index
    %18 = vector.load %arg14[%c0_17, %c0_18, %c0_19] : memref<2x70x128xf32, #tpu.memory_space<vmem>>, vector<2x64x128xf32>
    %c0_20 = arith.constant 0 : index
    %c1 = arith.constant 1 : index
    %c0_21 = arith.constant 0 : index
    %19 = vector.load %arg14[%c0_20, %c1, %c0_21] : memref<2x70x128xf32, #tpu.memory_space<vmem>>, vector<2x64x128xf32>
    %c0_22 = arith.constant 0 : index
    %c2 = arith.constant 2 : index
    %c0_23 = arith.constant 0 : index
    %20 = vector.load %arg14[%c0_22, %c2, %c0_23] : memref<2x70x128xf32, #tpu.memory_space<vmem>>, vector<2x64x128xf32>
    %c0_24 = arith.constant 0 : index
    %c3_25 = arith.constant 3 : index
    %c0_26 = arith.constant 0 : index
    %21 = vector.load %arg14[%c0_24, %c3_25, %c0_26] : memref<2x70x128xf32, #tpu.memory_space<vmem>>, vector<2x64x128xf32>
    %c0_27 = arith.constant 0 : index
    %c4 = arith.constant 4 : index
    %c0_28 = arith.constant 0 : index
    %22 = vector.load %arg14[%c0_27, %c4, %c0_28] : memref<2x70x128xf32, #tpu.memory_space<vmem>>, vector<2x64x128xf32>
    %c0_29 = arith.constant 0 : index
    %c5 = arith.constant 5 : index
    %c0_30 = arith.constant 0 : index
    %23 = vector.load %arg14[%c0_29, %c5, %c0_30] : memref<2x70x128xf32, #tpu.memory_space<vmem>>, vector<2x64x128xf32>
    %c0_31 = arith.constant 0 : index
    %c6 = arith.constant 6 : index
    %c0_32 = arith.constant 0 : index
    %24 = vector.load %arg14[%c0_31, %c6, %c0_32] : memref<2x70x128xf32, #tpu.memory_space<vmem>>, vector<2x64x128xf32>
    %25 = tpu.concatenate %18, %19, %20, %21, %22, %23, %24 in 2 : vector<2x64x128xf32>, vector<2x64x128xf32>, vector<2x64x128xf32>, vector<2x64x128xf32>, vector<2x64x128xf32>, vector<2x64x128xf32>, vector<2x64x128xf32> -> vector<2x64x896xf32>
    %26 = vector.shape_cast %25 : vector<2x64x896xf32> to vector<128x896xf32>
    %27 = arith.truncf %26 : vector<128x896xf32> to vector<128x896xbf16>
    %c0_33 = arith.constant 0 : index
    %c0_34 = arith.constant 0 : index
    %28 = vector.load %arg5[%c0_33, %c0_34] : memref<896x128xbf16, #tpu.memory_space<vmem>>, vector<896x128xbf16>
    %cst_35 = arith.constant dense<0.000000e+00> : vector<128x128xf32>
    %29 = tpu.matmul %27, %28, %cst_35 {dimension_numbers = #tpu.dot_dimension_numbers<[1], [0], [0], [1], [0, 0, 1, 1], [], []>} : vector<128x896xbf16>, vector<896x128xbf16>, vector<128x128xf32> -> vector<128x128xf32>
    %c0_36 = arith.constant 0 : index
    %c0_37 = arith.constant 0 : index
    %30 = vector.load %arg6[%c0_36, %c0_37] : memref<1x128xf32, #tpu.memory_space<vmem>>, vector<1x128xf32>
    %31 = vector.broadcast %30 : vector<1x128xf32> to vector<128x128xf32>
    %32 = arith.mulf %29, %31 : vector<128x128xf32>
    %c0_38 = arith.constant 0 : index
    %c0_39 = arith.constant 0 : index
    %33 = vector.load %arg7[%c0_38, %c0_39] : memref<1x128xf32, #tpu.memory_space<vmem>>, vector<1x128xf32>
    %34 = vector.broadcast %33 : vector<1x128xf32> to vector<128x128xf32>
    %35 = arith.addf %32, %34 : vector<128x128xf32>
    %cst_40 = arith.constant 0.000000e+00 : f32
    %36 = vector.broadcast %cst_40 : f32 to vector<128x128xf32>
    %37 = arith.maximumf %35, %36 : vector<128x128xf32>
    %38 = arith.truncf %37 : vector<128x128xf32> to vector<128x128xbf16>
    %c0_41 = arith.constant 0 : index
    %c0_42 = arith.constant 0 : index
    %39 = vector.load %arg8[%c0_41, %c0_42] : memref<128x512xbf16, #tpu.memory_space<vmem>>, vector<128x512xbf16>
    %cst_43 = arith.constant dense<0.000000e+00> : vector<128x512xf32>
    %40 = tpu.matmul %38, %39, %cst_43 {dimension_numbers = #tpu.dot_dimension_numbers<[1], [0], [0], [1], [0, 0, 1, 1], [], []>} : vector<128x128xbf16>, vector<128x512xbf16>, vector<128x512xf32> -> vector<128x512xf32>
    %c0_44 = arith.constant 0 : index
    %c0_45 = arith.constant 0 : index
    %41 = vector.load %arg9[%c0_44, %c0_45] : memref<1x512xf32, #tpu.memory_space<vmem>>, vector<1x512xf32>
    %42 = vector.broadcast %41 : vector<1x512xf32> to vector<128x512xf32>
    %43 = arith.mulf %40, %42 : vector<128x512xf32>
    %c0_46 = arith.constant 0 : index
    %c0_47 = arith.constant 0 : index
    %44 = vector.load %arg10[%c0_46, %c0_47] : memref<1x512xf32, #tpu.memory_space<vmem>>, vector<1x512xf32>
    %45 = vector.broadcast %44 : vector<1x512xf32> to vector<128x512xf32>
    %46 = arith.addf %43, %45 : vector<128x512xf32>
    %47 = vector.shape_cast %46 : vector<128x512xf32> to vector<2x64x512xf32>
    %cst_48 = arith.constant dense<0.000000e+00> : vector<2x512xf32>
    %48 = vector.multi_reduction <add>, %47, %cst_48 [1] : vector<2x64x512xf32> to vector<2x512xf32>
    %cst_49 = arith.constant 6.400000e+01 : f32
    %49 = vector.broadcast %cst_49 : f32 to vector<2x512xf32>
    %50 = arith.divf %48, %49 : vector<2x512xf32>
    %51 = vector.shape_cast %50 : vector<2x512xf32> to vector<2x1x512xf32>
    %c0_50 = arith.constant 0 : index
    %c0_51 = arith.constant 0 : index
    %52 = vector.load %arg11[%c0_50, %c0_51] : memref<32x512xf32, #tpu.memory_space<vmem>>, vector<32x512xf32>
    %53 = vector.shape_cast %52 : vector<32x512xf32> to vector<1x32x512xf32>
    %54 = vector.broadcast %51 : vector<2x1x512xf32> to vector<2x32x512xf32>
    %55 = vector.broadcast %53 : vector<1x32x512xf32> to vector<2x32x512xf32>
    %56 = arith.mulf %54, %55 : vector<2x32x512xf32>
    %cst_52 = arith.constant dense<0.000000e+00> : vector<2x32xf32>
    %57 = vector.multi_reduction <add>, %56, %cst_52 [2] : vector<2x32x512xf32> to vector<2x32xf32>
    %cst_53 = arith.constant 0.000000e+00 : f32
    %58 = vector.broadcast %cst_53 : f32 to vector<2x32xf32>
    %59 = arith.maximumf %57, %58 : vector<2x32xf32>
    %60 = vector.shape_cast %59 : vector<2x32xf32> to vector<2x32x1xf32>
    %c0_54 = arith.constant 0 : index
    %c0_55 = arith.constant 0 : index
    %61 = vector.load %arg12[%c0_54, %c0_55] : memref<32x512xf32, #tpu.memory_space<vmem>>, vector<32x512xf32>
    %62 = vector.shape_cast %61 : vector<32x512xf32> to vector<1x32x512xf32>
    %63 = vector.broadcast %60 : vector<2x32x1xf32> to vector<2x32x512xf32>
    %64 = vector.broadcast %62 : vector<1x32x512xf32> to vector<2x32x512xf32>
    %65 = arith.mulf %63, %64 : vector<2x32x512xf32>
    %cst_56 = arith.constant dense<0.000000e+00> : vector<2x512xf32>
    %66 = vector.multi_reduction <add>, %65, %cst_56 [1] : vector<2x32x512xf32> to vector<2x512xf32>
    %67 = arith.negf %66 : vector<2x512xf32>
    %68 = math.exp %67 : vector<2x512xf32>
    %cst_57 = arith.constant 1.000000e+00 : f32
    %69 = vector.broadcast %cst_57 : f32 to vector<2x512xf32>
    %70 = arith.addf %69, %68 : vector<2x512xf32>
    %71 = arith.divf %69, %70 : vector<2x512xf32>
    %72 = vector.shape_cast %71 : vector<2x512xf32> to vector<2x1x512xf32>
    %73 = vector.broadcast %72 : vector<2x1x512xf32> to vector<2x64x512xf32>
    %74 = arith.mulf %47, %73 : vector<2x64x512xf32>
    %c0_58 = arith.constant 0 : index
    %c0_59 = arith.constant 0 : index
    %c0_60 = arith.constant 0 : index
    %75 = vector.load %arg1[%c0_58, %c0_59, %c0_60] : memref<2x64x512xf32, #tpu.memory_space<vmem>>, vector<2x64x512xf32>
    %76 = arith.addf %74, %75 : vector<2x64x512xf32>
    %cst_61 = arith.constant 0.000000e+00 : f32
    %77 = vector.broadcast %cst_61 : f32 to vector<2x64x512xf32>
    %78 = arith.maximumf %76, %77 : vector<2x64x512xf32>
    %c0_62 = arith.constant 0 : index
    %c0_63 = arith.constant 0 : index
    %c0_64 = arith.constant 0 : index
    %79 = vector.load %arg13[%c0_62, %c0_63, %c0_64] : memref<2x64x512xf32, #tpu.memory_space<vmem>>, vector<2x64x512xf32>
    tpu.vector_store %arg13[%c0_62, %c0_63, %c0_64], %78 {strides = array<i32>} : memref<2x64x512xf32, #tpu.memory_space<vmem>>, vector<2x64x512xf32>,
    return
  }
  func.func @transform_0(%arg0: i32) -> (i32, i32, i32) {
    %c0_i32 = arith.constant 0 : i32
    %c0_i32_0 = arith.constant 0 : i32
    %c0_i32_1 = arith.constant 0 : i32
    return %arg0, %c0_i32, %c0_i32_0 : i32, i32, i32
  }
  func.func @transform_1(%arg0: i32) -> (i32, i32) {
    %c0_i32 = arith.constant 0 : i32
    %c0_i32_0 = arith.constant 0 : i32
    %c0_i32_1 = arith.constant 0 : i32
    return %c0_i32, %c0_i32_0 : i32, i32
  }
  func.func @transform_2(%arg0: i32) -> (i32, i32) {
    %c0_i32 = arith.constant 0 : i32
    %c0_i32_0 = arith.constant 0 : i32
    %c0_i32_1 = arith.constant 0 : i32
    return %c0_i32, %c0_i32_0 : i32, i32
  }
  func.func @transform_3(%arg0: i32) -> (i32, i32) {
    %c0_i32 = arith.constant 0 : i32
    %c0_i32_0 = arith.constant 0 : i32
    %c0_i32_1 = arith.constant 0 : i32
    return %c0_i32, %c0_i32_0 : i32, i32
  }
  func.func @transform_4(%arg0: i32) -> (i32, i32) {
    %c0_i32 = arith.constant 0 : i32
    %c0_i32_0 = arith.constant 0 : i32
    %c0_i32_1 = arith.constant 0 : i32
    return %c0_i32, %c0_i32_0 : i32, i32
  }
  func.func @transform_5(%arg0: i32) -> (i32, i32) {
    %c0_i32 = arith.constant 0 : i32
    %c0_i32_0 = arith.constant 0 : i32
    %c0_i32_1 = arith.constant 0 : i32
    return %c0_i32, %c0_i32_0 : i32, i32
  }
  func.func @transform_6(%arg0: i32) -> (i32, i32) {
    %c0_i32 = arith.constant 0 : i32
    %c0_i32_0 = arith.constant 0 : i32
    %c0_i32_1 = arith.constant 0 : i32
    return %c0_i32, %c0_i32_0 : i32, i32
  }
  func.func @transform_7(%arg0: i32) -> (i32, i32) {
    %c0_i32 = arith.constant 0 : i32
    %c0_i32_0 = arith.constant 0 : i32
    %c0_i32_1 = arith.constant 0 : i32
    return %c0_i32, %c0_i32_0 : i32, i32
  }
  func.func @transform_8(%arg0: i32) -> (i32, i32) {
    %c0_i32 = arith.constant 0 : i32
    %c0_i32_0 = arith.constant 0 : i32
    %c0_i32_1 = arith.constant 0 : i32
    return %c0_i32, %c0_i32_0 : i32, i32
  }
  func.func @transform_9(%arg0: i32) -> (i32, i32) {
    %c0_i32 = arith.constant 0 : i32
    %c0_i32_0 = arith.constant 0 : i32
    %c0_i32_1 = arith.constant 0 : i32
    return %c0_i32, %c0_i32_0 : i32, i32
  }
  func.func @transform_10(%arg0: i32) -> (i32, i32) {
    %c0_i32 = arith.constant 0 : i32
    %c0_i32_0 = arith.constant 0 : i32
    %c0_i32_1 = arith.constant 0 : i32
    return %c0_i32, %c0_i32_0 : i32, i32
  }
  func.func @transform_11(%arg0: i32) -> (i32, i32) {
    %c0_i32 = arith.constant 0 : i32
    %c0_i32_0 = arith.constant 0 : i32
    %c0_i32_1 = arith.constant 0 : i32
    return %c0_i32, %c0_i32_0 : i32, i32
  }
  func.func @transform_12(%arg0: i32) -> (i32, i32, i32) {
    %c0_i32 = arith.constant 0 : i32
    %c0_i32_0 = arith.constant 0 : i32
    %c0_i32_1 = arith.constant 0 : i32
    return %arg0, %c0_i32, %c0_i32_0 : i32, i32, i32
  }
}

</mosaic_0001>

<llo_original>
// kernel: tpu_custom_call.1
$region0: #{tpu_custom_call.1}
  #allocation0 [shape = 'u32[]', space=smem, size = 0x4, offset = 0x4, fixed_abs, tag = 'smem constant byte address 0x4 - core index']
  #allocation1 [shape = 'u32[144,128]{1,0:T(1,128)}', space=vmem, size = 0x12000, scoped, tag = 'internal scratch']
  #allocation2 [shape = 'f32[2,70,128]{2,1,0:T(8,128)}', space=vmem, size = 0x12000, scoped, tag = 'scratch operand']
  %s0 = inlined_call_operand.hbm [shape: f32[4,64,512], index: 0, kind: input, shape index: {}]
  %s1 = inlined_call_operand.hbm [shape: bf16[512,128], index: 1, kind: input, shape index: {}]
  %s2 = inlined_call_operand.vmem [shape: f32[1,128], index: 2, kind: input, shape index: {}]
  %s3 = inlined_call_operand.hbm [shape: f32[1,128], index: 3, kind: input, shape index: {}]
  %s4 = inlined_call_operand.hbm [shape: bf16[896,128], index: 4, kind: input, shape index: {}]
  %s5 = inlined_call_operand.hbm [shape: f32[1,128], index: 5, kind: input, shape index: {}]
  %s6 = inlined_call_operand.vmem [shape: f32[1,128], index: 6, kind: input, shape index: {}]
  %s7 = inlined_call_operand.hbm [shape: bf16[128,512], index: 7, kind: input, shape index: {}]
  %s8 = inlined_call_operand.vmem [shape: f32[1,512], index: 8, kind: input, shape index: {}]
  %s9 = inlined_call_operand.vmem [shape: f32[1,512], index: 9, kind: input, shape index: {}]
  %s10 = inlined_call_operand.hbm [shape: f32[32,512], index: 10, kind: input, shape index: {}]
  %s11 = inlined_call_operand.hbm [shape: f32[32,512], index: 11, kind: input, shape index: {}]
  %s12 = inlined_call_operand.hbm [shape: f32[4,64,512], index: 12, kind: output, shape index: {}]
  %s13 = sld [smem:[#allocation0]]
  $region113: #{tpu_custom_call.1} parent=0
    _
  %s15 = ssub.s32 1, %s13
  %s16 = scalar_select 0, %s15, %s13
  $region1: #{tpu_custom_call.1} parent=0
    #allocation3 [shape = 'u8[524288]{0}', space=vmem, size = 0x80000, scoped, tag = 'input window, operand 0']
    #allocation4 [shape = 's32[2]{0}', space=sflag, size = 0x8, scoped, tag = 'scoped memory for tpu_custom_call.1']
    #allocation5 [shape = 's32[2]{0}', space=sflag, size = 0x8, scoped, tag = 'scoped memory for tpu_custom_call.1']
    #allocation6 [shape = 'u8[131072]{0}', space=vmem, size = 0x20000, scoped, tag = 'input window, operand 1, single buffered']
    #allocation7 [shape = 's32[1]{0}', space=sflag, size = 0x4, scoped, tag = 'scoped memory for tpu_custom_call.1']
    #allocation8 [shape = 'u8[512]{0}', space=vmem, size = 0x400, scoped, tag = 'input window, operand 3, single buffered']
    #allocation9 [shape = 'u8[229376]{0}', space=vmem, size = 0x38000, scoped, tag = 'input window, operand 4, single buffered']
    #allocation10 [shape = 's32[1]{0}', space=sflag, size = 0x4, scoped, tag = 'scoped memory for tpu_custom_call.1']
    #allocation11 [shape = 'u8[512]{0}', space=vmem, size = 0x400, scoped, tag = 'input window, operand 5, single buffered']
    #allocation12 [shape = 'u8[131072]{0}', space=vmem, size = 0x20000, scoped, tag = 'input window, operand 7, single buffered']
    #allocation13 [shape = 's32[1]{0}', space=sflag, size = 0x4, scoped, tag = 'scoped memory for tpu_custom_call.1']
    #allocation14 [shape = 'u8[65536]{0}', space=vmem, size = 0x10000, scoped, tag = 'input window, operand 10, single buffered']
    #allocation15 [shape = 'u8[65536]{0}', space=vmem, size = 0x10000, scoped, tag = 'input window, operand 11, single buffered']
    #allocation16 [shape = 's32[1]{0}', space=sflag, size = 0x4, scoped, tag = 'scoped memory for tpu_custom_call.1']
    #allocation17 [shape = 'u8[524288]{0}', space=vmem, size = 0x80000, scoped, tag = 'output window, operand 0']
    %17 = vsyncpa [#allocation4], 0
    %s18 = scalar_lea.sflag [#allocation4], 1
    %19 = vsyncpa %s18, 0
    %20 = vsyncpa [#allocation7], 0
    %21 = vsyncpa [#allocation10], 0
    %22 = vsyncpa [#allocation13], 0
    %23 = vsyncpa [#allocation16], 0
    %24 = vsyncpa [#allocation5], 0
    %s25 = scalar_lea.sflag [#allocation5], 1
    %26 = vsyncpa %s25, 0
    loop: start=0, step=1, limit=4
    $region2: #{tpu_custom_call.1} parent=1 // loop_pre_header
      _
    $region3: #{tpu_custom_call.1} parent=1 // loop_header
      %s28 = sphi 0, %s32
      %p29 = scmp.ge.s32.totalorder %s28, 4
      %s38 = sphi 0, %s40
      %s41 = sphi 0, %s38
      %s42 = sphi 0, %s41
      %s58 = sphi 0, %s42
      %s62 = sphi 0, %s62
      %s64 = sphi 0, %s62
      %s65 = sphi 0, %s64
      %s79 = sphi 0, %s65
      %s83 = sphi 0, %s83
      %s85 = sphi 0, %s83
      %s86 = sphi 0, %s85
      %s100 = sphi 0, %s86
      %s104 = sphi 0, %s104
      %s106 = sphi 0, %s104
      %s107 = sphi 0, %s106
      %s121 = sphi 0, %s107
      %s125 = sphi 0, %s125
      %s127 = sphi 0, %s125
      %s128 = sphi 0, %s127
      %s142 = sphi 0, %s128
      %s146 = sphi 0, %s146
      %s148 = sphi 0, %s146
      %s149 = sphi 0, %s148
      %s163 = sphi 0, %s149
      %s167 = sphi 0, %s167
      %s169 = sphi 0, %s167
      %s170 = sphi 0, %s169
      %s184 = sphi 0, %s170
      %s188 = sphi 0, %s188
      %s190 = sphi 0, %s188
      %s191 = sphi 0, %s190
      %s205 = sphi 0, %s191
      %s209 = sphi 0, %s209
      %s211 = sphi 0, %s209
      %s212 = sphi 0, %s211
      %s226 = sphi 0, %s212
      %s230 = sphi 0, %s230
      %s232 = sphi 0, %s230
      %s233 = sphi 0, %s232
      %s247 = sphi 0, %s233
      %s251 = sphi 0, %s251
      %s253 = sphi 0, %s251
      %s254 = sphi 0, %s253
      %s268 = sphi 0, %s254
      %s272 = sphi 0, %s272
      %s274 = sphi 0, %s272
      %s275 = sphi 0, %s274
      %s289 = sphi 0, %s275
      %s295 = sphi 0, %s297
      %s298 = sphi 0, %s295
      %s299 = sphi 0, %s298
      %s315 = sphi 0, %s299
    $region4: #{tpu_custom_call.1} parent=1 // loop_header_branch
      %31 = sbr.rel (%p29) target = $region8
    $region5: #{tpu_custom_call.1} parent=1 // loop_body
      %s33 = ssub.s32 %s28, 1
      %s34 = ssub.s32 %s28, 2
      %s35 = sadd.s32 %s28, 1
      %s36 = ssub.s32 %s28, %s35
      %p37 = scmp.eq.s32.totalorder %s36, 0
      %s39 = sadd.s32 %s38, 1
      %s40 = scalar_select %p37, %s38, %s39
      %p43 = pneg %p37
      %p44 = scmp.eq.s32.totalorder %s28, 1
      %p45 = por %p43, %p44
      %p46 = scmp.ne.s32.totalorder %s38, %s41
      %p47 = scmp.eq.s32.totalorder %s28, 0
      %p48 = por %p46, %p47
      %p49 = scmp.ne.s32.totalorder %s38, %s41
      %p50 = scmp.eq.s32.totalorder %s33, 1
      %p51 = por %p49, %p50
      %p52 = scmp.ne.s32.totalorder %s41, %s42
      %p53 = scmp.eq.s32.totalorder %s33, 0
      %p54 = por %p52, %p53
      %p55 = scmp.ne.s32.totalorder %s41, %s42
      %p56 = scmp.eq.s32.totalorder %s34, 1
      %p57 = por %p55, %p56
      %p59 = scmp.ne.s32.totalorder %s42, %s58
      %p60 = scmp.eq.s32.totalorder %s34, 0
      %p61 = por %p59, %p60
      %s63 = sadd.s32 %s62, 1
      %p66 = scmp.eq.s32.totalorder %s28, 1
      %p67 = scmp.ne.s32.totalorder %s62, %s64
      %p68 = scmp.eq.s32.totalorder %s28, 0
      %p69 = por %p67, %p68
      %p70 = scmp.ne.s32.totalorder %s62, %s64
      %p71 = scmp.eq.s32.totalorder %s33, 1
      %p72 = por %p70, %p71
      %p73 = scmp.ne.s32.totalorder %s64, %s65
      %p74 = scmp.eq.s32.totalorder %s33, 0
      %p75 = por %p73, %p74
      %p76 = scmp.ne.s32.totalorder %s64, %s65
      %p77 = scmp.eq.s32.totalorder %s34, 1
      %p78 = por %p76, %p77
      %p80 = scmp.ne.s32.totalorder %s65, %s79
      %p81 = scmp.eq.s32.totalorder %s34, 0
      %p82 = por %p80, %p81
      %s84 = sadd.s32 %s83, 1
      %p87 = scmp.eq.s32.totalorder %s28, 1
      %p88 = scmp.ne.s32.totalorder %s83, %s85
      %p89 = scmp.eq.s32.totalorder %s28, 0
      %p90 = por %p88, %p89
      %p91 = scmp.ne.s32.totalorder %s83, %s85
      %p92 = scmp.eq.s32.totalorder %s33, 1
      %p93 = por %p91, %p92
      %p94 = scmp.ne.s32.totalorder %s85, %s86
      %p95 = scmp.eq.s32.totalorder %s33, 0
      %p96 = por %p94, %p95
      %p97 = scmp.ne.s32.totalorder %s85, %s86
      %p98 = scmp.eq.s32.totalorder %s34, 1
      %p99 = por %p97, %p98
      %p101 = scmp.ne.s32.totalorder %s86, %s100
      %p102 = scmp.eq.s32.totalorder %s34, 0
      %p103 = por %p101, %p102
      %s105 = sadd.s32 %s104, 1
      %p108 = scmp.eq.s32.totalorder %s28, 1
      %p109 = scmp.ne.s32.totalorder %s104, %s106
      %p110 = scmp.eq.s32.totalorder %s28, 0
      %p111 = por %p109, %p110
      %p112 = scmp.ne.s32.totalorder %s104, %s106
      %p113 = scmp.eq.s32.totalorder %s33, 1
      %p114 = por %p112, %p113
      %p115 = scmp.ne.s32.totalorder %s106, %s107
      %p116 = scmp.eq.s32.totalorder %s33, 0
      %p117 = por %p115, %p116
      %p118 = scmp.ne.s32.totalorder %s106, %s107
      %p119 = scmp.eq.s32.totalorder %s34, 1
      %p120 = por %p118, %p119
      %p122 = scmp.ne.s32.totalorder %s107, %s121
      %p123 = scmp.eq.s32.totalorder %s34, 0
      %p124 = por %p122, %p123
      %s126 = sadd.s32 %s125, 1
      %p129 = scmp.eq.s32.totalorder %s28, 1
      %p130 = scmp.ne.s32.totalorder %s125, %s127
      %p131 = scmp.eq.s32.totalorder %s28, 0
      %p132 = por %p130, %p131
      %p133 = scmp.ne.s32.totalorder %s125, %s127
      %p134 = scmp.eq.s32.totalorder %s33, 1
      %p135 = por %p133, %p134
      %p136 = scmp.ne.s32.totalorder %s127, %s128
      %p137 = scmp.eq.s32.totalorder %s33, 0
      %p138 = por %p136, %p137
      %p139 = scmp.ne.s32.totalorder %s127, %s128
      %p140 = scmp.eq.s32.totalorder %s34, 1
      %p141 = por %p139, %p140
      %p143 = scmp.ne.s32.totalorder %s128, %s142
      %p144 = scmp.eq.s32.totalorder %s34, 0
      %p145 = por %p143, %p144
      %s147 = sadd.s32 %s146, 1
      %p150 = scmp.eq.s32.totalorder %s28, 1
      %p151 = scmp.ne.s32.totalorder %s146, %s148
      %p152 = scmp.eq.s32.totalorder %s28, 0
      %p153 = por %p151, %p152
      %p154 = scmp.ne.s32.totalorder %s146, %s148
      %p155 = scmp.eq.s32.totalorder %s33, 1
      %p156 = por %p154, %p155
      %p157 = scmp.ne.s32.totalorder %s148, %s149
      %p158 = scmp.eq.s32.totalorder %s33, 0
      %p159 = por %p157, %p158
      %p160 = scmp.ne.s32.totalorder %s148, %s149
      %p161 = scmp.eq.s32.totalorder %s34, 1
      %p162 = por %p160, %p161
      %p164 = scmp.ne.s32.totalorder %s149, %s163
      %p165 = scmp.eq.s32.totalorder %s34, 0
      %p166 = por %p164, %p165
      %s168 = sadd.s32 %s167, 1
      %p171 = scmp.eq.s32.totalorder %s28, 1
      %p172 = scmp.ne.s32.totalorder %s167, %s169
      %p173 = scmp.eq.s32.totalorder %s28, 0
      %p174 = por %p172, %p173
      %p175 = scmp.ne.s32.totalorder %s167, %s169
      %p176 = scmp.eq.s32.totalorder %s33, 1
      %p177 = por %p175, %p176
      %p178 = scmp.ne.s32.totalorder %s169, %s170
      %p179 = scmp.eq.s32.totalorder %s33, 0
      %p180 = por %p178, %p179
      %p181 = scmp.ne.s32.totalorder %s169, %s170
      %p182 = scmp.eq.s32.totalorder %s34, 1
      %p183 = por %p181, %p182
      %p185 = scmp.ne.s32.totalorder %s170, %s184
      %p186 = scmp.eq.s32.totalorder %s34, 0
      %p187 = por %p185, %p186
      %s189 = sadd.s32 %s188, 1
      %p192 = scmp.eq.s32.totalorder %s28, 1
      %p193 = scmp.ne.s32.totalorder %s188, %s190
      %p194 = scmp.eq.s32.totalorder %s28, 0
      %p195 = por %p193, %p194
      %p196 = scmp.ne.s32.totalorder %s188, %s190
      %p197 = scmp.eq.s32.totalorder %s33, 1
      %p198 = por %p196, %p197
      %p199 = scmp.ne.s32.totalorder %s190, %s191
      %p200 = scmp.eq.s32.totalorder %s33, 0
      %p201 = por %p199, %p200
      %p202 = scmp.ne.s32.totalorder %s190, %s191
      %p203 = scmp.eq.s32.totalorder %s34, 1
      %p204 = por %p202, %p203
      %p206 = scmp.ne.s32.totalorder %s191, %s205
      %p207 = scmp.eq.s32.totalorder %s34, 0
      %p208 = por %p206, %p207
      %s210 = sadd.s32 %s209, 1
      %p213 = scmp.eq.s32.totalorder %s28, 1
      %p214 = scmp.ne.s32.totalorder %s209, %s211
      %p215 = scmp.eq.s32.totalorder %s28, 0
      %p216 = por %p214, %p215
      %p217 = scmp.ne.s32.totalorder %s209, %s211
      %p218 = scmp.eq.s32.totalorder %s33, 1
      %p219 = por %p217, %p218
      %p220 = scmp.ne.s32.totalorder %s211, %s212
      %p221 = scmp.eq.s32.totalorder %s33, 0
      %p222 = por %p220, %p221
      %p223 = scmp.ne.s32.totalorder %s211, %s212
      %p224 = scmp.eq.s32.totalorder %s34, 1
      %p225 = por %p223, %p224
      %p227 = scmp.ne.s32.totalorder %s212, %s226
      %p228 = scmp.eq.s32.totalorder %s34, 0
      %p229 = por %p227, %p228
      %s231 = sadd.s32 %s230, 1
      %p234 = scmp.eq.s32.totalorder %s28, 1
      %p235 = scmp.ne.s32.totalorder %s230, %s232
      %p236 = scmp.eq.s32.totalorder %s28, 0
      %p237 = por %p235, %p236
      %p238 = scmp.ne.s32.totalorder %s230, %s232
      %p239 = scmp.eq.s32.totalorder %s33, 1
      %p240 = por %p238, %p239
      %p241 = scmp.ne.s32.totalorder %s232, %s233
      %p242 = scmp.eq.s32.totalorder %s33, 0
      %p243 = por %p241, %p242
      %p244 = scmp.ne.s32.totalorder %s232, %s233
      %p245 = scmp.eq.s32.totalorder %s34, 1
      %p246 = por %p244, %p245
      %p248 = scmp.ne.s32.totalorder %s233, %s247
      %p249 = scmp.eq.s32.totalorder %s34, 0
      %p250 = por %p248, %p249
      %s252 = sadd.s32 %s251, 1
      %p255 = scmp.eq.s32.totalorder %s28, 1
      %p256 = scmp.ne.s32.totalorder %s251, %s253
      %p257 = scmp.eq.s32.totalorder %s28, 0
      %p258 = por %p256, %p257
      %p259 = scmp.ne.s32.totalorder %s251, %s253
      %p260 = scmp.eq.s32.totalorder %s33, 1
      %p261 = por %p259, %p260
      %p262 = scmp.ne.s32.totalorder %s253, %s254
      %p263 = scmp.eq.s32.totalorder %s33, 0
      %p264 = por %p262, %p263
      %p265 = scmp.ne.s32.totalorder %s253, %s254
      %p266 = scmp.eq.s32.totalorder %s34, 1
      %p267 = por %p265, %p266
      %p269 = scmp.ne.s32.totalorder %s254, %s268
      %p270 = scmp.eq.s32.totalorder %s34, 0
      %p271 = por %p269, %p270
      %s273 = sadd.s32 %s272, 1
      %p276 = scmp.eq.s32.totalorder %s28, 1
      %p277 = scmp.ne.s32.totalorder %s272, %s274
      %p278 = scmp.eq.s32.totalorder %s28, 0
      %p279 = por %p277, %p278
      %p280 = scmp.ne.s32.totalorder %s272, %s274
      %p281 = scmp.eq.s32.totalorder %s33, 1
      %p282 = por %p280, %p281
      %p283 = scmp.ne.s32.totalorder %s274, %s275
      %p284 = scmp.eq.s32.totalorder %s33, 0
      %p285 = por %p283, %p284
      %p286 = scmp.ne.s32.totalorder %s274, %s275
      %p287 = scmp.eq.s32.totalorder %s34, 1
      %p288 = por %p286, %p287
      %p290 = scmp.ne.s32.totalorder %s275, %s289
      %p291 = scmp.eq.s32.totalorder %s34, 0
      %p292 = por %p290, %p291
      %s293 = ssub.s32 %s28, %s35
      %p294 = scmp.eq.s32.totalorder %s293, 0
      %s296 = sadd.s32 %s295, 1
      %s297 = scalar_select %p294, %s295, %s296
      %p300 = pneg %p294
      %p301 = scmp.eq.s32.totalorder %s28, 1
      %p302 = por %p300, %p301
      %p303 = scmp.ne.s32.totalorder %s295, %s298
      %p304 = scmp.eq.s32.totalorder %s28, 0
      %p305 = por %p303, %p304
      %p306 = scmp.ne.s32.totalorder %s295, %s298
      %p307 = scmp.eq.s32.totalorder %s33, 1
      %p308 = por %p306, %p307
      %p309 = scmp.ne.s32.totalorder %s298, %s299
      %p310 = scmp.eq.s32.totalorder %s33, 0
      %p311 = por %p309, %p310
      %p312 = scmp.ne.s32.totalorder %s298, %s299
      %p313 = scmp.eq.s32.totalorder %s34, 1
      %p314 = por %p312, %p313
      %p316 = scmp.ne.s32.totalorder %s299, %s315
      %p317 = scmp.eq.s32.totalorder %s34, 0
      %p318 = por %p316, %p317
      %p319 = scmp.le.s32.totalorder 1, %s28
      %p320 = scmp.lt.s32.totalorder %s28, 3
      %p321 = pnand %p319, %p320
      %p322 = pneg %p321
      // Predicated region
      $region9: #{tpu_custom_call.1} parent=5 // pred_check
        _
      $region10: #{tpu_custom_call.1} parent=5 // pred_check_branch
        %324 = sbr.rel (%p321) target = $region12
      $region11: #{tpu_custom_call.1} parent=5 // pred_region
        %s325 = ssub.s32 %s28, 1
        // Predicated region
        $region13: #{tpu_custom_call.1} parent=11 // pred_check
          %p326 = pneg %p75
        $region14: #{tpu_custom_call.1} parent=11 // pred_check_branch
          %328 = sbr.rel (%p326) target = $region16
        $region15: #{tpu_custom_call.1} parent=11 // pred_region
          %s330 = ssub.s32 4096, 4096
          %331 = vsyncadd [#allocation7], %s330
          %s332 = sshll.u32 [#allocation6], 4
          %s333 = int_to_ptr.vmem [resolvable:$true] %s332
          %338 = dma.hbm_to_vmem [thread:$0]  %s1, 4096, %s333, [#allocation7], 64, 64, 4
        $region16: #{tpu_custom_call.1} parent=11 // pred_fallthru
          _
        // Predicated region
        $region17: #{tpu_custom_call.1} parent=11 // pred_check
          %p339 = pneg %p96
        $region18: #{tpu_custom_call.1} parent=11 // pred_check_branch
          %341 = sbr.rel (%p339) target = $region20
        $region19: #{tpu_custom_call.1} parent=11 // pred_region
          _
        $region20: #{tpu_custom_call.1} parent=11 // pred_fallthru
          _
        // Predicated region
        $region21: #{tpu_custom_call.1} parent=11 // pred_check
          %p342 = pneg %p117
        $region22: #{tpu_custom_call.1} parent=11 // pred_check_branch
          %344 = sbr.rel (%p342) target = $region24
        $region23: #{tpu_custom_call.1} parent=11 // pred_region
          %s346 = ssub.s32 16, 16
          %347 = vsyncadd [#allocation7], %s346
          %s349 = sshll.u32 [#allocation8], 4
          %s350 = int_to_ptr.vmem [resolvable:$true] %s349
          %352 = dma.hbm_to_vmem [thread:$0]  %s3, 16, %s350, [#allocation7]
        $region24: #{tpu_custom_call.1} parent=11 // pred_fallthru
          _
        // Predicated region
        $region25: #{tpu_custom_call.1} parent=11 // pred_check
          %p353 = pneg %p138
        $region26: #{tpu_custom_call.1} parent=11 // pred_check_branch
          %355 = sbr.rel (%p353) target = $region28
        $region27: #{tpu_custom_call.1} parent=11 // pred_region
          %s357 = ssub.s32 7168, 7168
          %358 = vsyncadd [#allocation10], %s357
          %s359 = sshll.u32 [#allocation9], 4
          %s360 = int_to_ptr.vmem [resolvable:$true] %s359
          %365 = dma.hbm_to_vmem [thread:$0]  %s4, 7168, %s360, [#allocation10], 64, 64, 4
        $region28: #{tpu_custom_call.1} parent=11 // pred_fallthru
          _
        // Predicated region
        $region29: #{tpu_custom_call.1} parent=11 // pred_check
          %p366 = pneg %p159
        $region30: #{tpu_custom_call.1} parent=11 // pred_check_branch
          %368 = sbr.rel (%p366) target = $region32
        $region31: #{tpu_custom_call.1} parent=11 // pred_region
          %s370 = ssub.s32 16, 16
          %371 = vsyncadd [#allocation10], %s370
          %s373 = sshll.u32 [#allocation11], 4
          %s374 = int_to_ptr.vmem [resolvable:$true] %s373
          %376 = dma.hbm_to_vmem [thread:$0]  %s5, 16, %s374, [#allocation10]
        $region32: #{tpu_custom_call.1} parent=11 // pred_fallthru
          _
        // Predicated region
        $region33: #{tpu_custom_call.1} parent=11 // pred_check
          %p377 = pneg %p180
        $region34: #{tpu_custom_call.1} parent=11 // pred_check_branch
          %379 = sbr.rel (%p377) target = $region36
        $region35: #{tpu_custom_call.1} parent=11 // pred_region
          _
        $region36: #{tpu_custom_call.1} parent=11 // pred_fallthru
          _
        // Predicated region
        $region37: #{tpu_custom_call.1} parent=11 // pred_check
          %p380 = pneg %p201
        $region38: #{tpu_custom_call.1} parent=11 // pred_check_branch
          %382 = sbr.rel (%p380) target = $region40
        $region39: #{tpu_custom_call.1} parent=11 // pred_region
          %s384 = ssub.s32 4096, 4096
          %385 = vsyncadd [#allocation13], %s384
          %s386 = sshll.u32 [#allocation12], 4
          %s387 = int_to_ptr.vmem [resolvable:$true] %s386
          %392 = dma.hbm_to_vmem [thread:$0]  %s7, 4096, %s387, [#allocation13], 256, 256, 16
        $region40: #{tpu_custom_call.1} parent=11 // pred_fallthru
          _
        // Predicated region
        $region41: #{tpu_custom_call.1} parent=11 // pred_check
          %p393 = pneg %p222
        $region42: #{tpu_custom_call.1} parent=11 // pred_check_branch
          %395 = sbr.rel (%p393) target = $region44
        $region43: #{tpu_custom_call.1} parent=11 // pred_region
          _
        $region44: #{tpu_custom_call.1} parent=11 // pred_fallthru
          _
        // Predicated region
        $region45: #{tpu_custom_call.1} parent=11 // pred_check
          %p396 = pneg %p243
        $region46: #{tpu_custom_call.1} parent=11 // pred_check_branch
          %398 = sbr.rel (%p396) target = $region48
        $region47: #{tpu_custom_call.1} parent=11 // pred_region
          _
        $region48: #{tpu_custom_call.1} parent=11 // pred_fallthru
          _
        // Predicated region
        $region49: #{tpu_custom_call.1} parent=11 // pred_check
          %p399 = pneg %p264
        $region50: #{tpu_custom_call.1} parent=11 // pred_check_branch
          %401 = sbr.rel (%p399) target = $region52
        $region51: #{tpu_custom_call.1} parent=11 // pred_region
          %s403 = ssub.s32 2048, 2048
          %404 = vsyncadd [#allocation13], %s403
          %s405 = sshll.u32 [#allocation14], 4
          %s406 = int_to_ptr.vmem [resolvable:$true] %s405
          %411 = dma.hbm_to_vmem [thread:$0]  %s10, 2048, %s406, [#allocation13], 512, 512, 32
        $region52: #{tpu_custom_call.1} parent=11 // pred_fallthru
          _
        // Predicated region
        $region53: #{tpu_custom_call.1} parent=11 // pred_check
          %p412 = pneg %p285
        $region54: #{tpu_custom_call.1} parent=11 // pred_check_branch
          %414 = sbr.rel (%p412) target = $region56
        $region55: #{tpu_custom_call.1} parent=11 // pred_region
          %s416 = ssub.s32 2048, 2048
          %417 = vsyncadd [#allocation16], %s416
          %s418 = sshll.u32 [#allocation15], 4
          %s419 = int_to_ptr.vmem [resolvable:$true] %s418
          %424 = dma.hbm_to_vmem [thread:$0]  %s11, 2048, %s419, [#allocation16], 512, 512, 32
        $region56: #{tpu_custom_call.1} parent=11 // pred_fallthru
          _
      $region12: #{tpu_custom_call.1} parent=5 // pred_fallthru
        _
      %p425 = scmp.lt.s32.totalorder %s28, 2
      // Predicated region
      $region57: #{tpu_custom_call.1} parent=5 // pred_check
        %p426 = pneg %p425
      $region58: #{tpu_custom_call.1} parent=5 // pred_check_branch
        %428 = sbr.rel (%p426) target = $region60
      $region59: #{tpu_custom_call.1} parent=5 // pred_region
        // Predicated region
        $region61: #{tpu_custom_call.1} parent=59 // pred_check
          %p429 = pneg %p48
        $region62: #{tpu_custom_call.1} parent=59 // pred_check_branch
          %431 = sbr.rel (%p429) target = $region64
        $region63: #{tpu_custom_call.1} parent=59 // pred_region
          %s432 = sand.u32 %s38, 1
          %s433 = scalar_lea.sflag [#allocation4], %s432
          %s434 = sand.u32 %s38, 1
          %s435 = smul.addr %s434, 512
          %s436 = scalar_lea.vmem [#allocation3], %s435
          %s437 = smul.u32 2, %s28
          %s439 = ssub.s32 8192, 8192
          %440 = vsyncadd %s433, %s439
          %s441 = smul.addr %s437, 32
          %s442 = smul.addr %s441, 128
          %s443 = scalar_lea.hbm %s0, %s442
          %s444 = sshll.u32 %s436, 4
          %s445 = int_to_ptr.vmem [resolvable:$true] %s444
          %450 = dma.hbm_to_vmem [thread:$0]  %s443, 8192, %s445, %s433, 512, 512, 32
        $region64: #{tpu_custom_call.1} parent=59 // pred_fallthru
          _
      $region60: #{tpu_custom_call.1} parent=5 // pred_fallthru
        _
      %p451 = scmp.le.s32.totalorder 1, %s28
      %p452 = scmp.lt.s32.totalorder %s28, 3
      %p453 = pnand %p451, %p452
      %p454 = pneg %p453
      // Predicated region
      $region65: #{tpu_custom_call.1} parent=5 // pred_check
        _
      $region66: #{tpu_custom_call.1} parent=5 // pred_check_branch
        %456 = sbr.rel (%p453) target = $region68
      $region67: #{tpu_custom_call.1} parent=5 // pred_region
        %s457 = ssub.s32 %s28, 1
        %s458 = sand.u32 %s41, 1
        %s459 = scalar_lea.sflag [#allocation4], %s458
        %s460 = sand.u32 %s41, 1
        %s461 = smul.addr %s460, 512
        %s462 = scalar_lea.vmem [#allocation3], %s461
        // Predicated region
        $region69: #{tpu_custom_call.1} parent=67 // pred_check
          %p463 = pneg %p54
        $region70: #{tpu_custom_call.1} parent=67 // pred_check_branch
          %465 = sbr.rel (%p463) target = $region72
        $region71: #{tpu_custom_call.1} parent=67 // pred_region
          %466 = dma.done %s459, 8192
        $region72: #{tpu_custom_call.1} parent=67 // pred_fallthru
          _
        // Predicated region
        $region73: #{tpu_custom_call.1} parent=67 // pred_check
          %p467 = pneg %p75
        $region74: #{tpu_custom_call.1} parent=67 // pred_check_branch
          %469 = sbr.rel (%p467) target = $region76
        $region75: #{tpu_custom_call.1} parent=67 // pred_region
          %470 = dma.done [#allocation7], 4096
        $region76: #{tpu_custom_call.1} parent=67 // pred_fallthru
          _
        // Predicated region
        $region77: #{tpu_custom_call.1} parent=67 // pred_check
          %p471 = pneg %p117
        $region78: #{tpu_custom_call.1} parent=67 // pred_check_branch
          %473 = sbr.rel (%p471) target = $region80
        $region79: #{tpu_custom_call.1} parent=67 // pred_region
          %474 = dma.done [#allocation7], 16
        $region80: #{tpu_custom_call.1} parent=67 // pred_fallthru
          _
        // Predicated region
        $region81: #{tpu_custom_call.1} parent=67 // pred_check
          %p475 = pneg %p138
        $region82: #{tpu_custom_call.1} parent=67 // pred_check_branch
          %477 = sbr.rel (%p475) target = $region84
        $region83: #{tpu_custom_call.1} parent=67 // pred_region
          %478 = dma.done [#allocation10], 7168
        $region84: #{tpu_custom_call.1} parent=67 // pred_fallthru
          _
        // Predicated region
        $region85: #{tpu_custom_call.1} parent=67 // pred_check
          %p479 = pneg %p159
        $region86: #{tpu_custom_call.1} parent=67 // pred_check_branch
          %481 = sbr.rel (%p479) target = $region88
        $region87: #{tpu_custom_call.1} parent=67 // pred_region
          %482 = dma.done [#allocation10], 16
        $region88: #{tpu_custom_call.1} parent=67 // pred_fallthru
          _
        // Predicated region
        $region89: #{tpu_custom_call.1} parent=67 // pred_check
          %p483 = pneg %p201
        $region90: #{tpu_custom_call.1} parent=67 // pred_check_branch
          %485 = sbr.rel (%p483) target = $region92
        $region91: #{tpu_custom_call.1} parent=67 // pred_region
          %486 = dma.done [#allocation13], 4096
        $region92: #{tpu_custom_call.1} parent=67 // pred_fallthru
          _
        // Predicated region
        $region93: #{tpu_custom_call.1} parent=67 // pred_check
          %p487 = pneg %p264
        $region94: #{tpu_custom_call.1} parent=67 // pred_check_branch
          %489 = sbr.rel (%p487) target = $region96
        $region95: #{tpu_custom_call.1} parent=67 // pred_region
          %490 = dma.done [#allocation13], 2048
        $region96: #{tpu_custom_call.1} parent=67 // pred_fallthru
          _
        // Predicated region
        $region97: #{tpu_custom_call.1} parent=67 // pred_check
          %p491 = pneg %p285
        $region98: #{tpu_custom_call.1} parent=67 // pred_check_branch
          %493 = sbr.rel (%p491) target = $region100
        $region99: #{tpu_custom_call.1} parent=67 // pred_region
          %494 = dma.done [#allocation16], 2048
        $region100: #{tpu_custom_call.1} parent=67 // pred_fallthru
          _
        %s495 = sand.u32 %s41, 1
        %s496 = scalar_lea.sflag [#allocation4], %s495
        %s497 = sand.u32 %s41, 1
        %s498 = smul.addr %s497, 512
        %s499 = scalar_lea.vmem [#allocation3], %s498
        %p500 = pneg %p54
        %p501 = pneg %p51
        %p502 = pneg %p75
        %p503 = pneg %p72
        %p504 = pneg %p96
        %p505 = pneg %p93
        %p506 = pneg %p117
        %p507 = pneg %p114
        %p508 = pneg %p138
        %p509 = pneg %p135
        %p510 = pneg %p159
        %p511 = pneg %p156
        %p512 = pneg %p180
        %p513 = pneg %p177
        %p514 = pneg %p201
        %p515 = pneg %p198
        %p516 = pneg %p222
        %p517 = pneg %p219
        %p518 = pneg %p243
        %p519 = pneg %p240
        %p520 = pneg %p264
        %p521 = pneg %p261
        %p522 = pneg %p285
        %p523 = pneg %p282
        %p524 = pneg %p311
        %p525 = pneg %p308
        %s526 = sand.u32 %s298, 1
        %s527 = scalar_lea.sflag [#allocation5], %s526
        %s528 = sand.u32 %s298, 1
        %s529 = smul.addr %s528, 512
        %s530 = scalar_lea.vmem [#allocation17], %s529
        %s531 = smul.u32 2, %s33
        %s532 = smul.u32 2, %s33
        %v534 = vld [vmem:[%s462] sm:$0xff]
        %v535 = vld [vmem:[%s462 + $0x8] sm:$0xff]
        %v536 = vld [vmem:[%s462 + $0x10] sm:$0xff]
        %v537 = vld [vmem:[%s462 + $0x18] sm:$0xff]
        %v538 = vld [vmem:[%s462 + $0x20] sm:$0xff]
        %v539 = vld [vmem:[%s462 + $0x28] sm:$0xff]
        %v540 = vld [vmem:[%s462 + $0x30] sm:$0xff]
        %v541 = vld [vmem:[%s462 + $0x38] sm:$0xff]
        %v542 = vld [vmem:[%s462 + $0x40] sm:$0xff]
        %v543 = vld [vmem:[%s462 + $0x48] sm:$0xff]
        %v544 = vld [vmem:[%s462 + $0x50] sm:$0xff]
        %v545 = vld [vmem:[%s462 + $0x58] sm:$0xff]
        %v546 = vld [vmem:[%s462 + $0x60] sm:$0xff]
        %v547 = vld [vmem:[%s462 + $0x68] sm:$0xff]
        %v548 = vld [vmem:[%s462 + $0x70] sm:$0xff]
        %v549 = vld [vmem:[%s462 + $0x78] sm:$0xff]
        %v550 = vld [vmem:[%s462 + $0x80] sm:$0xff]
        %v551 = vld [vmem:[%s462 + $0x88] sm:$0xff]
        %v552 = vld [vmem:[%s462 + $0x90] sm:$0xff]
        %v553 = vld [vmem:[%s462 + $0x98] sm:$0xff]
        %v554 = vld [vmem:[%s462 + $0xa0] sm:$0xff]
        %v555 = vld [vmem:[%s462 + $0xa8] sm:$0xff]
        %v556 = vld [vmem:[%s462 + $0xb0] sm:$0xff]
        %v557 = vld [vmem:[%s462 + $0xb8] sm:$0xff]
        %v558 = vld [vmem:[%s462 + $0xc0] sm:$0xff]
        %v559 = vld [vmem:[%s462 + $0xc8] sm:$0xff]
        %v560 = vld [vmem:[%s462 + $0xd0] sm:$0xff]
        %v561 = vld [vmem:[%s462 + $0xd8] sm:$0xff]
        %v562 = vld [vmem:[%s462 + $0xe0] sm:$0xff]
        %v563 = vld [vmem:[%s462 + $0xe8] sm:$0xff]
        %v564 = vld [vmem:[%s462 + $0xf0] sm:$0xff]
        %v565 = vld [vmem:[%s462 + $0xf8] sm:$0xff]
        %v566 = vld [vmem:[%s462 + $0x100] sm:$0xff]
        %v567 = vld [vmem:[%s462 + $0x108] sm:$0xff]
        %v568 = vld [vmem:[%s462 + $0x110] sm:$0xff]
        %v569 = vld [vmem:[%s462 + $0x118] sm:$0xff]
        %v570 = vld [vmem:[%s462 + $0x120] sm:$0xff]
        %v571 = vld [vmem:[%s462 + $0x128] sm:$0xff]
        %v572 = vld [vmem:[%s462 + $0x130] sm:$0xff]
        %v573 = vld [vmem:[%s462 + $0x138] sm:$0xff]
        %v574 = vld [vmem:[%s462 + $0x140] sm:$0xff]
        %v575 = vld [vmem:[%s462 + $0x148] sm:$0xff]
        %v576 = vld [vmem:[%s462 + $0x150] sm:$0xff]
        %v577 = vld [vmem:[%s462 + $0x158] sm:$0xff]
        %v578 = vld [vmem:[%s462 + $0x160] sm:$0xff]
        %v579 = vld [vmem:[%s462 + $0x168] sm:$0xff]
        %v580 = vld [vmem:[%s462 + $0x170] sm:$0xff]
        %v581 = vld [vmem:[%s462 + $0x178] sm:$0xff]
        %v582 = vld [vmem:[%s462 + $0x180] sm:$0xff]
        %v583 = vld [vmem:[%s462 + $0x188] sm:$0xff]
        %v584 = vld [vmem:[%s462 + $0x190] sm:$0xff]
        %v585 = vld [vmem:[%s462 + $0x198] sm:$0xff]
        %v586 = vld [vmem:[%s462 + $0x1a0] sm:$0xff]
        %v587 = vld [vmem:[%s462 + $0x1a8] sm:$0xff]
        %v588 = vld [vmem:[%s462 + $0x1b0] sm:$0xff]
        %v589 = vld [vmem:[%s462 + $0x1b8] sm:$0xff]
        %v590 = vld [vmem:[%s462 + $0x1c0] sm:$0xff]
        %v591 = vld [vmem:[%s462 + $0x1c8] sm:$0xff]
        %v592 = vld [vmem:[%s462 + $0x1d0] sm:$0xff]
        %v593 = vld [vmem:[%s462 + $0x1d8] sm:$0xff]
        %v594 = vld [vmem:[%s462 + $0x1e0] sm:$0xff]
        %v595 = vld [vmem:[%s462 + $0x1e8] sm:$0xff]
        %v596 = vld [vmem:[%s462 + $0x1f0] sm:$0xff]
        %v597 = vld [vmem:[%s462 + $0x1f8] sm:$0xff]
        %v598 = vpack.c.bf16 %v538, %v534
        %v599 = vpack.c.bf16 %v539, %v535
        %v600 = vpack.c.bf16 %v540, %v536
        %v601 = vpack.c.bf16 %v541, %v537
        %v602 = vpack.c.bf16 %v546, %v542
        %v603 = vpack.c.bf16 %v547, %v543
        %v604 = vpack.c.bf16 %v548, %v544
        %v605 = vpack.c.bf16 %v549, %v545
        %v606 = vpack.c.bf16 %v554, %v550
        %v607 = vpack.c.bf16 %v555, %v551
        %v608 = vpack.c.bf16 %v556, %v552
        %v609 = vpack.c.bf16 %v557, %v553
        %v610 = vpack.c.bf16 %v562, %v558
        %v611 = vpack.c.bf16 %v563, %v559
        %v612 = vpack.c.bf16 %v564, %v560
        %v613 = vpack.c.bf16 %v565, %v561
        %v614 = vpack.c.bf16 %v570, %v566
        %v615 = vpack.c.bf16 %v571, %v567
        %v616 = vpack.c.bf16 %v572, %v568
        %v617 = vpack.c.bf16 %v573, %v569
        %v618 = vpack.c.bf16 %v578, %v574
        %v619 = vpack.c.bf16 %v579, %v575
        %v620 = vpack.c.bf16 %v580, %v576
        %v621 = vpack.c.bf16 %v581, %v577
        %v622 = vpack.c.bf16 %v586, %v582
        %v623 = vpack.c.bf16 %v587, %v583
        %v624 = vpack.c.bf16 %v588, %v584
        %v625 = vpack.c.bf16 %v589, %v585
        %v626 = vpack.c.bf16 %v594, %v590
        %v627 = vpack.c.bf16 %v595, %v591
        %v628 = vpack.c.bf16 %v596, %v592
        %v629 = vpack.c.bf16 %v597, %v593
        %v630 = vld [vmem:[#allocation6] sm:$0xf]
        %v631 = vld [vmem:[#allocation6 + $0x4] sm:$0xf]
        %v632 = vld [vmem:[#allocation6 + $0x8] sm:$0xf]
        %v633 = vld [vmem:[#allocation6 + $0xc] sm:$0xf]
        %v634 = vld [vmem:[#allocation6 + $0x10] sm:$0xf]
        %v635 = vld [vmem:[#allocation6 + $0x14] sm:$0xf]
        %v636 = vld [vmem:[#allocation6 + $0x18] sm:$0xf]
        %v637 = vld [vmem:[#allocation6 + $0x1c] sm:$0xf]
        %v638 = vld [vmem:[#allocation6 + $0x20] sm:$0xf]
        %v639 = vld [vmem:[#allocation6 + $0x24] sm:$0xf]
        %v640 = vld [vmem:[#allocation6 + $0x28] sm:$0xf]
        %v641 = vld [vmem:[#allocation6 + $0x2c] sm:$0xf]
        %v642 = vld [vmem:[#allocation6 + $0x30] sm:$0xf]
        %v643 = vld [vmem:[#allocation6 + $0x34] sm:$0xf]
        %v644 = vld [vmem:[#allocation6 + $0x38] sm:$0xf]
        %v645 = vld [vmem:[#allocation6 + $0x3c] sm:$0xf]
        %v646 = vld [vmem:[#allocation6 + $0x40] sm:$0xf]
        %v647 = vld [vmem:[#allocation6 + $0x44] sm:$0xf]
        %v648 = vld [vmem:[#allocation6 + $0x48] sm:$0xf]
        %v649 = vld [vmem:[#allocation6 + $0x4c] sm:$0xf]
        %v650 = vld [vmem:[#allocation6 + $0x50] sm:$0xf]
        %v651 = vld [vmem:[#allocation6 + $0x54] sm:$0xf]
        %v652 = vld [vmem:[#allocation6 + $0x58] sm:$0xf]
        %v653 = vld [vmem:[#allocation6 + $0x5c] sm:$0xf]
        %v654 = vld [vmem:[#allocation6 + $0x60] sm:$0xf]
        %v655 = vld [vmem:[#allocation6 + $0x64] sm:$0xf]
        %v656 = vld [vmem:[#allocation6 + $0x68] sm:$0xf]
        %v657 = vld [vmem:[#allocation6 + $0x6c] sm:$0xf]
        %v658 = vld [vmem:[#allocation6 + $0x70] sm:$0xf]
        %v659 = vld [vmem:[#allocation6 + $0x74] sm:$0xf]
        %v660 = vld [vmem:[#allocation6 + $0x78] sm:$0xf]
        %v661 = vld [vmem:[#allocation6 + $0x7c] sm:$0xf]
        %v662 = vld [vmem:[#allocation6 + $0x80] sm:$0xf]
        %v663 = vld [vmem:[#allocation6 + $0x84] sm:$0xf]
        %v664 = vld [vmem:[#allocation6 + $0x88] sm:$0xf]
        %v665 = vld [vmem:[#allocation6 + $0x8c] sm:$0xf]
        %v666 = vld [vmem:[#allocation6 + $0x90] sm:$0xf]
        %v667 = vld [vmem:[#allocation6 + $0x94] sm:$0xf]
        %v668 = vld [vmem:[#allocation6 + $0x98] sm:$0xf]
        %v669 = vld [vmem:[#allocation6 + $0x9c] sm:$0xf]
        %v670 = vld [vmem:[#allocation6 + $0xa0] sm:$0xf]
        %v671 = vld [vmem:[#allocation6 + $0xa4] sm:$0xf]
        %v672 = vld [vmem:[#allocation6 + $0xa8] sm:$0xf]
        %v673 = vld [vmem:[#allocation6 + $0xac] sm:$0xf]
        %v674 = vld [vmem:[#allocation6 + $0xb0] sm:$0xf]
        %v675 = vld [vmem:[#allocation6 + $0xb4] sm:$0xf]
        %v676 = vld [vmem:[#allocation6 + $0xb8] sm:$0xf]
        %v677 = vld [vmem:[#allocation6 + $0xbc] sm:$0xf]
        %v678 = vld [vmem:[#allocation6 + $0xc0] sm:$0xf]
        %v679 = vld [vmem:[#allocation6 + $0xc4] sm:$0xf]
        %v680 = vld [vmem:[#allocation6 + $0xc8] sm:$0xf]
        %v681 = vld [vmem:[#allocation6 + $0xcc] sm:$0xf]
        %v682 = vld [vmem:[#allocation6 + $0xd0] sm:$0xf]
        %v683 = vld [vmem:[#allocation6 + $0xd4] sm:$0xf]
        %v684 = vld [vmem:[#allocation6 + $0xd8] sm:$0xf]
        %v685 = vld [vmem:[#allocation6 + $0xdc] sm:$0xf]
        %v686 = vld [vmem:[#allocation6 + $0xe0] sm:$0xf]
        %v687 = vld [vmem:[#allocation6 + $0xe4] sm:$0xf]
        %v688 = vld [vmem:[#allocation6 + $0xe8] sm:$0xf]
        %v689 = vld [vmem:[#allocation6 + $0xec] sm:$0xf]
        %v690 = vld [vmem:[#allocation6 + $0xf0] sm:$0xf]
        %v691 = vld [vmem:[#allocation6 + $0xf4] sm:$0xf]
        %v692 = vld [vmem:[#allocation6 + $0xf8] sm:$0xf]
        %v693 = vld [vmem:[#allocation6 + $0xfc] sm:$0xf]
        %v758 = vunpack.c.l.b16 %v630
        %v759 = vunpack.c.l.b16 %v631
        %v760 = vunpack.c.l.b16 %v632
        %v761 = vunpack.c.l.b16 %v633
        %v762 = vunpack.c.l.b16 %v634
        %v763 = vunpack.c.l.b16 %v635
        %v764 = vunpack.c.l.b16 %v636
        %v765 = vunpack.c.l.b16 %v637
        %v766 = vunpack.c.l.b16 %v638
        %v767 = vunpack.c.l.b16 %v639
        %v768 = vunpack.c.l.b16 %v640
        %v769 = vunpack.c.l.b16 %v641
        %v770 = vunpack.c.l.b16 %v642
        %v771 = vunpack.c.l.b16 %v643
        %v772 = vunpack.c.l.b16 %v644
        %v773 = vunpack.c.l.b16 %v645
        %v774 = vunpack.c.l.b16 %v646
        %v775 = vunpack.c.l.b16 %v647
        %v776 = vunpack.c.l.b16 %v648
        %v777 = vunpack.c.l.b16 %v649
        %v778 = vunpack.c.l.b16 %v650
        %v779 = vunpack.c.l.b16 %v651
        %v780 = vunpack.c.l.b16 %v652
        %v781 = vunpack.c.l.b16 %v653
        %v782 = vunpack.c.l.b16 %v654
        %v783 = vunpack.c.l.b16 %v655
        %v784 = vunpack.c.l.b16 %v656
        %v785 = vunpack.c.l.b16 %v657
        %v786 = vunpack.c.l.b16 %v658
        %v787 = vunpack.c.l.b16 %v659
        %v788 = vunpack.c.l.b16 %v660
        %v789 = vunpack.c.l.b16 %v661
        %v790 = vunpack.c.l.b16 %v662
        %v791 = vunpack.c.l.b16 %v663
        %v792 = vunpack.c.l.b16 %v664
        %v793 = vunpack.c.l.b16 %v665
        %v794 = vunpack.c.l.b16 %v666
        %v795 = vunpack.c.l.b16 %v667
        %v796 = vunpack.c.l.b16 %v668
        %v797 = vunpack.c.l.b16 %v669
        %v798 = vunpack.c.l.b16 %v670
        %v799 = vunpack.c.l.b16 %v671
        %v800 = vunpack.c.l.b16 %v672
        %v801 = vunpack.c.l.b16 %v673
        %v802 = vunpack.c.l.b16 %v674
        %v803 = vunpack.c.l.b16 %v675
        %v804 = vunpack.c.l.b16 %v676
        %v805 = vunpack.c.l.b16 %v677
        %v806 = vunpack.c.l.b16 %v678
        %v807 = vunpack.c.l.b16 %v679
        %v808 = vunpack.c.l.b16 %v680
        %v809 = vunpack.c.l.b16 %v681
        %v810 = vunpack.c.l.b16 %v682
        %v811 = vunpack.c.l.b16 %v683
        %v812 = vunpack.c.l.b16 %v684
        %v813 = vunpack.c.l.b16 %v685
        %v814 = vunpack.c.l.b16 %v686
        %v815 = vunpack.c.l.b16 %v687
        %v816 = vunpack.c.l.b16 %v688
        %v817 = vunpack.c.l.b16 %v689
        %v818 = vunpack.c.l.b16 %v690
        %v819 = vunpack.c.l.b16 %v691
        %v820 = vunpack.c.l.b16 %v692
        %v821 = vunpack.c.l.b16 %v693
        %v822 = vpack.c.b16 %v759, %v758
        %v823 = vpack.c.b16 %v761, %v760
        %v824 = vpack.c.b16 %v763, %v762
        %v825 = vpack.c.b16 %v765, %v764
        %v826 = vpack.c.b16 %v767, %v766
        %v827 = vpack.c.b16 %v769, %v768
        %v828 = vpack.c.b16 %v771, %v770
        %v829 = vpack.c.b16 %v773, %v772
        %v830 = vpack.c.b16 %v775, %v774
        %v831 = vpack.c.b16 %v777, %v776
        %v832 = vpack.c.b16 %v779, %v778
        %v833 = vpack.c.b16 %v781, %v780
        %v834 = vpack.c.b16 %v783, %v782
        %v835 = vpack.c.b16 %v785, %v784
        %v836 = vpack.c.b16 %v787, %v786
        %v837 = vpack.c.b16 %v789, %v788
        %v838 = vpack.c.b16 %v791, %v790
        %v839 = vpack.c.b16 %v793, %v792
        %v840 = vpack.c.b16 %v795, %v794
        %v841 = vpack.c.b16 %v797, %v796
        %v842 = vpack.c.b16 %v799, %v798
        %v843 = vpack.c.b16 %v801, %v800
        %v844 = vpack.c.b16 %v803, %v802
        %v845 = vpack.c.b16 %v805, %v804
        %v846 = vpack.c.b16 %v807, %v806
        %v847 = vpack.c.b16 %v809, %v808
        %v848 = vpack.c.b16 %v811, %v810
        %v849 = vpack.c.b16 %v813, %v812
        %v850 = vpack.c.b16 %v815, %v814
        %v851 = vpack.c.b16 %v817, %v816
        %v852 = vpack.c.b16 %v819, %v818
        %v853 = vpack.c.b16 %v821, %v820
        %886 = vmatprep.subr.bf16.mxu0 0
        %887 = vmatpush1.bf16.msra.mxu0 %v829
        %888 = vmatprep.subr.bf16.mxu0 0
        %889 = vmatpush1.bf16.msra.mxu0 %v828
        %890 = vmatprep.subr.bf16.mxu0 0
        %891 = vmatpush1.bf16.msra.mxu0 %v827
        %892 = vmatprep.subr.bf16.mxu0 0
        %893 = vmatpush1.bf16.msra.mxu0 %v826
        %894 = vmatprep.subr.bf16.mxu0 0
        %895 = vmatpush1.bf16.msra.mxu0 %v825
        %896 = vmatprep.subr.bf16.mxu0 0
        %897 = vmatpush1.bf16.msra.mxu0 %v824
        %898 = vmatprep.subr.bf16.mxu0 0
        %899 = vmatpush1.bf16.msra.mxu0 %v823
        %900 = vmatprep.subr.bf16.mxu0 0
        %901 = vmatpush1.bf16.msra.mxu0 %v822
        %902 = vmatprep.subr.bf16.mxu0 0
        %903 = vmatpush2.bf16.msra.mxu0 %v837
        %904 = vmatprep.subr.bf16.mxu0 0
        %905 = vmatpush2.bf16.msra.mxu0 %v836
        %906 = vmatprep.subr.bf16.mxu0 0
        %907 = vmatpush2.bf16.msra.mxu0 %v835
        %908 = vmatprep.subr.bf16.mxu0 0
        %909 = vmatpush2.bf16.msra.mxu0 %v834
        %910 = vmatprep.subr.bf16.mxu0 0
        %911 = vmatpush2.bf16.msra.mxu0 %v833
        %912 = vmatprep.subr.bf16.mxu0 0
        %913 = vmatpush2.bf16.msra.mxu0 %v832
        %914 = vmatprep.subr.bf16.mxu0 0
        %915 = vmatpush2.bf16.msra.mxu0 %v831
        %916 = vmatprep.subr.bf16.mxu0 0
        %917 = vmatpush2.bf16.msra.mxu0 %v830
        %918 = vmatprep.mubr.bf16.mxu0 %v599
        %919 = vmatmul.mubr.bf16.gmra.mxu0 %v598
        %v920 = vpop.f32.mrf.mxu0
        %v921 = vadd.f32 0.0, %v920
        %v922 = vpop.f32.mrf.mxu0
        %v923 = vpop.f32.mrf.mxu0
        %v924 = vadd.f32 0.0, %v923
        %v925 = vpop.f32.mrf.mxu0
        %926 = vmatprep.mubr.bf16.mxu0 %v603
        %927 = vmatmul.mubr.bf16.gmra.mxu0 %v602
        %v928 = vpop.f32.mrf.mxu0
        %v929 = vadd.f32 0.0, %v928
        %v930 = vpop.f32.mrf.mxu0
        %v931 = vpop.f32.mrf.mxu0
        %v932 = vadd.f32 0.0, %v931
        %v933 = vpop.f32.mrf.mxu0
        %934 = vmatprep.mubr.bf16.mxu0 %v607
        %935 = vmatmul.mubr.bf16.gmra.mxu0 %v606
        %v936 = vpop.f32.mrf.mxu0
        %v937 = vadd.f32 0.0, %v936
        %v938 = vpop.f32.mrf.mxu0
        %v939 = vpop.f32.mrf.mxu0
        %v940 = vadd.f32 0.0, %v939
        %v941 = vpop.f32.mrf.mxu0
        %942 = vmatprep.mubr.bf16.mxu0 %v611
        %943 = vmatmul.mubr.bf16.gmra.mxu0 %v610
        %v944 = vpop.f32.mrf.mxu0
        %v945 = vadd.f32 0.0, %v944
        %v946 = vpop.f32.mrf.mxu0
        %v947 = vpop.f32.mrf.mxu0
        %v948 = vadd.f32 0.0, %v947
        %v949 = vpop.f32.mrf.mxu0
        %950 = vmatprep.mubr.bf16.mxu0 %v615
        %951 = vmatmul.mubr.bf16.gmra.mxu0 %v614
        %v952 = vpop.f32.mrf.mxu0
        %v953 = vadd.f32 0.0, %v952
        %v954 = vpop.f32.mrf.mxu0
        %v955 = vpop.f32.mrf.mxu0
        %v956 = vadd.f32 0.0, %v955
        %v957 = vpop.f32.mrf.mxu0
        %958 = vmatprep.mubr.bf16.mxu0 %v619
        %959 = vmatmul.mubr.bf16.gmra.mxu0 %v618
        %v960 = vpop.f32.mrf.mxu0
        %v961 = vadd.f32 0.0, %v960
        %v962 = vpop.f32.mrf.mxu0
        %v963 = vpop.f32.mrf.mxu0
        %v964 = vadd.f32 0.0, %v963
        %v965 = vpop.f32.mrf.mxu0
        %966 = vmatprep.mubr.bf16.mxu0 %v623
        %967 = vmatmul.mubr.bf16.gmra.mxu0 %v622
        %v968 = vpop.f32.mrf.mxu0
        %v969 = vadd.f32 0.0, %v968
        %v970 = vpop.f32.mrf.mxu0
        %v971 = vpop.f32.mrf.mxu0
        %v972 = vadd.f32 0.0, %v971
        %v973 = vpop.f32.mrf.mxu0
        %974 = vmatprep.mubr.bf16.mxu0 %v627
        %975 = vmatmul.mubr.bf16.gmra.mxu0 %v626
        %v976 = vpop.f32.mrf.mxu0
        %v977 = vadd.f32 0.0, %v976
        %v978 = vpop.f32.mrf.mxu0
        %v979 = vpop.f32.mrf.mxu0
        %v980 = vadd.f32 0.0, %v979
        %v981 = vpop.f32.mrf.mxu0
        %982 = vdwg.mxu0
        %983 = vmatprep.subr.bf16.mxu0 0
        %984 = vmatpush1.bf16.msra.mxu0 %v845
        %985 = vmatprep.subr.bf16.mxu0 0
        %986 = vmatpush1.bf16.msra.mxu0 %v844
        %987 = vmatprep.subr.bf16.mxu0 0
        %988 = vmatpush1.bf16.msra.mxu0 %v843
        %989 = vmatprep.subr.bf16.mxu0 0
        %990 = vmatpush1.bf16.msra.mxu0 %v842
        %991 = vmatprep.subr.bf16.mxu0 0
        %992 = vmatpush1.bf16.msra.mxu0 %v841
        %993 = vmatprep.subr.bf16.mxu0 0
        %994 = vmatpush1.bf16.msra.mxu0 %v840
        %995 = vmatprep.subr.bf16.mxu0 0
        %996 = vmatpush1.bf16.msra.mxu0 %v839
        %997 = vmatprep.subr.bf16.mxu0 0
        %998 = vmatpush1.bf16.msra.mxu0 %v838
        %999 = vmatprep.subr.bf16.mxu0 0
        %1000 = vmatpush2.bf16.msra.mxu0 %v853
        %1001 = vmatprep.subr.bf16.mxu0 0
        %1002 = vmatpush2.bf16.msra.mxu0 %v852
        %1003 = vmatprep.subr.bf16.mxu0 0
        %1004 = vmatpush2.bf16.msra.mxu0 %v851
        %1005 = vmatprep.subr.bf16.mxu0 0
        %1006 = vmatpush2.bf16.msra.mxu0 %v850
        %1007 = vmatprep.subr.bf16.mxu0 0
        %1008 = vmatpush2.bf16.msra.mxu0 %v849
        %1009 = vmatprep.subr.bf16.mxu0 0
        %1010 = vmatpush2.bf16.msra.mxu0 %v848
        %1011 = vmatprep.subr.bf16.mxu0 0
        %1012 = vmatpush2.bf16.msra.mxu0 %v847
        %1013 = vmatprep.subr.bf16.mxu0 0
        %1014 = vmatpush2.bf16.msra.mxu0 %v846
        %1015 = vmatprep.mubr.bf16.mxu0 %v601
        %1016 = vmatmul.mubr.bf16.gmra.mxu0 %v600
        %v1017 = vpop.f32.mrf.mxu0
        %v1018 = vadd.f32 %v921, %v1017
        %v1019 = vpop.f32.mrf.mxu0
        %v1020 = vpop.f32.mrf.mxu0
        %v1021 = vadd.f32 %v924, %v1020
        %v1022 = vpop.f32.mrf.mxu0
        %1023 = vmatprep.mubr.bf16.mxu0 %v605
        %1024 = vmatmul.mubr.bf16.gmra.mxu0 %v604
        %v1025 = vpop.f32.mrf.mxu0
        %v1026 = vadd.f32 %v929, %v1025
        %v1027 = vpop.f32.mrf.mxu0
        %v1028 = vpop.f32.mrf.mxu0
        %v1029 = vadd.f32 %v932, %v1028
        %v1030 = vpop.f32.mrf.mxu0
        %1031 = vmatprep.mubr.bf16.mxu0 %v609
        %1032 = vmatmul.mubr.bf16.gmra.mxu0 %v608
        %v1033 = vpop.f32.mrf.mxu0
        %v1034 = vadd.f32 %v937, %v1033
        %v1035 = vpop.f32.mrf.mxu0
        %v1036 = vpop.f32.mrf.mxu0
        %v1037 = vadd.f32 %v940, %v1036
        %v1038 = vpop.f32.mrf.mxu0
        %1039 = vmatprep.mubr.bf16.mxu0 %v613
        %1040 = vmatmul.mubr.bf16.gmra.mxu0 %v612
        %v1041 = vpop.f32.mrf.mxu0
        %v1042 = vadd.f32 %v945, %v1041
        %v1043 = vpop.f32.mrf.mxu0
        %v1044 = vpop.f32.mrf.mxu0
        %v1045 = vadd.f32 %v948, %v1044
        %v1046 = vpop.f32.mrf.mxu0
        %1047 = vmatprep.mubr.bf16.mxu0 %v617
        %1048 = vmatmul.mubr.bf16.gmra.mxu0 %v616
        %v1049 = vpop.f32.mrf.mxu0
        %v1050 = vadd.f32 %v953, %v1049
        %v1051 = vpop.f32.mrf.mxu0
        %v1052 = vpop.f32.mrf.mxu0
        %v1053 = vadd.f32 %v956, %v1052
        %v1054 = vpop.f32.mrf.mxu0
        %1055 = vmatprep.mubr.bf16.mxu0 %v621
        %1056 = vmatmul.mubr.bf16.gmra.mxu0 %v620
        %v1057 = vpop.f32.mrf.mxu0
        %v1058 = vadd.f32 %v961, %v1057
        %v1059 = vpop.f32.mrf.mxu0
        %v1060 = vpop.f32.mrf.mxu0
        %v1061 = vadd.f32 %v964, %v1060
        %v1062 = vpop.f32.mrf.mxu0
        %1063 = vmatprep.mubr.bf16.mxu0 %v625
        %1064 = vmatmul.mubr.bf16.gmra.mxu0 %v624
        %v1065 = vpop.f32.mrf.mxu0
        %v1066 = vadd.f32 %v969, %v1065
        %v1067 = vpop.f32.mrf.mxu0
        %v1068 = vpop.f32.mrf.mxu0
        %v1069 = vadd.f32 %v972, %v1068
        %v1070 = vpop.f32.mrf.mxu0
        %1071 = vmatprep.mubr.bf16.mxu0 %v629
        %1072 = vmatmul.mubr.bf16.gmra.mxu0 %v628
        %v1073 = vpop.f32.mrf.mxu0
        %v1074 = vadd.f32 %v977, %v1073
        %v1075 = vpop.f32.mrf.mxu0
        %v1076 = vpop.f32.mrf.mxu0
        %v1077 = vadd.f32 %v980, %v1076
        %v1078 = vpop.f32.mrf.mxu0
        %1079 = vdwg.mxu0
        %v1080 = vld [vmem:[%s2] sm:$0x1]
        %v1082 = vlaneseq
        %v1083 = vshrl.u32 %v1082, 7
        %v1084 = vsub.s32 0, %v1083
        %v1085 = vrot.slane %v1080, %v1084
        %v1087 = vmul.f32 %v1018, %v1085
        %v1088 = vmul.f32 %v1021, %v1085
        %v1089 = vmul.f32 %v1026, %v1085
        %v1090 = vmul.f32 %v1029, %v1085
        %v1091 = vmul.f32 %v1034, %v1085
        %v1092 = vmul.f32 %v1037, %v1085
        %v1093 = vmul.f32 %v1042, %v1085
        %v1094 = vmul.f32 %v1045, %v1085
        %v1095 = vmul.f32 %v1050, %v1085
        %v1096 = vmul.f32 %v1053, %v1085
        %v1097 = vmul.f32 %v1058, %v1085
        %v1098 = vmul.f32 %v1061, %v1085
        %v1099 = vmul.f32 %v1066, %v1085
        %v1100 = vmul.f32 %v1069, %v1085
        %v1101 = vmul.f32 %v1074, %v1085
        %v1102 = vmul.f32 %v1077, %v1085
        %v1103 = vld [vmem:[#allocation8] sm:$0x1]
        %v1105 = vlaneseq
        %v1106 = vshrl.u32 %v1105, 7
        %v1107 = vsub.s32 0, %v1106
        %v1108 = vrot.slane %v1103, %v1107
        %v1110 = vadd.f32 %v1087, %v1108
        %v1111 = vadd.f32 %v1088, %v1108
        %v1112 = vadd.f32 %v1089, %v1108
        %v1113 = vadd.f32 %v1090, %v1108
        %v1114 = vadd.f32 %v1091, %v1108
        %v1115 = vadd.f32 %v1092, %v1108
        %v1116 = vadd.f32 %v1093, %v1108
        %v1117 = vadd.f32 %v1094, %v1108
        %v1118 = vadd.f32 %v1095, %v1108
        %v1119 = vadd.f32 %v1096, %v1108
        %v1120 = vadd.f32 %v1097, %v1108
        %v1121 = vadd.f32 %v1098, %v1108
        %v1122 = vadd.f32 %v1099, %v1108
        %v1123 = vadd.f32 %v1100, %v1108
        %v1124 = vadd.f32 %v1101, %v1108
        %v1125 = vadd.f32 %v1102, %v1108
        %v1126 = vmax.f32 %v1110, 0.0
        %v1127 = vmax.f32 %v1111, 0.0
        %v1128 = vmax.f32 %v1112, 0.0
        %v1129 = vmax.f32 %v1113, 0.0
        %v1130 = vmax.f32 %v1114, 0.0
        %v1131 = vmax.f32 %v1115, 0.0
        %v1132 = vmax.f32 %v1116, 0.0
        %v1133 = vmax.f32 %v1117, 0.0
        %v1134 = vmax.f32 %v1118, 0.0
        %v1135 = vmax.f32 %v1119, 0.0
        %v1136 = vmax.f32 %v1120, 0.0
        %v1137 = vmax.f32 %v1121, 0.0
        %v1138 = vmax.f32 %v1122, 0.0
        %v1139 = vmax.f32 %v1123, 0.0
        %v1140 = vmax.f32 %v1124, 0.0
        %v1141 = vmax.f32 %v1125, 0.0
        %1142 = vst [vmem:[#allocation2] sm:$0x7] 0.0
        %1143 = vst [vmem:[#allocation2 + $0x48] sm:$0x7] 0.0
        %1144 = vst [vmem:[#allocation2 + $0x43] sm:$0x7] 0.0
        %1145 = vst [vmem:[#allocation2 + $0x8b] sm:$0x7] 0.0
        %1146 = vst [vmem:[#allocation2 + $0x3] sm:$0xff] %v1126
        %1147 = vst [vmem:[#allocation2 + $0xb] sm:$0xff] %v1127
        %1148 = vst [vmem:[#allocation2 + $0x13] sm:$0xff] %v1128
        %1149 = vst [vmem:[#allocation2 + $0x1b] sm:$0xff] %v1129
        %1150 = vst [vmem:[#allocation2 + $0x23] sm:$0xff] %v1130
        %1151 = vst [vmem:[#allocation2 + $0x2b] sm:$0xff] %v1131
        %1152 = vst [vmem:[#allocation2 + $0x33] sm:$0xff] %v1132
        %1153 = vst [vmem:[#allocation2 + $0x3b] sm:$0xff] %v1133
        %1154 = vst [vmem:[#allocation2 + $0x4b] sm:$0xff] %v1134
        %1155 = vst [vmem:[#allocation2 + $0x53] sm:$0xff] %v1135
        %1156 = vst [vmem:[#allocation2 + $0x5b] sm:$0xff] %v1136
        %1157 = vst [vmem:[#allocation2 + $0x63] sm:$0xff] %v1137
        %1158 = vst [vmem:[#allocation2 + $0x6b] sm:$0xff] %v1138
        %1159 = vst [vmem:[#allocation2 + $0x73] sm:$0xff] %v1139
        %1160 = vst [vmem:[#allocation2 + $0x7b] sm:$0xff] %v1140
        %1161 = vst [vmem:[#allocation2 + $0x83] sm:$0xff] %v1141
        %v1162 = vld [vmem:[#allocation2] sm:$0xff]
        %v1163 = vld [vmem:[#allocation2 + $0x8] sm:$0xff]
        %v1164 = vld [vmem:[#allocation2 + $0x10] sm:$0xff]
        %v1165 = vld [vmem:[#allocation2 + $0x18] sm:$0xff]
        %v1166 = vld [vmem:[#allocation2 + $0x20] sm:$0xff]
        %v1167 = vld [vmem:[#allocation2 + $0x28] sm:$0xff]
        %v1168 = vld [vmem:[#allocation2 + $0x30] sm:$0xff]
        %v1169 = vld [vmem:[#allocation2 + $0x38] sm:$0xff]
        %v1170 = vld [vmem:[#allocation2 + $0x48] sm:$0xff]
        %v1171 = vld [vmem:[#allocation2 + $0x50] sm:$0xff]
        %v1172 = vld [vmem:[#allocation2 + $0x58] sm:$0xff]
        %v1173 = vld [vmem:[#allocation2 + $0x60] sm:$0xff]
        %v1174 = vld [vmem:[#allocation2 + $0x68] sm:$0xff]
        %v1175 = vld [vmem:[#allocation2 + $0x70] sm:$0xff]
        %v1176 = vld [vmem:[#allocation2 + $0x78] sm:$0xff]
        %v1177 = vld [vmem:[#allocation2 + $0x80] sm:$0xff]
        %v1178 = vld [vmem:[#allocation2 + $0x1] sm:$0xff]
        %v1179 = vld [vmem:[#allocation2 + $0x9] sm:$0xff]
        %v1180 = vld [vmem:[#allocation2 + $0x11] sm:$0xff]
        %v1181 = vld [vmem:[#allocation2 + $0x19] sm:$0xff]
        %v1182 = vld [vmem:[#allocation2 + $0x21] sm:$0xff]
        %v1183 = vld [vmem:[#allocation2 + $0x29] sm:$0xff]
        %v1184 = vld [vmem:[#allocation2 + $0x31] sm:$0xff]
        %v1185 = vld [vmem:[#allocation2 + $0x39] sm:$0xff]
        %v1186 = vld [vmem:[#allocation2 + $0x49] sm:$0xff]
        %v1187 = vld [vmem:[#allocation2 + $0x51] sm:$0xff]
        %v1188 = vld [vmem:[#allocation2 + $0x59] sm:$0xff]
        %v1189 = vld [vmem:[#allocation2 + $0x61] sm:$0xff]
        %v1190 = vld [vmem:[#allocation2 + $0x69] sm:$0xff]
        %v1191 = vld [vmem:[#allocation2 + $0x71] sm:$0xff]
        %v1192 = vld [vmem:[#allocation2 + $0x79] sm:$0xff]
        %v1193 = vld [vmem:[#allocation2 + $0x81] sm:$0xff]
        %v1194 = vld [vmem:[#allocation2 + $0x2] sm:$0xff]
        %v1195 = vld [vmem:[#allocation2 + $0xa] sm:$0xff]
        %v1196 = vld [vmem:[#allocation2 + $0x12] sm:$0xff]
        %v1197 = vld [vmem:[#allocation2 + $0x1a] sm:$0xff]
        %v1198 = vld [vmem:[#allocation2 + $0x22] sm:$0xff]
        %v1199 = vld [vmem:[#allocation2 + $0x2a] sm:$0xff]
        %v1200 = vld [vmem:[#allocation2 + $0x32] sm:$0xff]
        %v1201 = vld [vmem:[#allocation2 + $0x3a] sm:$0xff]
        %v1202 = vld [vmem:[#allocation2 + $0x4a] sm:$0xff]
        %v1203 = vld [vmem:[#allocation2 + $0x52] sm:$0xff]
        %v1204 = vld [vmem:[#allocation2 + $0x5a] sm:$0xff]
        %v1205 = vld [vmem:[#allocation2 + $0x62] sm:$0xff]
        %v1206 = vld [vmem:[#allocation2 + $0x6a] sm:$0xff]
        %v1207 = vld [vmem:[#allocation2 + $0x72] sm:$0xff]
        %v1208 = vld [vmem:[#allocation2 + $0x7a] sm:$0xff]
        %v1209 = vld [vmem:[#allocation2 + $0x82] sm:$0xff]
        %v1210 = vld [vmem:[#allocation2 + $0x3] sm:$0xff]
        %v1211 = vld [vmem:[#allocation2 + $0xb] sm:$0xff]
        %v1212 = vld [vmem:[#allocation2 + $0x13] sm:$0xff]
        %v1213 = vld [vmem:[#allocation2 + $0x1b] sm:$0xff]
        %v1214 = vld [vmem:[#allocation2 + $0x23] sm:$0xff]
        %v1215 = vld [vmem:[#allocation2 + $0x2b] sm:$0xff]
        %v1216 = vld [vmem:[#allocation2 + $0x33] sm:$0xff]
        %v1217 = vld [vmem:[#allocation2 + $0x3b] sm:$0xff]
        %v1218 = vld [vmem:[#allocation2 + $0x4b] sm:$0xff]
        %v1219 = vld [vmem:[#allocation2 + $0x53] sm:$0xff]
        %v1220 = vld [vmem:[#allocation2 + $0x5b] sm:$0xff]
        %v1221 = vld [vmem:[#allocation2 + $0x63] sm:$0xff]
        %v1222 = vld [vmem:[#allocation2 + $0x6b] sm:$0xff]
        %v1223 = vld [vmem:[#allocation2 + $0x73] sm:$0xff]
        %v1224 = vld [vmem:[#allocation2 + $0x7b] sm:$0xff]
        %v1225 = vld [vmem:[#allocation2 + $0x83] sm:$0xff]
        %v1226 = vld [vmem:[#allocation2 + $0x4] sm:$0xff]
        %v1227 = vld [vmem:[#allocation2 + $0xc] sm:$0xff]
        %v1228 = vld [vmem:[#allocation2 + $0x14] sm:$0xff]
        %v1229 = vld [vmem:[#allocation2 + $0x1c] sm:$0xff]
        %v1230 = vld [vmem:[#allocation2 + $0x24] sm:$0xff]
        %v1231 = vld [vmem:[#allocation2 + $0x2c] sm:$0xff]
        %v1232 = vld [vmem:[#allocation2 + $0x34] sm:$0xff]
        %v1233 = vld [vmem:[#allocation2 + $0x3c] sm:$0xff]
        %v1234 = vld [vmem:[#allocation2 + $0x4c] sm:$0xff]
        %v1235 = vld [vmem:[#allocation2 + $0x54] sm:$0xff]
        %v1236 = vld [vmem:[#allocation2 + $0x5c] sm:$0xff]
        %v1237 = vld [vmem:[#allocation2 + $0x64] sm:$0xff]
        %v1238 = vld [vmem:[#allocation2 + $0x6c] sm:$0xff]
        %v1239 = vld [vmem:[#allocation2 + $0x74] sm:$0xff]
        %v1240 = vld [vmem:[#allocation2 + $0x7c] sm:$0xff]
        %v1241 = vld [vmem:[#allocation2 + $0x84] sm:$0xff]
        %v1242 = vld [vmem:[#allocation2 + $0x5] sm:$0xff]
        %v1243 = vld [vmem:[#allocation2 + $0xd] sm:$0xff]
        %v1244 = vld [vmem:[#allocation2 + $0x15] sm:$0xff]
        %v1245 = vld [vmem:[#allocation2 + $0x1d] sm:$0xff]
        %v1246 = vld [vmem:[#allocation2 + $0x25] sm:$0xff]
        %v1247 = vld [vmem:[#allocation2 + $0x2d] sm:$0xff]
        %v1248 = vld [vmem:[#allocation2 + $0x35] sm:$0xff]
        %v1249 = vld [vmem:[#allocation2 + $0x3d] sm:$0xff]
        %v1250 = vld [vmem:[#allocation2 + $0x4d] sm:$0xff]
        %v1251 = vld [vmem:[#allocation2 + $0x55] sm:$0xff]
        %v1252 = vld [vmem:[#allocation2 + $0x5d] sm:$0xff]
        %v1253 = vld [vmem:[#allocation2 + $0x65] sm:$0xff]
        %v1254 = vld [vmem:[#allocation2 + $0x6d] sm:$0xff]
        %v1255 = vld [vmem:[#allocation2 + $0x75] sm:$0xff]
        %v1256 = vld [vmem:[#allocation2 + $0x7d] sm:$0xff]
        %v1257 = vld [vmem:[#allocation2 + $0x85] sm:$0xff]
        %v1258 = vld [vmem:[#allocation2 + $0x6] sm:$0xff]
        %v1259 = vld [vmem:[#allocation2 + $0xe] sm:$0xff]
        %v1260 = vld [vmem:[#allocation2 + $0x16] sm:$0xff]
        %v1261 = vld [vmem:[#allocation2 + $0x1e] sm:$0xff]
        %v1262 = vld [vmem:[#allocation2 + $0x26] sm:$0xff]
        %v1263 = vld [vmem:[#allocation2 + $0x2e] sm:$0xff]
        %v1264 = vld [vmem:[#allocation2 + $0x36] sm:$0xff]
        %v1265 = vld [vmem:[#allocation2 + $0x3e] sm:$0xff]
        %v1266 = vld [vmem:[#allocation2 + $0x4e] sm:$0xff]
        %v1267 = vld [vmem:[#allocation2 + $0x56] sm:$0xff]
        %v1268 = vld [vmem:[#allocation2 + $0x5e] sm:$0xff]
        %v1269 = vld [vmem:[#allocation2 + $0x66] sm:$0xff]
        %v1270 = vld [vmem:[#allocation2 + $0x6e] sm:$0xff]
        %v1271 = vld [vmem:[#allocation2 + $0x76] sm:$0xff]
        %v1272 = vld [vmem:[#allocation2 + $0x7e] sm:$0xff]
        %v1273 = vld [vmem:[#allocation2 + $0x86] sm:$0xff]
        %v1274 = vpack.c.bf16 %v1163, %v1162
        %v1275 = vpack.c.bf16 %v1179, %v1178
        %v1276 = vpack.c.bf16 %v1195, %v1194
        %v1277 = vpack.c.bf16 %v1211, %v1210
        %v1278 = vpack.c.bf16 %v1227, %v1226
        %v1279 = vpack.c.bf16 %v1243, %v1242
        %v1280 = vpack.c.bf16 %v1259, %v1258
        %v1281 = vpack.c.bf16 %v1165, %v1164
        %v1282 = vpack.c.bf16 %v1181, %v1180
        %v1283 = vpack.c.bf16 %v1197, %v1196
        %v1284 = vpack.c.bf16 %v1213, %v1212
        %v1285 = vpack.c.bf16 %v1229, %v1228
        %v1286 = vpack.c.bf16 %v1245, %v1244
        %v1287 = vpack.c.bf16 %v1261, %v1260
        %v1288 = vpack.c.bf16 %v1167, %v1166
        %v1289 = vpack.c.bf16 %v1183, %v1182
        %v1290 = vpack.c.bf16 %v1199, %v1198
        %v1291 = vpack.c.bf16 %v1215, %v1214
        %v1292 = vpack.c.bf16 %v1231, %v1230
        %v1293 = vpack.c.bf16 %v1247, %v1246
        %v1294 = vpack.c.bf16 %v1263, %v1262
        %v1295 = vpack.c.bf16 %v1169, %v1168
        %v1296 = vpack.c.bf16 %v1185, %v1184
        %v1297 = vpack.c.bf16 %v1201, %v1200
        %v1298 = vpack.c.bf16 %v1217, %v1216
        %v1299 = vpack.c.bf16 %v1233, %v1232
        %v1300 = vpack.c.bf16 %v1249, %v1248
        %v1301 = vpack.c.bf16 %v1265, %v1264
        %v1302 = vpack.c.bf16 %v1171, %v1170
        %v1303 = vpack.c.bf16 %v1187, %v1186
        %v1304 = vpack.c.bf16 %v1203, %v1202
        %v1305 = vpack.c.bf16 %v1219, %v1218
        %v1306 = vpack.c.bf16 %v1235, %v1234
        %v1307 = vpack.c.bf16 %v1251, %v1250
        %v1308 = vpack.c.bf16 %v1267, %v1266
        %v1309 = vpack.c.bf16 %v1173, %v1172
        %v1310 = vpack.c.bf16 %v1189, %v1188
        %v1311 = vpack.c.bf16 %v1205, %v1204
        %v1312 = vpack.c.bf16 %v1221, %v1220
        %v1313 = vpack.c.bf16 %v1237, %v1236
        %v1314 = vpack.c.bf16 %v1253, %v1252
        %v1315 = vpack.c.bf16 %v1269, %v1268
        %v1316 = vpack.c.bf16 %v1175, %v1174
        %v1317 = vpack.c.bf16 %v1191, %v1190
        %v1318 = vpack.c.bf16 %v1207, %v1206
        %v1319 = vpack.c.bf16 %v1223, %v1222
        %v1320 = vpack.c.bf16 %v1239, %v1238
        %v1321 = vpack.c.bf16 %v1255, %v1254
        %v1322 = vpack.c.bf16 %v1271, %v1270
        %v1323 = vpack.c.bf16 %v1177, %v1176
        %v1324 = vpack.c.bf16 %v1193, %v1192
        %v1325 = vpack.c.bf16 %v1209, %v1208
        %v1326 = vpack.c.bf16 %v1225, %v1224
        %v1327 = vpack.c.bf16 %v1241, %v1240
        %v1328 = vpack.c.bf16 %v1257, %v1256
        %v1329 = vpack.c.bf16 %v1273, %v1272
        %v1330 = vld [vmem:[#allocation9] sm:$0xf]
        %v1331 = vld [vmem:[#allocation9 + $0x4] sm:$0xf]
        %v1332 = vld [vmem:[#allocation9 + $0x8] sm:$0xf]
        %v1333 = vld [vmem:[#allocation9 + $0xc] sm:$0xf]
        %v1334 = vld [vmem:[#allocation9 + $0x10] sm:$0xf]
        %v1335 = vld [vmem:[#allocation9 + $0x14] sm:$0xf]
        %v1336 = vld [vmem:[#allocation9 + $0x18] sm:$0xf]
        %v1337 = vld [vmem:[#allocation9 + $0x1c] sm:$0xf]
        %v1338 = vld [vmem:[#allocation9 + $0x20] sm:$0xf]
        %v1339 = vld [vmem:[#allocation9 + $0x24] sm:$0xf]
        %v1340 = vld [vmem:[#allocation9 + $0x28] sm:$0xf]
        %v1341 = vld [vmem:[#allocation9 + $0x2c] sm:$0xf]
        %v1342 = vld [vmem:[#allocation9 + $0x30] sm:$0xf]
        %v1343 = vld [vmem:[#allocation9 + $0x34] sm:$0xf]
        %v1344 = vld [vmem:[#allocation9 + $0x38] sm:$0xf]
        %v1345 = vld [vmem:[#allocation9 + $0x3c] sm:$0xf]
        %v1346 = vld [vmem:[#allocation9 + $0x40] sm:$0xf]
        %v1347 = vld [vmem:[#allocation9 + $0x44] sm:$0xf]
        %v1348 = vld [vmem:[#allocation9 + $0x48] sm:$0xf]
        %v1349 = vld [vmem:[#allocation9 + $0x4c] sm:$0xf]
        %v1350 = vld [vmem:[#allocation9 + $0x50] sm:$0xf]
        %v1351 = vld [vmem:[#allocation9 + $0x54] sm:$0xf]
        %v1352 = vld [vmem:[#allocation9 + $0x58] sm:$0xf]
        %v1353 = vld [vmem:[#allocation9 + $0x5c] sm:$0xf]
        %v1354 = vld [vmem:[#allocation9 + $0x60] sm:$0xf]
        %v1355 = vld [vmem:[#allocation9 + $0x64] sm:$0xf]
        %v1356 = vld [vmem:[#allocation9 + $0x68] sm:$0xf]
        %v1357 = vld [vmem:[#allocation9 + $0x6c] sm:$0xf]
        %v1358 = vld [vmem:[#allocation9 + $0x70] sm:$0xf]
        %v1359 = vld [vmem:[#allocation9 + $0x74] sm:$0xf]
        %v1360 = vld [vmem:[#allocation9 + $0x78] sm:$0xf]
        %v1361 = vld [vmem:[#allocation9 + $0x7c] sm:$0xf]
        %v1362 = vld [vmem:[#allocation9 + $0x80] sm:$0xf]
        %v1363 = vld [vmem:[#allocation9 + $0x84] sm:$0xf]
        %v1364 = vld [vmem:[#allocation9 + $0x88] sm:$0xf]
        %v1365 = vld [vmem:[#allocation9 + $0x8c] sm:$0xf]
        %v1366 = vld [vmem:[#allocation9 + $0x90] sm:$0xf]
        %v1367 = vld [vmem:[#allocation9 + $0x94] sm:$0xf]
        %v1368 = vld [vmem:[#allocation9 + $0x98] sm:$0xf]
        %v1369 = vld [vmem:[#allocation9 + $0x9c] sm:$0xf]
        %v1370 = vld [vmem:[#allocation9 + $0xa0] sm:$0xf]
        %v1371 = vld [vmem:[#allocation9 + $0xa4] sm:$0xf]
        %v1372 = vld [vmem:[#allocation9 + $0xa8] sm:$0xf]
        %v1373 = vld [vmem:[#allocation9 + $0xac] sm:$0xf]
        %v1374 = vld [vmem:[#allocation9 + $0xb0] sm:$0xf]
        %v1375 = vld [vmem:[#allocation9 + $0xb4] sm:$0xf]
        %v1376 = vld [vmem:[#allocation9 + $0xb8] sm:$0xf]
        %v1377 = vld [vmem:[#allocation9 + $0xbc] sm:$0xf]
        %v1378 = vld [vmem:[#allocation9 + $0xc0] sm:$0xf]
        %v1379 = vld [vmem:[#allocation9 + $0xc4] sm:$0xf]
        %v1380 = vld [vmem:[#allocation9 + $0xc8] sm:$0xf]
        %v1381 = vld [vmem:[#allocation9 + $0xcc] sm:$0xf]
        %v1382 = vld [vmem:[#allocation9 + $0xd0] sm:$0xf]
        %v1383 = vld [vmem:[#allocation9 + $0xd4] sm:$0xf]
        %v1384 = vld [vmem:[#allocation9 + $0xd8] sm:$0xf]
        %v1385 = vld [vmem:[#allocation9 + $0xdc] sm:$0xf]
        %v1386 = vld [vmem:[#allocation9 + $0xe0] sm:$0xf]
        %v1387 = vld [vmem:[#allocation9 + $0xe4] sm:$0xf]
        %v1388 = vld [vmem:[#allocation9 + $0xe8] sm:$0xf]
        %v1389 = vld [vmem:[#allocation9 + $0xec] sm:$0xf]
        %v1390 = vld [vmem:[#allocation9 + $0xf0] sm:$0xf]
        %v1391 = vld [vmem:[#allocation9 + $0xf4] sm:$0xf]
        %v1392 = vld [vmem:[#allocation9 + $0xf8] sm:$0xf]
        %v1393 = vld [vmem:[#allocation9 + $0xfc] sm:$0xf]
        %v1394 = vld [vmem:[#allocation9 + $0x100] sm:$0xf]
        %v1395 = vld [vmem:[#allocation9 + $0x104] sm:$0xf]
        %v1396 = vld [vmem:[#allocation9 + $0x108] sm:$0xf]
        %v1397 = vld [vmem:[#allocation9 + $0x10c] sm:$0xf]
        %v1398 = vld [vmem:[#allocation9 + $0x110] sm:$0xf]
        %v1399 = vld [vmem:[#allocation9 + $0x114] sm:$0xf]
        %v1400 = vld [vmem:[#allocation9 + $0x118] sm:$0xf]
        %v1401 = vld [vmem:[#allocation9 + $0x11c] sm:$0xf]
        %v1402 = vld [vmem:[#allocation9 + $0x120] sm:$0xf]
        %v1403 = vld [vmem:[#allocation9 + $0x124] sm:$0xf]
        %v1404 = vld [vmem:[#allocation9 + $0x128] sm:$0xf]
        %v1405 = vld [vmem:[#allocation9 + $0x12c] sm:$0xf]
        %v1406 = vld [vmem:[#allocation9 + $0x130] sm:$0xf]
        %v1407 = vld [vmem:[#allocation9 + $0x134] sm:$0xf]
        %v1408 = vld [vmem:[#allocation9 + $0x138] sm:$0xf]
        %v1409 = vld [vmem:[#allocation9 + $0x13c] sm:$0xf]
        %v1410 = vld [vmem:[#allocation9 + $0x140] sm:$0xf]
        %v1411 = vld [vmem:[#allocation9 + $0x144] sm:$0xf]
        %v1412 = vld [vmem:[#allocation9 + $0x148] sm:$0xf]
        %v1413 = vld [vmem:[#allocation9 + $0x14c] sm:$0xf]
        %v1414 = vld [vmem:[#allocation9 + $0x150] sm:$0xf]
        %v1415 = vld [vmem:[#allocation9 + $0x154] sm:$0xf]
        %v1416 = vld [vmem:[#allocation9 + $0x158] sm:$0xf]
        %v1417 = vld [vmem:[#allocation9 + $0x15c] sm:$0xf]
        %v1418 = vld [vmem:[#allocation9 + $0x160] sm:$0xf]
        %v1419 = vld [vmem:[#allocation9 + $0x164] sm:$0xf]
        %v1420 = vld [vmem:[#allocation9 + $0x168] sm:$0xf]
        %v1421 = vld [vmem:[#allocation9 + $0x16c] sm:$0xf]
        %v1422 = vld [vmem:[#allocation9 + $0x170] sm:$0xf]
        %v1423 = vld [vmem:[#allocation9 + $0x174] sm:$0xf]
        %v1424 = vld [vmem:[#allocation9 + $0x178] sm:$0xf]
        %v1425 = vld [vmem:[#allocation9 + $0x17c] sm:$0xf]
        %v1426 = vld [vmem:[#allocation9 + $0x180] sm:$0xf]
        %v1427 = vld [vmem:[#allocation9 + $0x184] sm:$0xf]
        %v1428 = vld [vmem:[#allocation9 + $0x188] sm:$0xf]
        %v1429 = vld [vmem:[#allocation9 + $0x18c] sm:$0xf]
        %v1430 = vld [vmem:[#allocation9 + $0x190] sm:$0xf]
        %v1431 = vld [vmem:[#allocation9 + $0x194] sm:$0xf]
        %v1432 = vld [vmem:[#allocation9 + $0x198] sm:$0xf]
        %v1433 = vld [vmem:[#allocation9 + $0x19c] sm:$0xf]
        %v1434 = vld [vmem:[#allocation9 + $0x1a0] sm:$0xf]
        %v1435 = vld [vmem:[#allocation9 + $0x1a4] sm:$0xf]
        %v1436 = vld [vmem:[#allocation9 + $0x1a8] sm:$0xf]
        %v1437 = vld [vmem:[#allocation9 + $0x1ac] sm:$0xf]
        %v1438 = vld [vmem:[#allocation9 + $0x1b0] sm:$0xf]
        %v1439 = vld [vmem:[#allocation9 + $0x1b4] sm:$0xf]
        %v1440 = vld [vmem:[#allocation9 + $0x1b8] sm:$0xf]
        %v1441 = vld [vmem:[#allocation9 + $0x1bc] sm:$0xf]
        %v1554 = vunpack.c.l.b16 %v1330
        %v1555 = vunpack.c.l.b16 %v1331
        %v1556 = vunpack.c.l.b16 %v1332
        %v1557 = vunpack.c.l.b16 %v1333
        %v1558 = vunpack.c.l.b16 %v1334
        %v1559 = vunpack.c.l.b16 %v1335
        %v1560 = vunpack.c.l.b16 %v1336
        %v1561 = vunpack.c.l.b16 %v1337
        %v1562 = vunpack.c.l.b16 %v1338
        %v1563 = vunpack.c.l.b16 %v1339
        %v1564 = vunpack.c.l.b16 %v1340
        %v1565 = vunpack.c.l.b16 %v1341
        %v1566 = vunpack.c.l.b16 %v1342
        %v1567 = vunpack.c.l.b16 %v1343
        %v1568 = vunpack.c.l.b16 %v1344
        %v1569 = vunpack.c.l.b16 %v1345
        %v1570 = vunpack.c.l.b16 %v1346
        %v1571 = vunpack.c.l.b16 %v1347
        %v1572 = vunpack.c.l.b16 %v1348
        %v1573 = vunpack.c.l.b16 %v1349
        %v1574 = vunpack.c.l.b16 %v1350
        %v1575 = vunpack.c.l.b16 %v1351
        %v1576 = vunpack.c.l.b16 %v1352
        %v1577 = vunpack.c.l.b16 %v1353
        %v1578 = vunpack.c.l.b16 %v1354
        %v1579 = vunpack.c.l.b16 %v1355
        %v1580 = vunpack.c.l.b16 %v1356
        %v1581 = vunpack.c.l.b16 %v1357
        %v1582 = vunpack.c.l.b16 %v1358
        %v1583 = vunpack.c.l.b16 %v1359
        %v1584 = vunpack.c.l.b16 %v1360
        %v1585 = vunpack.c.l.b16 %v1361
        %v1586 = vunpack.c.l.b16 %v1362
        %v1587 = vunpack.c.l.b16 %v1363
        %v1588 = vunpack.c.l.b16 %v1364
        %v1589 = vunpack.c.l.b16 %v1365
        %v1590 = vunpack.c.l.b16 %v1366
        %v1591 = vunpack.c.l.b16 %v1367
        %v1592 = vunpack.c.l.b16 %v1368
        %v1593 = vunpack.c.l.b16 %v1369
        %v1594 = vunpack.c.l.b16 %v1370
        %v1595 = vunpack.c.l.b16 %v1371
        %v1596 = vunpack.c.l.b16 %v1372
        %v1597 = vunpack.c.l.b16 %v1373
        %v1598 = vunpack.c.l.b16 %v1374
        %v1599 = vunpack.c.l.b16 %v1375
        %v1600 = vunpack.c.l.b16 %v1376
        %v1601 = vunpack.c.l.b16 %v1377
        %v1602 = vunpack.c.l.b16 %v1378
        %v1603 = vunpack.c.l.b16 %v1379
        %v1604 = vunpack.c.l.b16 %v1380
        %v1605 = vunpack.c.l.b16 %v1381
        %v1606 = vunpack.c.l.b16 %v1382
        %v1607 = vunpack.c.l.b16 %v1383
        %v1608 = vunpack.c.l.b16 %v1384
        %v1609 = vunpack.c.l.b16 %v1385
        %v1610 = vunpack.c.l.b16 %v1386
        %v1611 = vunpack.c.l.b16 %v1387
        %v1612 = vunpack.c.l.b16 %v1388
        %v1613 = vunpack.c.l.b16 %v1389
        %v1614 = vunpack.c.l.b16 %v1390
        %v1615 = vunpack.c.l.b16 %v1391
        %v1616 = vunpack.c.l.b16 %v1392
        %v1617 = vunpack.c.l.b16 %v1393
        %v1618 = vunpack.c.l.b16 %v1394
        %v1619 = vunpack.c.l.b16 %v1395
        %v1620 = vunpack.c.l.b16 %v1396
        %v1621 = vunpack.c.l.b16 %v1397
        %v1622 = vunpack.c.l.b16 %v1398
        %v1623 = vunpack.c.l.b16 %v1399
        %v1624 = vunpack.c.l.b16 %v1400
        %v1625 = vunpack.c.l.b16 %v1401
        %v1626 = vunpack.c.l.b16 %v1402
        %v1627 = vunpack.c.l.b16 %v1403
        %v1628 = vunpack.c.l.b16 %v1404
        %v1629 = vunpack.c.l.b16 %v1405
        %v1630 = vunpack.c.l.b16 %v1406
        %v1631 = vunpack.c.l.b16 %v1407
        %v1632 = vunpack.c.l.b16 %v1408
        %v1633 = vunpack.c.l.b16 %v1409
        %v1634 = vunpack.c.l.b16 %v1410
        %v1635 = vunpack.c.l.b16 %v1411
        %v1636 = vunpack.c.l.b16 %v1412
        %v1637 = vunpack.c.l.b16 %v1413
        %v1638 = vunpack.c.l.b16 %v1414
        %v1639 = vunpack.c.l.b16 %v1415
        %v1640 = vunpack.c.l.b16 %v1416
        %v1641 = vunpack.c.l.b16 %v1417
        %v1642 = vunpack.c.l.b16 %v1418
        %v1643 = vunpack.c.l.b16 %v1419
        %v1644 = vunpack.c.l.b16 %v1420
        %v1645 = vunpack.c.l.b16 %v1421
        %v1646 = vunpack.c.l.b16 %v1422
        %v1647 = vunpack.c.l.b16 %v1423
        %v1648 = vunpack.c.l.b16 %v1424
        %v1649 = vunpack.c.l.b16 %v1425
        %v1650 = vunpack.c.l.b16 %v1426
        %v1651 = vunpack.c.l.b16 %v1427
        %v1652 = vunpack.c.l.b16 %v1428
        %v1653 = vunpack.c.l.b16 %v1429
        %v1654 = vunpack.c.l.b16 %v1430
        %v1655 = vunpack.c.l.b16 %v1431
        %v1656 = vunpack.c.l.b16 %v1432
        %v1657 = vunpack.c.l.b16 %v1433
        %v1658 = vunpack.c.l.b16 %v1434
        %v1659 = vunpack.c.l.b16 %v1435
        %v1660 = vunpack.c.l.b16 %v1436
        %v1661 = vunpack.c.l.b16 %v1437
        %v1662 = vunpack.c.l.b16 %v1438
        %v1663 = vunpack.c.l.b16 %v1439
        %v1664 = vunpack.c.l.b16 %v1440
        %v1665 = vunpack.c.l.b16 %v1441
        %v1666 = vpack.c.b16 %v1555, %v1554
        %v1667 = vpack.c.b16 %v1557, %v1556
        %v1668 = vpack.c.b16 %v1559, %v1558
        %v1669 = vpack.c.b16 %v1561, %v1560
        %v1670 = vpack.c.b16 %v1563, %v1562
        %v1671 = vpack.c.b16 %v1565, %v1564
        %v1672 = vpack.c.b16 %v1567, %v1566
        %v1673 = vpack.c.b16 %v1569, %v1568
        %v1674 = vpack.c.b16 %v1571, %v1570
        %v1675 = vpack.c.b16 %v1573, %v1572
        %v1676 = vpack.c.b16 %v1575, %v1574
        %v1677 = vpack.c.b16 %v1577, %v1576
        %v1678 = vpack.c.b16 %v1579, %v1578
        %v1679 = vpack.c.b16 %v1581, %v1580
        %v1680 = vpack.c.b16 %v1583, %v1582
        %v1681 = vpack.c.b16 %v1585, %v1584
        %v1682 = vpack.c.b16 %v1587, %v1586
        %v1683 = vpack.c.b16 %v1589, %v1588
        %v1684 = vpack.c.b16 %v1591, %v1590
        %v1685 = vpack.c.b16 %v1593, %v1592
        %v1686 = vpack.c.b16 %v1595, %v1594
        %v1687 = vpack.c.b16 %v1597, %v1596
        %v1688 = vpack.c.b16 %v1599, %v1598
        %v1689 = vpack.c.b16 %v1601, %v1600
        %v1690 = vpack.c.b16 %v1603, %v1602
        %v1691 = vpack.c.b16 %v1605, %v1604
        %v1692 = vpack.c.b16 %v1607, %v1606
        %v1693 = vpack.c.b16 %v1609, %v1608
        %v1694 = vpack.c.b16 %v1611, %v1610
        %v1695 = vpack.c.b16 %v1613, %v1612
        %v1696 = vpack.c.b16 %v1615, %v1614
        %v1697 = vpack.c.b16 %v1617, %v1616
        %v1698 = vpack.c.b16 %v1619, %v1618
        %v1699 = vpack.c.b16 %v1621, %v1620
        %v1700 = vpack.c.b16 %v1623, %v1622
        %v1701 = vpack.c.b16 %v1625, %v1624
        %v1702 = vpack.c.b16 %v1627, %v1626
        %v1703 = vpack.c.b16 %v1629, %v1628
        %v1704 = vpack.c.b16 %v1631, %v1630
        %v1705 = vpack.c.b16 %v1633, %v1632
        %v1706 = vpack.c.b16 %v1635, %v1634
        %v1707 = vpack.c.b16 %v1637, %v1636
        %v1708 = vpack.c.b16 %v1639, %v1638
        %v1709 = vpack.c.b16 %v1641, %v1640
        %v1710 = vpack.c.b16 %v1643, %v1642
        %v1711 = vpack.c.b16 %v1645, %v1644
        %v1712 = vpack.c.b16 %v1647, %v1646
        %v1713 = vpack.c.b16 %v1649, %v1648
        %v1714 = vpack.c.b16 %v1651, %v1650
        %v1715 = vpack.c.b16 %v1653, %v1652
        %v1716 = vpack.c.b16 %v1655, %v1654
        %v1717 = vpack.c.b16 %v1657, %v1656
        %v1718 = vpack.c.b16 %v1659, %v1658
        %v1719 = vpack.c.b16 %v1661, %v1660
        %v1720 = vpack.c.b16 %v1663, %v1662
        %v1721 = vpack.c.b16 %v1665, %v1664
        %1778 = vmatprep.subr.bf16.mxu0 0
        %1779 = vmatpush1.bf16.msra.mxu0 %v1673
        %1780 = vmatprep.subr.bf16.mxu0 0
        %1781 = vmatpush1.bf16.msra.mxu0 %v1672
        %1782 = vmatprep.subr.bf16.mxu0 0
        %1783 = vmatpush1.bf16.msra.mxu0 %v1671
        %1784 = vmatprep.subr.bf16.mxu0 0
        %1785 = vmatpush1.bf16.msra.mxu0 %v1670
        %1786 = vmatprep.subr.bf16.mxu0 0
        %1787 = vmatpush1.bf16.msra.mxu0 %v1669
        %1788 = vmatprep.subr.bf16.mxu0 0
        %1789 = vmatpush1.bf16.msra.mxu0 %v1668
        %1790 = vmatprep.subr.bf16.mxu0 0
        %1791 = vmatpush1.bf16.msra.mxu0 %v1667
        %1792 = vmatprep.subr.bf16.mxu0 0
        %1793 = vmatpush1.bf16.msra.mxu0 %v1666
        %1794 = vmatprep.subr.bf16.mxu0 0
        %1795 = vmatpush2.bf16.msra.mxu0 %v1681
        %1796 = vmatprep.subr.bf16.mxu0 0
        %1797 = vmatpush2.bf16.msra.mxu0 %v1680
        %1798 = vmatprep.subr.bf16.mxu0 0
        %1799 = vmatpush2.bf16.msra.mxu0 %v1679
        %1800 = vmatprep.subr.bf16.mxu0 0
        %1801 = vmatpush2.bf16.msra.mxu0 %v1678
        %1802 = vmatprep.subr.bf16.mxu0 0
        %1803 = vmatpush2.bf16.msra.mxu0 %v1677
        %1804 = vmatprep.subr.bf16.mxu0 0
        %1805 = vmatpush2.bf16.msra.mxu0 %v1676
        %1806 = vmatprep.subr.bf16.mxu0 0
        %1807 = vmatpush2.bf16.msra.mxu0 %v1675
        %1808 = vmatprep.subr.bf16.mxu0 0
        %1809 = vmatpush2.bf16.msra.mxu0 %v1674
        %1810 = vmatprep.mubr.bf16.mxu0 %v1275
        %1811 = vmatmul.mubr.bf16.gmra.mxu0 %v1274
        %v1812 = vpop.f32.mrf.mxu0
        %v1813 = vadd.f32 0.0, %v1812
        %v1814 = vpop.f32.mrf.mxu0
        %v1815 = vpop.f32.mrf.mxu0
        %v1816 = vadd.f32 0.0, %v1815
        %v1817 = vpop.f32.mrf.mxu0
        %1818 = vmatprep.mubr.bf16.mxu0 %v1282
        %1819 = vmatmul.mubr.bf16.gmra.mxu0 %v1281
        %v1820 = vpop.f32.mrf.mxu0
        %v1821 = vadd.f32 0.0, %v1820
        %v1822 = vpop.f32.mrf.mxu0
        %v1823 = vpop.f32.mrf.mxu0
        %v1824 = vadd.f32 0.0, %v1823
        %v1825 = vpop.f32.mrf.mxu0
        %1826 = vmatprep.mubr.bf16.mxu0 %v1289
        %1827 = vmatmul.mubr.bf16.gmra.mxu0 %v1288
        %v1828 = vpop.f32.mrf.mxu0
        %v1829 = vadd.f32 0.0, %v1828
        %v1830 = vpop.f32.mrf.mxu0
        %v1831 = vpop.f32.mrf.mxu0
        %v1832 = vadd.f32 0.0, %v1831
        %v1833 = vpop.f32.mrf.mxu0
        %1834 = vmatprep.mubr.bf16.mxu0 %v1296
        %1835 = vmatmul.mubr.bf16.gmra.mxu0 %v1295
        %v1836 = vpop.f32.mrf.mxu0
        %v1837 = vadd.f32 0.0, %v1836
        %v1838 = vpop.f32.mrf.mxu0
        %v1839 = vpop.f32.mrf.mxu0
        %v1840 = vadd.f32 0.0, %v1839
        %v1841 = vpop.f32.mrf.mxu0
        %1842 = vmatprep.mubr.bf16.mxu0 %v1303
        %1843 = vmatmul.mubr.bf16.gmra.mxu0 %v1302
        %v1844 = vpop.f32.mrf.mxu0
        %v1845 = vadd.f32 0.0, %v1844
        %v1846 = vpop.f32.mrf.mxu0
        %v1847 = vpop.f32.mrf.mxu0
        %v1848 = vadd.f32 0.0, %v1847
        %v1849 = vpop.f32.mrf.mxu0
        %1850 = vmatprep.mubr.bf16.mxu0 %v1310
        %1851 = vmatmul.mubr.bf16.gmra.mxu0 %v1309
        %v1852 = vpop.f32.mrf.mxu0
        %v1853 = vadd.f32 0.0, %v1852
        %v1854 = vpop.f32.mrf.mxu0
        %v1855 = vpop.f32.mrf.mxu0
        %v1856 = vadd.f32 0.0, %v1855
        %v1857 = vpop.f32.mrf.mxu0
        %1858 = vmatprep.mubr.bf16.mxu0 %v1317
        %1859 = vmatmul.mubr.bf16.gmra.mxu0 %v1316
        %v1860 = vpop.f32.mrf.mxu0
        %v1861 = vadd.f32 0.0, %v1860
        %v1862 = vpop.f32.mrf.mxu0
        %v1863 = vpop.f32.mrf.mxu0
        %v1864 = vadd.f32 0.0, %v1863
        %v1865 = vpop.f32.mrf.mxu0
        %1866 = vmatprep.mubr.bf16.mxu0 %v1324
        %1867 = vmatmul.mubr.bf16.gmra.mxu0 %v1323
        %v1868 = vpop.f32.mrf.mxu0
        %v1869 = vadd.f32 0.0, %v1868
        %v1870 = vpop.f32.mrf.mxu0
        %v1871 = vpop.f32.mrf.mxu0
        %v1872 = vadd.f32 0.0, %v1871
        %v1873 = vpop.f32.mrf.mxu0
        %1874 = vdwg.mxu0
        %1875 = vmatprep.subr.bf16.mxu0 0
        %1876 = vmatpush1.bf16.msra.mxu0 %v1689
        %1877 = vmatprep.subr.bf16.mxu0 0
        %1878 = vmatpush1.bf16.msra.mxu0 %v1688
        %1879 = vmatprep.subr.bf16.mxu0 0
        %1880 = vmatpush1.bf16.msra.mxu0 %v1687
        %1881 = vmatprep.subr.bf16.mxu0 0
        %1882 = vmatpush1.bf16.msra.mxu0 %v1686
        %1883 = vmatprep.subr.bf16.mxu0 0
        %1884 = vmatpush1.bf16.msra.mxu0 %v1685
        %1885 = vmatprep.subr.bf16.mxu0 0
        %1886 = vmatpush1.bf16.msra.mxu0 %v1684
        %1887 = vmatprep.subr.bf16.mxu0 0
        %1888 = vmatpush1.bf16.msra.mxu0 %v1683
        %1889 = vmatprep.subr.bf16.mxu0 0
        %1890 = vmatpush1.bf16.msra.mxu0 %v1682
        %1891 = vmatprep.subr.bf16.mxu0 0
        %1892 = vmatpush2.bf16.msra.mxu0 %v1697
        %1893 = vmatprep.subr.bf16.mxu0 0
        %1894 = vmatpush2.bf16.msra.mxu0 %v1696
        %1895 = vmatprep.subr.bf16.mxu0 0
        %1896 = vmatpush2.bf16.msra.mxu0 %v1695
        %1897 = vmatprep.subr.bf16.mxu0 0
        %1898 = vmatpush2.bf16.msra.mxu0 %v1694
        %1899 = vmatprep.subr.bf16.mxu0 0
        %1900 = vmatpush2.bf16.msra.mxu0 %v1693
        %1901 = vmatprep.subr.bf16.mxu0 0
        %1902 = vmatpush2.bf16.msra.mxu0 %v1692
        %1903 = vmatprep.subr.bf16.mxu0 0
        %1904 = vmatpush2.bf16.msra.mxu0 %v1691
        %1905 = vmatprep.subr.bf16.mxu0 0
        %1906 = vmatpush2.bf16.msra.mxu0 %v1690
        %1907 = vmatprep.mubr.bf16.mxu0 %v1277
        %1908 = vmatmul.mubr.bf16.gmra.mxu0 %v1276
        %v1909 = vpop.f32.mrf.mxu0
        %v1910 = vadd.f32 %v1813, %v1909
        %v1911 = vpop.f32.mrf.mxu0
        %v1912 = vpop.f32.mrf.mxu0
        %v1913 = vadd.f32 %v1816, %v1912
        %v1914 = vpop.f32.mrf.mxu0
        %1915 = vmatprep.mubr.bf16.mxu0 %v1284
        %1916 = vmatmul.mubr.bf16.gmra.mxu0 %v1283
        %v1917 = vpop.f32.mrf.mxu0
        %v1918 = vadd.f32 %v1821, %v1917
        %v1919 = vpop.f32.mrf.mxu0
        %v1920 = vpop.f32.mrf.mxu0
        %v1921 = vadd.f32 %v1824, %v1920
        %v1922 = vpop.f32.mrf.mxu0
        %1923 = vmatprep.mubr.bf16.mxu0 %v1291
        %1924 = vmatmul.mubr.bf16.gmra.mxu0 %v1290
        %v1925 = vpop.f32.mrf.mxu0
        %v1926 = vadd.f32 %v1829, %v1925
        %v1927 = vpop.f32.mrf.mxu0
        %v1928 = vpop.f32.mrf.mxu0
        %v1929 = vadd.f32 %v1832, %v1928
        %v1930 = vpop.f32.mrf.mxu0
        %1931 = vmatprep.mubr.bf16.mxu0 %v1298
        %1932 = vmatmul.mubr.bf16.gmra.mxu0 %v1297
        %v1933 = vpop.f32.mrf.mxu0
        %v1934 = vadd.f32 %v1837, %v1933
        %v1935 = vpop.f32.mrf.mxu0
        %v1936 = vpop.f32.mrf.mxu0
        %v1937 = vadd.f32 %v1840, %v1936
        %v1938 = vpop.f32.mrf.mxu0
        %1939 = vmatprep.mubr.bf16.mxu0 %v1305
        %1940 = vmatmul.mubr.bf16.gmra.mxu0 %v1304
        %v1941 = vpop.f32.mrf.mxu0
        %v1942 = vadd.f32 %v1845, %v1941
        %v1943 = vpop.f32.mrf.mxu0
        %v1944 = vpop.f32.mrf.mxu0
        %v1945 = vadd.f32 %v1848, %v1944
        %v1946 = vpop.f32.mrf.mxu0
        %1947 = vmatprep.mubr.bf16.mxu0 %v1312
        %1948 = vmatmul.mubr.bf16.gmra.mxu0 %v1311
        %v1949 = vpop.f32.mrf.mxu0
        %v1950 = vadd.f32 %v1853, %v1949
        %v1951 = vpop.f32.mrf.mxu0
        %v1952 = vpop.f32.mrf.mxu0
        %v1953 = vadd.f32 %v1856, %v1952
        %v1954 = vpop.f32.mrf.mxu0
        %1955 = vmatprep.mubr.bf16.mxu0 %v1319
        %1956 = vmatmul.mubr.bf16.gmra.mxu0 %v1318
        %v1957 = vpop.f32.mrf.mxu0
        %v1958 = vadd.f32 %v1861, %v1957
        %v1959 = vpop.f32.mrf.mxu0
        %v1960 = vpop.f32.mrf.mxu0
        %v1961 = vadd.f32 %v1864, %v1960
        %v1962 = vpop.f32.mrf.mxu0
        %1963 = vmatprep.mubr.bf16.mxu0 %v1326
        %1964 = vmatmul.mubr.bf16.gmra.mxu0 %v1325
        %v1965 = vpop.f32.mrf.mxu0
        %v1966 = vadd.f32 %v1869, %v1965
        %v1967 = vpop.f32.mrf.mxu0
        %v1968 = vpop.f32.mrf.mxu0
        %v1969 = vadd.f32 %v1872, %v1968
        %v1970 = vpop.f32.mrf.mxu0
        %1971 = vdwg.mxu0
        %1972 = vmatprep.subr.bf16.mxu0 0
        %1973 = vmatpush1.bf16.msra.mxu0 %v1705
        %1974 = vmatprep.subr.bf16.mxu0 0
        %1975 = vmatpush1.bf16.msra.mxu0 %v1704
        %1976 = vmatprep.subr.bf16.mxu0 0
        %1977 = vmatpush1.bf16.msra.mxu0 %v1703
        %1978 = vmatprep.subr.bf16.mxu0 0
        %1979 = vmatpush1.bf16.msra.mxu0 %v1702
        %1980 = vmatprep.subr.bf16.mxu0 0
        %1981 = vmatpush1.bf16.msra.mxu0 %v1701
        %1982 = vmatprep.subr.bf16.mxu0 0
        %1983 = vmatpush1.bf16.msra.mxu0 %v1700
        %1984 = vmatprep.subr.bf16.mxu0 0
        %1985 = vmatpush1.bf16.msra.mxu0 %v1699
        %1986 = vmatprep.subr.bf16.mxu0 0
        %1987 = vmatpush1.bf16.msra.mxu0 %v1698
        %1988 = vmatprep.subr.bf16.mxu0 0
        %1989 = vmatpush2.bf16.msra.mxu0 %v1713
        %1990 = vmatprep.subr.bf16.mxu0 0
        %1991 = vmatpush2.bf16.msra.mxu0 %v1712
        %1992 = vmatprep.subr.bf16.mxu0 0
        %1993 = vmatpush2.bf16.msra.mxu0 %v1711
        %1994 = vmatprep.subr.bf16.mxu0 0
        %1995 = vmatpush2.bf16.msra.mxu0 %v1710
        %1996 = vmatprep.subr.bf16.mxu0 0
        %1997 = vmatpush2.bf16.msra.mxu0 %v1709
        %1998 = vmatprep.subr.bf16.mxu0 0
        %1999 = vmatpush2.bf16.msra.mxu0 %v1708
        %2000 = vmatprep.subr.bf16.mxu0 0
        %2001 = vmatpush2.bf16.msra.mxu0 %v1707
        %2002 = vmatprep.subr.bf16.mxu0 0
        %2003 = vmatpush2.bf16.msra.mxu0 %v1706
        %2004 = vmatprep.mubr.bf16.mxu0 %v1279
        %2005 = vmatmul.mubr.bf16.gmra.mxu0 %v1278
        %v2006 = vpop.f32.mrf.mxu0
        %v2007 = vadd.f32 %v1910, %v2006
        %v2008 = vpop.f32.mrf.mxu0
        %v2009 = vpop.f32.mrf.mxu0
        %v2010 = vadd.f32 %v1913, %v2009
        %v2011 = vpop.f32.mrf.mxu0
        %2012 = vmatprep.mubr.bf16.mxu0 %v1286
        %2013 = vmatmul.mubr.bf16.gmra.mxu0 %v1285
        %v2014 = vpop.f32.mrf.mxu0
        %v2015 = vadd.f32 %v1918, %v2014
        %v2016 = vpop.f32.mrf.mxu0
        %v2017 = vpop.f32.mrf.mxu0
        %v2018 = vadd.f32 %v1921, %v2017
        %v2019 = vpop.f32.mrf.mxu0
        %2020 = vmatprep.mubr.bf16.mxu0 %v1293
        %2021 = vmatmul.mubr.bf16.gmra.mxu0 %v1292
        %v2022 = vpop.f32.mrf.mxu0
        %v2023 = vadd.f32 %v1926, %v2022
        %v2024 = vpop.f32.mrf.mxu0
        %v2025 = vpop.f32.mrf.mxu0
        %v2026 = vadd.f32 %v1929, %v2025
        %v2027 = vpop.f32.mrf.mxu0
        %2028 = vmatprep.mubr.bf16.mxu0 %v1300
        %2029 = vmatmul.mubr.bf16.gmra.mxu0 %v1299
        %v2030 = vpop.f32.mrf.mxu0
        %v2031 = vadd.f32 %v1934, %v2030
        %v2032 = vpop.f32.mrf.mxu0
        %v2033 = vpop.f32.mrf.mxu0
        %v2034 = vadd.f32 %v1937, %v2033
        %v2035 = vpop.f32.mrf.mxu0
        %2036 = vmatprep.mubr.bf16.mxu0 %v1307
        %2037 = vmatmul.mubr.bf16.gmra.mxu0 %v1306
        %v2038 = vpop.f32.mrf.mxu0
        %v2039 = vadd.f32 %v1942, %v2038
        %v2040 = vpop.f32.mrf.mxu0
        %v2041 = vpop.f32.mrf.mxu0
        %v2042 = vadd.f32 %v1945, %v2041
        %v2043 = vpop.f32.mrf.mxu0
        %2044 = vmatprep.mubr.bf16.mxu0 %v1314
        %2045 = vmatmul.mubr.bf16.gmra.mxu0 %v1313
        %v2046 = vpop.f32.mrf.mxu0
        %v2047 = vadd.f32 %v1950, %v2046
        %v2048 = vpop.f32.mrf.mxu0
        %v2049 = vpop.f32.mrf.mxu0
        %v2050 = vadd.f32 %v1953, %v2049
        %v2051 = vpop.f32.mrf.mxu0
        %2052 = vmatprep.mubr.bf16.mxu0 %v1321
        %2053 = vmatmul.mubr.bf16.gmra.mxu0 %v1320
        %v2054 = vpop.f32.mrf.mxu0
        %v2055 = vadd.f32 %v1958, %v2054
        %v2056 = vpop.f32.mrf.mxu0
        %v2057 = vpop.f32.mrf.mxu0
        %v2058 = vadd.f32 %v1961, %v2057
        %v2059 = vpop.f32.mrf.mxu0
        %2060 = vmatprep.mubr.bf16.mxu0 %v1328
        %2061 = vmatmul.mubr.bf16.gmra.mxu0 %v1327
        %v2062 = vpop.f32.mrf.mxu0
        %v2063 = vadd.f32 %v1966, %v2062
        %v2064 = vpop.f32.mrf.mxu0
        %v2065 = vpop.f32.mrf.mxu0
        %v2066 = vadd.f32 %v1969, %v2065
        %v2067 = vpop.f32.mrf.mxu0
        %2068 = vdwg.mxu0
        %2069 = vmatprep.subr.bf16.mxu0 0
        %2070 = vmatpush1.bf16.msra.mxu0 %v1721
        %2071 = vmatprep.subr.bf16.mxu0 0
        %2072 = vmatpush1.bf16.msra.mxu0 %v1720
        %2073 = vmatprep.subr.bf16.mxu0 0
        %2074 = vmatpush1.bf16.msra.mxu0 %v1719
        %2075 = vmatprep.subr.bf16.mxu0 0
        %2076 = vmatpush1.bf16.msra.mxu0 %v1718
        %2077 = vmatprep.subr.bf16.mxu0 0
        %2078 = vmatpush1.bf16.msra.mxu0 %v1717
        %2079 = vmatprep.subr.bf16.mxu0 0
        %2080 = vmatpush1.bf16.msra.mxu0 %v1716
        %2081 = vmatprep.subr.bf16.mxu0 0
        %2082 = vmatpush1.bf16.msra.mxu0 %v1715
        %2083 = vmatprep.subr.bf16.mxu0 0
        %2084 = vmatpush1.bf16.msra.mxu0 %v1714
        %2085 = vmatprep.subr.bf16.mxu0 0
        %2086 = vmatpush2.bf16.msra.mxu0 0
        %2087 = vmatprep.subr.bf16.mxu0 0
        %2088 = vmatpush2.bf16.msra.mxu0 0
        %2089 = vmatprep.subr.bf16.mxu0 0
        %2090 = vmatpush2.bf16.msra.mxu0 0
        %2091 = vmatprep.subr.bf16.mxu0 0
        %2092 = vmatpush2.bf16.msra.mxu0 0
        %2093 = vmatprep.subr.bf16.mxu0 0
        %2094 = vmatpush2.bf16.msra.mxu0 0
        %2095 = vmatprep.subr.bf16.mxu0 0
        %2096 = vmatpush2.bf16.msra.mxu0 0
        %2097 = vmatprep.subr.bf16.mxu0 0
        %2098 = vmatpush2.bf16.msra.mxu0 0
        %2099 = vmatprep.subr.bf16.mxu0 0
        %2100 = vmatpush2.bf16.msra.mxu0 0
        %2101 = vmatprep.mubr.bf16.mxu0 0
        %2102 = vmatmul.mubr.bf16.gmra.mxu0 %v1280
        %v2103 = vpop.f32.mrf.mxu0
        %v2104 = vadd.f32 %v2007, %v2103
        %v2105 = vpop.f32.mrf.mxu0
        %v2106 = vpop.f32.mrf.mxu0
        %v2107 = vadd.f32 %v2010, %v2106
        %v2108 = vpop.f32.mrf.mxu0
        %2109 = vmatprep.mubr.bf16.mxu0 0
        %2110 = vmatmul.mubr.bf16.gmra.mxu0 %v1287
        %v2111 = vpop.f32.mrf.mxu0
        %v2112 = vadd.f32 %v2015, %v2111
        %v2113 = vpop.f32.mrf.mxu0
        %v2114 = vpop.f32.mrf.mxu0
        %v2115 = vadd.f32 %v2018, %v2114
        %v2116 = vpop.f32.mrf.mxu0
        %2117 = vmatprep.mubr.bf16.mxu0 0
        %2118 = vmatmul.mubr.bf16.gmra.mxu0 %v1294
        %v2119 = vpop.f32.mrf.mxu0
        %v2120 = vadd.f32 %v2023, %v2119
        %v2121 = vpop.f32.mrf.mxu0
        %v2122 = vpop.f32.mrf.mxu0
        %v2123 = vadd.f32 %v2026, %v2122
        %v2124 = vpop.f32.mrf.mxu0
        %2125 = vmatprep.mubr.bf16.mxu0 0
        %2126 = vmatmul.mubr.bf16.gmra.mxu0 %v1301
        %v2127 = vpop.f32.mrf.mxu0
        %v2128 = vadd.f32 %v2031, %v2127
        %v2129 = vpop.f32.mrf.mxu0
        %v2130 = vpop.f32.mrf.mxu0
        %v2131 = vadd.f32 %v2034, %v2130
        %v2132 = vpop.f32.mrf.mxu0
        %2133 = vmatprep.mubr.bf16.mxu0 0
        %2134 = vmatmul.mubr.bf16.gmra.mxu0 %v1308
        %v2135 = vpop.f32.mrf.mxu0
        %v2136 = vadd.f32 %v2039, %v2135
        %v2137 = vpop.f32.mrf.mxu0
        %v2138 = vpop.f32.mrf.mxu0
        %v2139 = vadd.f32 %v2042, %v2138
        %v2140 = vpop.f32.mrf.mxu0
        %2141 = vmatprep.mubr.bf16.mxu0 0
        %2142 = vmatmul.mubr.bf16.gmra.mxu0 %v1315
        %v2143 = vpop.f32.mrf.mxu0
        %v2144 = vadd.f32 %v2047, %v2143
        %v2145 = vpop.f32.mrf.mxu0
        %v2146 = vpop.f32.mrf.mxu0
        %v2147 = vadd.f32 %v2050, %v2146
        %v2148 = vpop.f32.mrf.mxu0
        %2149 = vmatprep.mubr.bf16.mxu0 0
        %2150 = vmatmul.mubr.bf16.gmra.mxu0 %v1322
        %v2151 = vpop.f32.mrf.mxu0
        %v2152 = vadd.f32 %v2055, %v2151
        %v2153 = vpop.f32.mrf.mxu0
        %v2154 = vpop.f32.mrf.mxu0
        %v2155 = vadd.f32 %v2058, %v2154
        %v2156 = vpop.f32.mrf.mxu0
        %2157 = vmatprep.mubr.bf16.mxu0 0
        %2158 = vmatmul.mubr.bf16.gmra.mxu0 %v1329
        %v2159 = vpop.f32.mrf.mxu0
        %v2160 = vadd.f32 %v2063, %v2159
        %v2161 = vpop.f32.mrf.mxu0
        %v2162 = vpop.f32.mrf.mxu0
        %v2163 = vadd.f32 %v2066, %v2162
        %v2164 = vpop.f32.mrf.mxu0
        %2165 = vdwg.mxu0
        %v2166 = vld [vmem:[#allocation11] sm:$0x1]
        %v2168 = vlaneseq
        %v2169 = vshrl.u32 %v2168, 7
        %v2170 = vsub.s32 0, %v2169
        %v2171 = vrot.slane %v2166, %v2170
        %v2173 = vmul.f32 %v2104, %v2171
        %v2174 = vmul.f32 %v2107, %v2171
        %v2175 = vmul.f32 %v2112, %v2171
        %v2176 = vmul.f32 %v2115, %v2171
        %v2177 = vmul.f32 %v2120, %v2171
        %v2178 = vmul.f32 %v2123, %v2171
        %v2179 = vmul.f32 %v2128, %v2171
        %v2180 = vmul.f32 %v2131, %v2171
        %v2181 = vmul.f32 %v2136, %v2171
        %v2182 = vmul.f32 %v2139, %v2171
        %v2183 = vmul.f32 %v2144, %v2171
        %v2184 = vmul.f32 %v2147, %v2171
        %v2185 = vmul.f32 %v2152, %v2171
        %v2186 = vmul.f32 %v2155, %v2171
        %v2187 = vmul.f32 %v2160, %v2171
        %v2188 = vmul.f32 %v2163, %v2171
        %v2189 = vld [vmem:[%s6] sm:$0x1]
        %v2191 = vlaneseq
        %v2192 = vshrl.u32 %v2191, 7
        %v2193 = vsub.s32 0, %v2192
        %v2194 = vrot.slane %v2189, %v2193
        %v2196 = vadd.f32 %v2173, %v2194
        %v2197 = vadd.f32 %v2174, %v2194
        %v2198 = vadd.f32 %v2175, %v2194
        %v2199 = vadd.f32 %v2176, %v2194
        %v2200 = vadd.f32 %v2177, %v2194
        %v2201 = vadd.f32 %v2178, %v2194
        %v2202 = vadd.f32 %v2179, %v2194
        %v2203 = vadd.f32 %v2180, %v2194
        %v2204 = vadd.f32 %v2181, %v2194
        %v2205 = vadd.f32 %v2182, %v2194
        %v2206 = vadd.f32 %v2183, %v2194
        %v2207 = vadd.f32 %v2184, %v2194
        %v2208 = vadd.f32 %v2185, %v2194
        %v2209 = vadd.f32 %v2186, %v2194
        %v2210 = vadd.f32 %v2187, %v2194
        %v2211 = vadd.f32 %v2188, %v2194
        %v2212 = vmax.f32 %v2196, 0.0
        %v2213 = vmax.f32 %v2197, 0.0
        %v2214 = vmax.f32 %v2198, 0.0
        %v2215 = vmax.f32 %v2199, 0.0
        %v2216 = vmax.f32 %v2200, 0.0
        %v2217 = vmax.f32 %v2201, 0.0
        %v2218 = vmax.f32 %v2202, 0.0
        %v2219 = vmax.f32 %v2203, 0.0
        %v2220 = vmax.f32 %v2204, 0.0
        %v2221 = vmax.f32 %v2205, 0.0
        %v2222 = vmax.f32 %v2206, 0.0
        %v2223 = vmax.f32 %v2207, 0.0
        %v2224 = vmax.f32 %v2208, 0.0
        %v2225 = vmax.f32 %v2209, 0.0
        %v2226 = vmax.f32 %v2210, 0.0
        %v2227 = vmax.f32 %v2211, 0.0
        %v2228 = vpack.c.bf16 %v2213, %v2212
        %v2229 = vpack.c.bf16 %v2215, %v2214
        %v2230 = vpack.c.bf16 %v2217, %v2216
        %v2231 = vpack.c.bf16 %v2219, %v2218
        %v2232 = vpack.c.bf16 %v2221, %v2220
        %v2233 = vpack.c.bf16 %v2223, %v2222
        %v2234 = vpack.c.bf16 %v2225, %v2224
        %v2235 = vpack.c.bf16 %v2227, %v2226
        %v2236 = vld [vmem:[#allocation12] sm:$0xff]
        %v2237 = vld [vmem:[#allocation12 + $0x8] sm:$0xff]
        %v2238 = vld [vmem:[#allocation12 + $0x10] sm:$0xff]
        %v2239 = vld [vmem:[#allocation12 + $0x18] sm:$0xff]
        %v2240 = vld [vmem:[#allocation12 + $0x20] sm:$0xff]
        %v2241 = vld [vmem:[#allocation12 + $0x28] sm:$0xff]
        %v2242 = vld [vmem:[#allocation12 + $0x30] sm:$0xff]
        %v2243 = vld [vmem:[#allocation12 + $0x38] sm:$0xff]
        %v2244 = vld [vmem:[#allocation12 + $0x40] sm:$0xff]
        %v2245 = vld [vmem:[#allocation12 + $0x48] sm:$0xff]
        %v2246 = vld [vmem:[#allocation12 + $0x50] sm:$0xff]
        %v2247 = vld [vmem:[#allocation12 + $0x58] sm:$0xff]
        %v2248 = vld [vmem:[#allocation12 + $0x60] sm:$0xff]
        %v2249 = vld [vmem:[#allocation12 + $0x68] sm:$0xff]
        %v2250 = vld [vmem:[#allocation12 + $0x70] sm:$0xff]
        %v2251 = vld [vmem:[#allocation12 + $0x78] sm:$0xff]
        %v2252 = vld [vmem:[#allocation12 + $0x80] sm:$0xff]
        %v2253 = vld [vmem:[#allocation12 + $0x88] sm:$0xff]
        %v2254 = vld [vmem:[#allocation12 + $0x90] sm:$0xff]
        %v2255 = vld [vmem:[#allocation12 + $0x98] sm:$0xff]
        %v2256 = vld [vmem:[#allocation12 + $0xa0] sm:$0xff]
        %v2257 = vld [vmem:[#allocation12 + $0xa8] sm:$0xff]
        %v2258 = vld [vmem:[#allocation12 + $0xb0] sm:$0xff]
        %v2259 = vld [vmem:[#allocation12 + $0xb8] sm:$0xff]
        %v2260 = vld [vmem:[#allocation12 + $0xc0] sm:$0xff]
        %v2261 = vld [vmem:[#allocation12 + $0xc8] sm:$0xff]
        %v2262 = vld [vmem:[#allocation12 + $0xd0] sm:$0xff]
        %v2263 = vld [vmem:[#allocation12 + $0xd8] sm:$0xff]
        %v2264 = vld [vmem:[#allocation12 + $0xe0] sm:$0xff]
        %v2265 = vld [vmem:[#allocation12 + $0xe8] sm:$0xff]
        %v2266 = vld [vmem:[#allocation12 + $0xf0] sm:$0xff]
        %v2267 = vld [vmem:[#allocation12 + $0xf8] sm:$0xff]
        %v2300 = vunpack.c.l.b16 %v2236
        %v2301 = vunpack.c.h.b16 %v2236
        %v2302 = vunpack.c.l.b16 %v2237
        %v2303 = vunpack.c.h.b16 %v2237
        %v2304 = vunpack.c.l.b16 %v2238
        %v2305 = vunpack.c.h.b16 %v2238
        %v2306 = vunpack.c.l.b16 %v2239
        %v2307 = vunpack.c.h.b16 %v2239
        %v2308 = vunpack.c.l.b16 %v2240
        %v2309 = vunpack.c.h.b16 %v2240
        %v2310 = vunpack.c.l.b16 %v2241
        %v2311 = vunpack.c.h.b16 %v2241
        %v2312 = vunpack.c.l.b16 %v2242
        %v2313 = vunpack.c.h.b16 %v2242
        %v2314 = vunpack.c.l.b16 %v2243
        %v2315 = vunpack.c.h.b16 %v2243
        %v2316 = vunpack.c.l.b16 %v2244
        %v2317 = vunpack.c.h.b16 %v2244
        %v2318 = vunpack.c.l.b16 %v2245
        %v2319 = vunpack.c.h.b16 %v2245
        %v2320 = vunpack.c.l.b16 %v2246
        %v2321 = vunpack.c.h.b16 %v2246
        %v2322 = vunpack.c.l.b16 %v2247
        %v2323 = vunpack.c.h.b16 %v2247
        %v2324 = vunpack.c.l.b16 %v2248
        %v2325 = vunpack.c.h.b16 %v2248
        %v2326 = vunpack.c.l.b16 %v2249
        %v2327 = vunpack.c.h.b16 %v2249
        %v2328 = vunpack.c.l.b16 %v2250
        %v2329 = vunpack.c.h.b16 %v2250
        %v2330 = vunpack.c.l.b16 %v2251
        %v2331 = vunpack.c.h.b16 %v2251
        %v2332 = vunpack.c.l.b16 %v2252
        %v2333 = vunpack.c.h.b16 %v2252
        %v2334 = vunpack.c.l.b16 %v2253
        %v2335 = vunpack.c.h.b16 %v2253
        %v2336 = vunpack.c.l.b16 %v2254
        %v2337 = vunpack.c.h.b16 %v2254
        %v2338 = vunpack.c.l.b16 %v2255
        %v2339 = vunpack.c.h.b16 %v2255
        %v2340 = vunpack.c.l.b16 %v2256
        %v2341 = vunpack.c.h.b16 %v2256
        %v2342 = vunpack.c.l.b16 %v2257
        %v2343 = vunpack.c.h.b16 %v2257
        %v2344 = vunpack.c.l.b16 %v2258
        %v2345 = vunpack.c.h.b16 %v2258
        %v2346 = vunpack.c.l.b16 %v2259
        %v2347 = vunpack.c.h.b16 %v2259
        %v2348 = vunpack.c.l.b16 %v2260
        %v2349 = vunpack.c.h.b16 %v2260
        %v2350 = vunpack.c.l.b16 %v2261
        %v2351 = vunpack.c.h.b16 %v2261
        %v2352 = vunpack.c.l.b16 %v2262
        %v2353 = vunpack.c.h.b16 %v2262
        %v2354 = vunpack.c.l.b16 %v2263
        %v2355 = vunpack.c.h.b16 %v2263
        %v2356 = vunpack.c.l.b16 %v2264
        %v2357 = vunpack.c.h.b16 %v2264
        %v2358 = vunpack.c.l.b16 %v2265
        %v2359 = vunpack.c.h.b16 %v2265
        %v2360 = vunpack.c.l.b16 %v2266
        %v2361 = vunpack.c.h.b16 %v2266
        %v2362 = vunpack.c.l.b16 %v2267
        %v2363 = vunpack.c.h.b16 %v2267
        %v2364 = vpack.c.b16 %v2304, %v2300
        %v2365 = vpack.c.b16 %v2305, %v2301
        %v2366 = vpack.c.b16 %v2306, %v2302
        %v2367 = vpack.c.b16 %v2307, %v2303
        %v2368 = vpack.c.b16 %v2312, %v2308
        %v2369 = vpack.c.b16 %v2313, %v2309
        %v2370 = vpack.c.b16 %v2314, %v2310
        %v2371 = vpack.c.b16 %v2315, %v2311
        %v2372 = vpack.c.b16 %v2320, %v2316
        %v2373 = vpack.c.b16 %v2321, %v2317
        %v2374 = vpack.c.b16 %v2322, %v2318
        %v2375 = vpack.c.b16 %v2323, %v2319
        %v2376 = vpack.c.b16 %v2328, %v2324
        %v2377 = vpack.c.b16 %v2329, %v2325
        %v2378 = vpack.c.b16 %v2330, %v2326
        %v2379 = vpack.c.b16 %v2331, %v2327
        %v2380 = vpack.c.b16 %v2336, %v2332
        %v2381 = vpack.c.b16 %v2337, %v2333
        %v2382 = vpack.c.b16 %v2338, %v2334
        %v2383 = vpack.c.b16 %v2339, %v2335
        %v2384 = vpack.c.b16 %v2344, %v2340
        %v2385 = vpack.c.b16 %v2345, %v2341
        %v2386 = vpack.c.b16 %v2346, %v2342
        %v2387 = vpack.c.b16 %v2347, %v2343
        %v2388 = vpack.c.b16 %v2352, %v2348
        %v2389 = vpack.c.b16 %v2353, %v2349
        %v2390 = vpack.c.b16 %v2354, %v2350
        %v2391 = vpack.c.b16 %v2355, %v2351
        %v2392 = vpack.c.b16 %v2360, %v2356
        %v2393 = vpack.c.b16 %v2361, %v2357
        %v2394 = vpack.c.b16 %v2362, %v2358
        %v2395 = vpack.c.b16 %v2363, %v2359
        %2428 = vmatprep.subr.bf16.mxu0 %v2393
        %2429 = vmatpush1.bf16.msra.mxu0 %v2392
        %2430 = vmatprep.subr.bf16.mxu0 %v2389
        %2431 = vmatpush1.bf16.msra.mxu0 %v2388
        %2432 = vmatprep.subr.bf16.mxu0 %v2385
        %2433 = vmatpush1.bf16.msra.mxu0 %v2384
        %2434 = vmatprep.subr.bf16.mxu0 %v2381
        %2435 = vmatpush1.bf16.msra.mxu0 %v2380
        %2436 = vmatprep.subr.bf16.mxu0 %v2377
        %2437 = vmatpush1.bf16.msra.mxu0 %v2376
        %2438 = vmatprep.subr.bf16.mxu0 %v2373
        %2439 = vmatpush1.bf16.msra.mxu0 %v2372
        %2440 = vmatprep.subr.bf16.mxu0 %v2369
        %2441 = vmatpush1.bf16.msra.mxu0 %v2368
        %2442 = vmatprep.subr.bf16.mxu0 %v2365
        %2443 = vmatpush1.bf16.msra.mxu0 %v2364
        %2444 = vmatprep.subr.bf16.mxu0 0
        %2445 = vmatpush2.bf16.msra.mxu0 0
        %2446 = vmatprep.subr.bf16.mxu0 0
        %2447 = vmatpush2.bf16.msra.mxu0 0
        %2448 = vmatprep.subr.bf16.mxu0 0
        %2449 = vmatpush2.bf16.msra.mxu0 0
        %2450 = vmatprep.subr.bf16.mxu0 0
        %2451 = vmatpush2.bf16.msra.mxu0 0
        %2452 = vmatprep.subr.bf16.mxu0 0
        %2453 = vmatpush2.bf16.msra.mxu0 0
        %2454 = vmatprep.subr.bf16.mxu0 0
        %2455 = vmatpush2.bf16.msra.mxu0 0
        %2456 = vmatprep.subr.bf16.mxu0 0
        %2457 = vmatpush2.bf16.msra.mxu0 0
        %2458 = vmatprep.subr.bf16.mxu0 0
        %2459 = vmatpush2.bf16.msra.mxu0 0
        %2460 = vmatprep.mubr.bf16.mxu0 0
        %2461 = vmatmul.mubr.bf16.gmra.mxu0 %v2228
        %v2462 = vpop.f32.mrf.mxu0
        %v2463 = vadd.f32 0.0, %v2462
        %v2464 = vpop.f32.mrf.mxu0
        %v2465 = vadd.f32 0.0, %v2464
        %v2466 = vpop.f32.mrf.mxu0
        %v2467 = vadd.f32 0.0, %v2466
        %v2468 = vpop.f32.mrf.mxu0
        %v2469 = vadd.f32 0.0, %v2468
        %2470 = vmatprep.mubr.bf16.mxu0 0
        %2471 = vmatmul.mubr.bf16.gmra.mxu0 %v2229
        %v2472 = vpop.f32.mrf.mxu0
        %v2473 = vadd.f32 0.0, %v2472
        %v2474 = vpop.f32.mrf.mxu0
        %v2475 = vadd.f32 0.0, %v2474
        %v2476 = vpop.f32.mrf.mxu0
        %v2477 = vadd.f32 0.0, %v2476
        %v2478 = vpop.f32.mrf.mxu0
        %v2479 = vadd.f32 0.0, %v2478
        %2480 = vmatprep.mubr.bf16.mxu0 0
        %2481 = vmatmul.mubr.bf16.gmra.mxu0 %v2230
        %v2482 = vpop.f32.mrf.mxu0
        %v2483 = vadd.f32 0.0, %v2482
        %v2484 = vpop.f32.mrf.mxu0
        %v2485 = vadd.f32 0.0, %v2484
        %v2486 = vpop.f32.mrf.mxu0
        %v2487 = vadd.f32 0.0, %v2486
        %v2488 = vpop.f32.mrf.mxu0
        %v2489 = vadd.f32 0.0, %v2488
        %2490 = vmatprep.mubr.bf16.mxu0 0
        %2491 = vmatmul.mubr.bf16.gmra.mxu0 %v2231
        %v2492 = vpop.f32.mrf.mxu0
        %v2493 = vadd.f32 0.0, %v2492
        %v2494 = vpop.f32.mrf.mxu0
        %v2495 = vadd.f32 0.0, %v2494
        %v2496 = vpop.f32.mrf.mxu0
        %v2497 = vadd.f32 0.0, %v2496
        %v2498 = vpop.f32.mrf.mxu0
        %v2499 = vadd.f32 0.0, %v2498
        %2500 = vmatprep.mubr.bf16.mxu0 0
        %2501 = vmatmul.mubr.bf16.gmra.mxu0 %v2232
        %v2502 = vpop.f32.mrf.mxu0
        %v2503 = vadd.f32 0.0, %v2502
        %v2504 = vpop.f32.mrf.mxu0
        %v2505 = vadd.f32 0.0, %v2504
        %v2506 = vpop.f32.mrf.mxu0
        %v2507 = vadd.f32 0.0, %v2506
        %v2508 = vpop.f32.mrf.mxu0
        %v2509 = vadd.f32 0.0, %v2508
        %2510 = vmatprep.mubr.bf16.mxu0 0
        %2511 = vmatmul.mubr.bf16.gmra.mxu0 %v2233
        %v2512 = vpop.f32.mrf.mxu0
        %v2513 = vadd.f32 0.0, %v2512
        %v2514 = vpop.f32.mrf.mxu0
        %v2515 = vadd.f32 0.0, %v2514
        %v2516 = vpop.f32.mrf.mxu0
        %v2517 = vadd.f32 0.0, %v2516
        %v2518 = vpop.f32.mrf.mxu0
        %v2519 = vadd.f32 0.0, %v2518
        %2520 = vmatprep.mubr.bf16.mxu0 0
        %2521 = vmatmul.mubr.bf16.gmra.mxu0 %v2234
        %v2522 = vpop.f32.mrf.mxu0
        %v2523 = vadd.f32 0.0, %v2522
        %v2524 = vpop.f32.mrf.mxu0
        %v2525 = vadd.f32 0.0, %v2524
        %v2526 = vpop.f32.mrf.mxu0
        %v2527 = vadd.f32 0.0, %v2526
        %v2528 = vpop.f32.mrf.mxu0
        %v2529 = vadd.f32 0.0, %v2528
        %2530 = vmatprep.mubr.bf16.mxu0 0
        %2531 = vmatmul.mubr.bf16.gmra.mxu0 %v2235
        %v2532 = vpop.f32.mrf.mxu0
        %v2533 = vadd.f32 0.0, %v2532
        %v2534 = vpop.f32.mrf.mxu0
        %v2535 = vadd.f32 0.0, %v2534
        %v2536 = vpop.f32.mrf.mxu0
        %v2537 = vadd.f32 0.0, %v2536
        %v2538 = vpop.f32.mrf.mxu0
        %v2539 = vadd.f32 0.0, %v2538
        %2540 = vdwg.mxu0
        %2541 = vmatprep.subr.bf16.mxu0 %v2395
        %2542 = vmatpush1.bf16.msra.mxu0 %v2394
        %2543 = vmatprep.subr.bf16.mxu0 %v2391
        %2544 = vmatpush1.bf16.msra.mxu0 %v2390
        %2545 = vmatprep.subr.bf16.mxu0 %v2387
        %2546 = vmatpush1.bf16.msra.mxu0 %v2386
        %2547 = vmatprep.subr.bf16.mxu0 %v2383
        %2548 = vmatpush1.bf16.msra.mxu0 %v2382
        %2549 = vmatprep.subr.bf16.mxu0 %v2379
        %2550 = vmatpush1.bf16.msra.mxu0 %v2378
        %2551 = vmatprep.subr.bf16.mxu0 %v2375
        %2552 = vmatpush1.bf16.msra.mxu0 %v2374
        %2553 = vmatprep.subr.bf16.mxu0 %v2371
        %2554 = vmatpush1.bf16.msra.mxu0 %v2370
        %2555 = vmatprep.subr.bf16.mxu0 %v2367
        %2556 = vmatpush1.bf16.msra.mxu0 %v2366
        %2557 = vmatprep.subr.bf16.mxu0 0
        %2558 = vmatpush2.bf16.msra.mxu0 0
        %2559 = vmatprep.subr.bf16.mxu0 0
        %2560 = vmatpush2.bf16.msra.mxu0 0
        %2561 = vmatprep.subr.bf16.mxu0 0
        %2562 = vmatpush2.bf16.msra.mxu0 0
        %2563 = vmatprep.subr.bf16.mxu0 0
        %2564 = vmatpush2.bf16.msra.mxu0 0
        %2565 = vmatprep.subr.bf16.mxu0 0
        %2566 = vmatpush2.bf16.msra.mxu0 0
        %2567 = vmatprep.subr.bf16.mxu0 0
        %2568 = vmatpush2.bf16.msra.mxu0 0
        %2569 = vmatprep.subr.bf16.mxu0 0
        %2570 = vmatpush2.bf16.msra.mxu0 0
        %2571 = vmatprep.subr.bf16.mxu0 0
        %2572 = vmatpush2.bf16.msra.mxu0 0
        %2573 = vmatprep.mubr.bf16.mxu0 0
        %2574 = vmatmul.mubr.bf16.gmra.mxu0 %v2228
        %v2575 = vpop.f32.mrf.mxu0
        %v2576 = vadd.f32 0.0, %v2575
        %v2577 = vpop.f32.mrf.mxu0
        %v2578 = vadd.f32 0.0, %v2577
        %v2579 = vpop.f32.mrf.mxu0
        %v2580 = vadd.f32 0.0, %v2579
        %v2581 = vpop.f32.mrf.mxu0
        %v2582 = vadd.f32 0.0, %v2581
        %2583 = vmatprep.mubr.bf16.mxu0 0
        %2584 = vmatmul.mubr.bf16.gmra.mxu0 %v2229
        %v2585 = vpop.f32.mrf.mxu0
        %v2586 = vadd.f32 0.0, %v2585
        %v2587 = vpop.f32.mrf.mxu0
        %v2588 = vadd.f32 0.0, %v2587
        %v2589 = vpop.f32.mrf.mxu0
        %v2590 = vadd.f32 0.0, %v2589
        %v2591 = vpop.f32.mrf.mxu0
        %v2592 = vadd.f32 0.0, %v2591
        %2593 = vmatprep.mubr.bf16.mxu0 0
        %2594 = vmatmul.mubr.bf16.gmra.mxu0 %v2230
        %v2595 = vpop.f32.mrf.mxu0
        %v2596 = vadd.f32 0.0, %v2595
        %v2597 = vpop.f32.mrf.mxu0
        %v2598 = vadd.f32 0.0, %v2597
        %v2599 = vpop.f32.mrf.mxu0
        %v2600 = vadd.f32 0.0, %v2599
        %v2601 = vpop.f32.mrf.mxu0
        %v2602 = vadd.f32 0.0, %v2601
        %2603 = vmatprep.mubr.bf16.mxu0 0
        %2604 = vmatmul.mubr.bf16.gmra.mxu0 %v2231
        %v2605 = vpop.f32.mrf.mxu0
        %v2606 = vadd.f32 0.0, %v2605
        %v2607 = vpop.f32.mrf.mxu0
        %v2608 = vadd.f32 0.0, %v2607
        %v2609 = vpop.f32.mrf.mxu0
        %v2610 = vadd.f32 0.0, %v2609
        %v2611 = vpop.f32.mrf.mxu0
        %v2612 = vadd.f32 0.0, %v2611
        %2613 = vmatprep.mubr.bf16.mxu0 0
        %2614 = vmatmul.mubr.bf16.gmra.mxu0 %v2232
        %v2615 = vpop.f32.mrf.mxu0
        %v2616 = vadd.f32 0.0, %v2615
        %v2617 = vpop.f32.mrf.mxu0
        %v2618 = vadd.f32 0.0, %v2617
        %v2619 = vpop.f32.mrf.mxu0
        %v2620 = vadd.f32 0.0, %v2619
        %v2621 = vpop.f32.mrf.mxu0
        %v2622 = vadd.f32 0.0, %v2621
        %2623 = vmatprep.mubr.bf16.mxu0 0
        %2624 = vmatmul.mubr.bf16.gmra.mxu0 %v2233
        %v2625 = vpop.f32.mrf.mxu0
        %v2626 = vadd.f32 0.0, %v2625
        %v2627 = vpop.f32.mrf.mxu0
        %v2628 = vadd.f32 0.0, %v2627
        %v2629 = vpop.f32.mrf.mxu0
        %v2630 = vadd.f32 0.0, %v2629
        %v2631 = vpop.f32.mrf.mxu0
        %v2632 = vadd.f32 0.0, %v2631
        %2633 = vmatprep.mubr.bf16.mxu0 0
        %2634 = vmatmul.mubr.bf16.gmra.mxu0 %v2234
        %v2635 = vpop.f32.mrf.mxu0
        %v2636 = vadd.f32 0.0, %v2635
        %v2637 = vpop.f32.mrf.mxu0
        %v2638 = vadd.f32 0.0, %v2637
        %v2639 = vpop.f32.mrf.mxu0
        %v2640 = vadd.f32 0.0, %v2639
        %v2641 = vpop.f32.mrf.mxu0
        %v2642 = vadd.f32 0.0, %v2641
        %2643 = vmatprep.mubr.bf16.mxu0 0
        %2644 = vmatmul.mubr.bf16.gmra.mxu0 %v2235
        %v2645 = vpop.f32.mrf.mxu0
        %v2646 = vadd.f32 0.0, %v2645
        %v2647 = vpop.f32.mrf.mxu0
        %v2648 = vadd.f32 0.0, %v2647
        %v2649 = vpop.f32.mrf.mxu0
        %v2650 = vadd.f32 0.0, %v2649
        %v2651 = vpop.f32.mrf.mxu0
        %v2652 = vadd.f32 0.0, %v2651
        %2653 = vdwg.mxu0
        %v2654 = vld [vmem:[%s8] sm:$0xf]
        %v2656 = vlaneseq
        %v2657 = vshrl.u32 %v2656, 7
        %v2658 = vsub.s32 0, %v2657
        %v2659 = vrot.slane %v2654, %v2658
        %v2660 = vlaneseq
        %v2661 = vshrl.u32 %v2660, 7
        %v2662 = vsub.s32 1, %v2661
        %v2663 = vrot.slane %v2654, %v2662
        %v2664 = vlaneseq
        %v2665 = vshrl.u32 %v2664, 7
        %v2666 = vsub.s32 2, %v2665
        %v2667 = vrot.slane %v2654, %v2666
        %v2668 = vlaneseq
        %v2669 = vshrl.u32 %v2668, 7
        %v2670 = vsub.s32 3, %v2669
        %v2671 = vrot.slane %v2654, %v2670
        %v2676 = vmul.f32 %v2463, %v2659
        %v2677 = vmul.f32 %v2465, %v2663
        %v2678 = vmul.f32 %v2576, %v2667
        %v2679 = vmul.f32 %v2578, %v2671
        %v2680 = vmul.f32 %v2467, %v2659
        %v2681 = vmul.f32 %v2469, %v2663
        %v2682 = vmul.f32 %v2580, %v2667
        %v2683 = vmul.f32 %v2582, %v2671
        %v2684 = vmul.f32 %v2473, %v2659
        %v2685 = vmul.f32 %v2475, %v2663
        %v2686 = vmul.f32 %v2586, %v2667
        %v2687 = vmul.f32 %v2588, %v2671
        %v2688 = vmul.f32 %v2477, %v2659
        %v2689 = vmul.f32 %v2479, %v2663
        %v2690 = vmul.f32 %v2590, %v2667
        %v2691 = vmul.f32 %v2592, %v2671
        %v2692 = vmul.f32 %v2483, %v2659
        %v2693 = vmul.f32 %v2485, %v2663
        %v2694 = vmul.f32 %v2596, %v2667
        %v2695 = vmul.f32 %v2598, %v2671
        %v2696 = vmul.f32 %v2487, %v2659
        %v2697 = vmul.f32 %v2489, %v2663
        %v2698 = vmul.f32 %v2600, %v2667
        %v2699 = vmul.f32 %v2602, %v2671
        %v2700 = vmul.f32 %v2493, %v2659
        %v2701 = vmul.f32 %v2495, %v2663
        %v2702 = vmul.f32 %v2606, %v2667
        %v2703 = vmul.f32 %v2608, %v2671
        %v2704 = vmul.f32 %v2497, %v2659
        %v2705 = vmul.f32 %v2499, %v2663
        %v2706 = vmul.f32 %v2610, %v2667
        %v2707 = vmul.f32 %v2612, %v2671
        %v2708 = vmul.f32 %v2503, %v2659
        %v2709 = vmul.f32 %v2505, %v2663
        %v2710 = vmul.f32 %v2616, %v2667
        %v2711 = vmul.f32 %v2618, %v2671
        %v2712 = vmul.f32 %v2507, %v2659
        %v2713 = vmul.f32 %v2509, %v2663
        %v2714 = vmul.f32 %v2620, %v2667
        %v2715 = vmul.f32 %v2622, %v2671
        %v2716 = vmul.f32 %v2513, %v2659
        %v2717 = vmul.f32 %v2515, %v2663
        %v2718 = vmul.f32 %v2626, %v2667
        %v2719 = vmul.f32 %v2628, %v2671
        %v2720 = vmul.f32 %v2517, %v2659
        %v2721 = vmul.f32 %v2519, %v2663
        %v2722 = vmul.f32 %v2630, %v2667
        %v2723 = vmul.f32 %v2632, %v2671
        %v2724 = vmul.f32 %v2523, %v2659
        %v2725 = vmul.f32 %v2525, %v2663
        %v2726 = vmul.f32 %v2636, %v2667
        %v2727 = vmul.f32 %v2638, %v2671
        %v2728 = vmul.f32 %v2527, %v2659
        %v2729 = vmul.f32 %v2529, %v2663
        %v2730 = vmul.f32 %v2640, %v2667
        %v2731 = vmul.f32 %v2642, %v2671
        %v2732 = vmul.f32 %v2533, %v2659
        %v2733 = vmul.f32 %v2535, %v2663
        %v2734 = vmul.f32 %v2646, %v2667
        %v2735 = vmul.f32 %v2648, %v2671
        %v2736 = vmul.f32 %v2537, %v2659
        %v2737 = vmul.f32 %v2539, %v2663
        %v2738 = vmul.f32 %v2650, %v2667
        %v2739 = vmul.f32 %v2652, %v2671
        %v2740 = vld [vmem:[%s9] sm:$0xf]
        %v2742 = vlaneseq
        %v2743 = vshrl.u32 %v2742, 7
        %v2744 = vsub.s32 0, %v2743
        %v2745 = vrot.slane %v2740, %v2744
        %v2746 = vlaneseq
        %v2747 = vshrl.u32 %v2746, 7
        %v2748 = vsub.s32 1, %v2747
        %v2749 = vrot.slane %v2740, %v2748
        %v2750 = vlaneseq
        %v2751 = vshrl.u32 %v2750, 7
        %v2752 = vsub.s32 2, %v2751
        %v2753 = vrot.slane %v2740, %v2752
        %v2754 = vlaneseq
        %v2755 = vshrl.u32 %v2754, 7
        %v2756 = vsub.s32 3, %v2755
        %v2757 = vrot.slane %v2740, %v2756
        %v2762 = vadd.f32 %v2676, %v2745
        %v2763 = vadd.f32 %v2677, %v2749
        %v2764 = vadd.f32 %v2678, %v2753
        %v2765 = vadd.f32 %v2679, %v2757
        %v2766 = vadd.f32 %v2680, %v2745
        %v2767 = vadd.f32 %v2681, %v2749
        %v2768 = vadd.f32 %v2682, %v2753
        %v2769 = vadd.f32 %v2683, %v2757
        %v2770 = vadd.f32 %v2684, %v2745
        %v2771 = vadd.f32 %v2685, %v2749
        %v2772 = vadd.f32 %v2686, %v2753
        %v2773 = vadd.f32 %v2687, %v2757
        %v2774 = vadd.f32 %v2688, %v2745
        %v2775 = vadd.f32 %v2689, %v2749
        %v2776 = vadd.f32 %v2690, %v2753
        %v2777 = vadd.f32 %v2691, %v2757
        %v2778 = vadd.f32 %v2692, %v2745
        %v2779 = vadd.f32 %v2693, %v2749
        %v2780 = vadd.f32 %v2694, %v2753
        %v2781 = vadd.f32 %v2695, %v2757
        %v2782 = vadd.f32 %v2696, %v2745
        %v2783 = vadd.f32 %v2697, %v2749
        %v2784 = vadd.f32 %v2698, %v2753
        %v2785 = vadd.f32 %v2699, %v2757
        %v2786 = vadd.f32 %v2700, %v2745
        %v2787 = vadd.f32 %v2701, %v2749
        %v2788 = vadd.f32 %v2702, %v2753
        %v2789 = vadd.f32 %v2703, %v2757
        %v2790 = vadd.f32 %v2704, %v2745
        %v2791 = vadd.f32 %v2705, %v2749
        %v2792 = vadd.f32 %v2706, %v2753
        %v2793 = vadd.f32 %v2707, %v2757
        %v2794 = vadd.f32 %v2708, %v2745
        %v2795 = vadd.f32 %v2709, %v2749
        %v2796 = vadd.f32 %v2710, %v2753
        %v2797 = vadd.f32 %v2711, %v2757
        %v2798 = vadd.f32 %v2712, %v2745
        %v2799 = vadd.f32 %v2713, %v2749
        %v2800 = vadd.f32 %v2714, %v2753
        %v2801 = vadd.f32 %v2715, %v2757
        %v2802 = vadd.f32 %v2716, %v2745
        %v2803 = vadd.f32 %v2717, %v2749
        %v2804 = vadd.f32 %v2718, %v2753
        %v2805 = vadd.f32 %v2719, %v2757
        %v2806 = vadd.f32 %v2720, %v2745
        %v2807 = vadd.f32 %v2721, %v2749
        %v2808 = vadd.f32 %v2722, %v2753
        %v2809 = vadd.f32 %v2723, %v2757
        %v2810 = vadd.f32 %v2724, %v2745
        %v2811 = vadd.f32 %v2725, %v2749
        %v2812 = vadd.f32 %v2726, %v2753
        %v2813 = vadd.f32 %v2727, %v2757
        %v2814 = vadd.f32 %v2728, %v2745
        %v2815 = vadd.f32 %v2729, %v2749
        %v2816 = vadd.f32 %v2730, %v2753
        %v2817 = vadd.f32 %v2731, %v2757
        %v2818 = vadd.f32 %v2732, %v2745
        %v2819 = vadd.f32 %v2733, %v2749
        %v2820 = vadd.f32 %v2734, %v2753
        %v2821 = vadd.f32 %v2735, %v2757
        %v2822 = vadd.f32 %v2736, %v2745
        %v2823 = vadd.f32 %v2737, %v2749
        %v2824 = vadd.f32 %v2738, %v2753
        %v2825 = vadd.f32 %v2739, %v2757
        %v2826 = vadd.f32 %v2762, %v2766
        %v2827 = vadd.f32 %v2826, %v2770
        %v2828 = vadd.f32 %v2827, %v2774
        %v2829 = vadd.f32 %v2828, %v2778
        %v2830 = vadd.f32 %v2829, %v2782
        %v2831 = vadd.f32 %v2830, %v2786
        %v2832 = vadd.f32 %v2831, %v2790
        %v2833 = vrot.slane %v2832, 4
        %v2834 = vadd.f32 %v2832, %v2833
        %v2835 = vrot.slane %v2834, 2
        %v2836 = vadd.f32 %v2834, %v2835
        %v2837 = vrot.slane %v2836, 1
        %v2838 = vadd.f32 %v2836, %v2837
        %v2839 = vadd.f32 %v2763, %v2767
        %v2840 = vadd.f32 %v2839, %v2771
        %v2841 = vadd.f32 %v2840, %v2775
        %v2842 = vadd.f32 %v2841, %v2779
        %v2843 = vadd.f32 %v2842, %v2783
        %v2844 = vadd.f32 %v2843, %v2787
        %v2845 = vadd.f32 %v2844, %v2791
        %v2846 = vrot.slane %v2845, 4
        %v2847 = vadd.f32 %v2845, %v2846
        %v2848 = vrot.slane %v2847, 2
        %v2849 = vadd.f32 %v2847, %v2848
        %v2850 = vrot.slane %v2849, 1
        %v2851 = vadd.f32 %v2849, %v2850
        %v2852 = vadd.f32 %v2764, %v2768
        %v2853 = vadd.f32 %v2852, %v2772
        %v2854 = vadd.f32 %v2853, %v2776
        %v2855 = vadd.f32 %v2854, %v2780
        %v2856 = vadd.f32 %v2855, %v2784
        %v2857 = vadd.f32 %v2856, %v2788
        %v2858 = vadd.f32 %v2857, %v2792
        %v2859 = vrot.slane %v2858, 4
        %v2860 = vadd.f32 %v2858, %v2859
        %v2861 = vrot.slane %v2860, 2
        %v2862 = vadd.f32 %v2860, %v2861
        %v2863 = vrot.slane %v2862, 1
        %v2864 = vadd.f32 %v2862, %v2863
        %v2865 = vadd.f32 %v2765, %v2769
        %v2866 = vadd.f32 %v2865, %v2773
        %v2867 = vadd.f32 %v2866, %v2777
        %v2868 = vadd.f32 %v2867, %v2781
        %v2869 = vadd.f32 %v2868, %v2785
        %v2870 = vadd.f32 %v2869, %v2789
        %v2871 = vadd.f32 %v2870, %v2793
        %v2872 = vrot.slane %v2871, 4
        %v2873 = vadd.f32 %v2871, %v2872
        %v2874 = vrot.slane %v2873, 2
        %v2875 = vadd.f32 %v2873, %v2874
        %v2876 = vrot.slane %v2875, 1
        %v2877 = vadd.f32 %v2875, %v2876
        %v2878 = vadd.f32 %v2794, %v2798
        %v2879 = vadd.f32 %v2878, %v2802
        %v2880 = vadd.f32 %v2879, %v2806
        %v2881 = vadd.f32 %v2880, %v2810
        %v2882 = vadd.f32 %v2881, %v2814
        %v2883 = vadd.f32 %v2882, %v2818
        %v2884 = vadd.f32 %v2883, %v2822
        %v2885 = vrot.slane %v2884, 4
        %v2886 = vadd.f32 %v2884, %v2885
        %v2887 = vrot.slane %v2886, 2
        %v2888 = vadd.f32 %v2886, %v2887
        %v2889 = vrot.slane %v2888, 1
        %v2890 = vadd.f32 %v2888, %v2889
        %v2891 = vadd.f32 %v2795, %v2799
        %v2892 = vadd.f32 %v2891, %v2803
        %v2893 = vadd.f32 %v2892, %v2807
        %v2894 = vadd.f32 %v2893, %v2811
        %v2895 = vadd.f32 %v2894, %v2815
        %v2896 = vadd.f32 %v2895, %v2819
        %v2897 = vadd.f32 %v2896, %v2823
        %v2898 = vrot.slane %v2897, 4
        %v2899 = vadd.f32 %v2897, %v2898
        %v2900 = vrot.slane %v2899, 2
        %v2901 = vadd.f32 %v2899, %v2900
        %v2902 = vrot.slane %v2901, 1
        %v2903 = vadd.f32 %v2901, %v2902
        %v2904 = vadd.f32 %v2796, %v2800
        %v2905 = vadd.f32 %v2904, %v2804
        %v2906 = vadd.f32 %v2905, %v2808
        %v2907 = vadd.f32 %v2906, %v2812
        %v2908 = vadd.f32 %v2907, %v2816
        %v2909 = vadd.f32 %v2908, %v2820
        %v2910 = vadd.f32 %v2909, %v2824
        %v2911 = vrot.slane %v2910, 4
        %v2912 = vadd.f32 %v2910, %v2911
        %v2913 = vrot.slane %v2912, 2
        %v2914 = vadd.f32 %v2912, %v2913
        %v2915 = vrot.slane %v2914, 1
        %v2916 = vadd.f32 %v2914, %v2915
        %v2917 = vadd.f32 %v2797, %v2801
        %v2918 = vadd.f32 %v2917, %v2805
        %v2919 = vadd.f32 %v2918, %v2809
        %v2920 = vadd.f32 %v2919, %v2813
        %v2921 = vadd.f32 %v2920, %v2817
        %v2922 = vadd.f32 %v2921, %v2821
        %v2923 = vadd.f32 %v2922, %v2825
        %v2924 = vrot.slane %v2923, 4
        %v2925 = vadd.f32 %v2923, %v2924
        %v2926 = vrot.slane %v2925, 2
        %v2927 = vadd.f32 %v2925, %v2926
        %v2928 = vrot.slane %v2927, 1
        %v2929 = vadd.f32 %v2927, %v2928
        %v2930 = vrcp.pop 64.0
        %v2931 = vmul.f32 %v2838, %v2930
        %v2932 = vmul.f32 %v2851, %v2930
        %v2933 = vmul.f32 %v2864, %v2930
        %v2934 = vmul.f32 %v2877, %v2930
        %v2935 = vmul.f32 %v2890, %v2930
        %v2936 = vmul.f32 %v2903, %v2930
        %v2937 = vmul.f32 %v2916, %v2930
        %v2938 = vmul.f32 %v2929, %v2930
        %v2939 = vld [vmem:[#allocation14] sm:$0xff]
        %v2940 = vld [vmem:[#allocation14 + $0x8] sm:$0xff]
        %v2941 = vld [vmem:[#allocation14 + $0x10] sm:$0xff]
        %v2942 = vld [vmem:[#allocation14 + $0x18] sm:$0xff]
        %v2943 = vld [vmem:[#allocation14 + $0x20] sm:$0xff]
        %v2944 = vld [vmem:[#allocation14 + $0x28] sm:$0xff]
        %v2945 = vld [vmem:[#allocation14 + $0x30] sm:$0xff]
        %v2946 = vld [vmem:[#allocation14 + $0x38] sm:$0xff]
        %v2947 = vld [vmem:[#allocation14 + $0x40] sm:$0xff]
        %v2948 = vld [vmem:[#allocation14 + $0x48] sm:$0xff]
        %v2949 = vld [vmem:[#allocation14 + $0x50] sm:$0xff]
        %v2950 = vld [vmem:[#allocation14 + $0x58] sm:$0xff]
        %v2951 = vld [vmem:[#allocation14 + $0x60] sm:$0xff]
        %v2952 = vld [vmem:[#allocation14 + $0x68] sm:$0xff]
        %v2953 = vld [vmem:[#allocation14 + $0x70] sm:$0xff]
        %v2954 = vld [vmem:[#allocation14 + $0x78] sm:$0xff]
        %v2955 = vmul.f32 %v2931, %v2939
        %v2956 = vmul.f32 %v2932, %v2940
        %v2957 = vmul.f32 %v2933, %v2941
        %v2958 = vmul.f32 %v2934, %v2942
        %v2959 = vmul.f32 %v2931, %v2943
        %v2960 = vmul.f32 %v2932, %v2944
        %v2961 = vmul.f32 %v2933, %v2945
        %v2962 = vmul.f32 %v2934, %v2946
        %v2963 = vmul.f32 %v2931, %v2947
        %v2964 = vmul.f32 %v2932, %v2948
        %v2965 = vmul.f32 %v2933, %v2949
        %v2966 = vmul.f32 %v2934, %v2950
        %v2967 = vmul.f32 %v2931, %v2951
        %v2968 = vmul.f32 %v2932, %v2952
        %v2969 = vmul.f32 %v2933, %v2953
        %v2970 = vmul.f32 %v2934, %v2954
        %v2971 = vmul.f32 %v2935, %v2939
        %v2972 = vmul.f32 %v2936, %v2940
        %v2973 = vmul.f32 %v2937, %v2941
        %v2974 = vmul.f32 %v2938, %v2942
        %v2975 = vmul.f32 %v2935, %v2943
        %v2976 = vmul.f32 %v2936, %v2944
        %v2977 = vmul.f32 %v2937, %v2945
        %v2978 = vmul.f32 %v2938, %v2946
        %v2979 = vmul.f32 %v2935, %v2947
        %v2980 = vmul.f32 %v2936, %v2948
        %v2981 = vmul.f32 %v2937, %v2949
        %v2982 = vmul.f32 %v2938, %v2950
        %v2983 = vmul.f32 %v2935, %v2951
        %v2984 = vmul.f32 %v2936, %v2952
        %v2985 = vmul.f32 %v2937, %v2953
        %v2986 = vmul.f32 %v2938, %v2954
        %v2987 = vadd.f32 %v2955, %v2956
        %v2988 = vadd.f32 %v2987, %v2957
        %v2989 = vadd.f32 %v2988, %v2958
        %2990 = vadd.xlane.f32.xlu0 %v2989
        %v2991 = vpop.xlane.xlu0 %2990
        %v2992 = vadd.f32 %v2959, %v2960
        %v2993 = vadd.f32 %v2992, %v2961
        %v2994 = vadd.f32 %v2993, %v2962
        %2995 = vadd.xlane.f32.xlu0 %v2994
        %v2996 = vpop.xlane.xlu0 %2995
        %v2997 = vadd.f32 %v2963, %v2964
        %v2998 = vadd.f32 %v2997, %v2965
        %v2999 = vadd.f32 %v2998, %v2966
        %3000 = vadd.xlane.f32.xlu0 %v2999
        %v3001 = vpop.xlane.xlu0 %3000
        %v3002 = vadd.f32 %v2967, %v2968
        %v3003 = vadd.f32 %v3002, %v2969
        %v3004 = vadd.f32 %v3003, %v2970
        %3005 = vadd.xlane.f32.xlu0 %v3004
        %v3006 = vpop.xlane.xlu0 %3005
        %v3007 = vadd.f32 %v2971, %v2972
        %v3008 = vadd.f32 %v3007, %v2973
        %v3009 = vadd.f32 %v3008, %v2974
        %3010 = vadd.xlane.f32.xlu0 %v3009
        %v3011 = vpop.xlane.xlu0 %3010
        %v3012 = vadd.f32 %v2975, %v2976
        %v3013 = vadd.f32 %v3012, %v2977
        %v3014 = vadd.f32 %v3013, %v2978
        %3015 = vadd.xlane.f32.xlu0 %v3014
        %v3016 = vpop.xlane.xlu0 %3015
        %v3017 = vadd.f32 %v2979, %v2980
        %v3018 = vadd.f32 %v3017, %v2981
        %v3019 = vadd.f32 %v3018, %v2982
        %3020 = vadd.xlane.f32.xlu0 %v3019
        %v3021 = vpop.xlane.xlu0 %3020
        %v3022 = vadd.f32 %v2983, %v2984
        %v3023 = vadd.f32 %v3022, %v2985
        %v3024 = vadd.f32 %v3023, %v2986
        %3025 = vadd.xlane.f32.xlu0 %v3024
        %v3026 = vpop.xlane.xlu0 %3025
        %v3027 = vmax.f32 %v2991, 0.0
        %v3028 = vmax.f32 %v2996, 0.0
        %v3029 = vmax.f32 %v3001, 0.0
        %v3030 = vmax.f32 %v3006, 0.0
        %v3031 = vmax.f32 %v3011, 0.0
        %v3032 = vmax.f32 %v3016, 0.0
        %v3033 = vmax.f32 %v3021, 0.0
        %v3034 = vmax.f32 %v3026, 0.0
        %v3035 = vld [vmem:[#allocation15] sm:$0xff]
        %v3036 = vld [vmem:[#allocation15 + $0x8] sm:$0xff]
        %v3037 = vld [vmem:[#allocation15 + $0x10] sm:$0xff]
        %v3038 = vld [vmem:[#allocation15 + $0x18] sm:$0xff]
        %v3039 = vld [vmem:[#allocation15 + $0x20] sm:$0xff]
        %v3040 = vld [vmem:[#allocation15 + $0x28] sm:$0xff]
        %v3041 = vld [vmem:[#allocation15 + $0x30] sm:$0xff]
        %v3042 = vld [vmem:[#allocation15 + $0x38] sm:$0xff]
        %v3043 = vld [vmem:[#allocation15 + $0x40] sm:$0xff]
        %v3044 = vld [vmem:[#allocation15 + $0x48] sm:$0xff]
        %v3045 = vld [vmem:[#allocation15 + $0x50] sm:$0xff]
        %v3046 = vld [vmem:[#allocation15 + $0x58] sm:$0xff]
        %v3047 = vld [vmem:[#allocation15 + $0x60] sm:$0xff]
        %v3048 = vld [vmem:[#allocation15 + $0x68] sm:$0xff]
        %v3049 = vld [vmem:[#allocation15 + $0x70] sm:$0xff]
        %v3050 = vld [vmem:[#allocation15 + $0x78] sm:$0xff]
        %v3051 = vmul.f32 %v3027, %v3035
        %v3052 = vmul.f32 %v3027, %v3036
        %v3053 = vmul.f32 %v3027, %v3037
        %v3054 = vmul.f32 %v3027, %v3038
        %v3055 = vmul.f32 %v3028, %v3039
        %v3056 = vmul.f32 %v3028, %v3040
        %v3057 = vmul.f32 %v3028, %v3041
        %v3058 = vmul.f32 %v3028, %v3042
        %v3059 = vmul.f32 %v3029, %v3043
        %v3060 = vmul.f32 %v3029, %v3044
        %v3061 = vmul.f32 %v3029, %v3045
        %v3062 = vmul.f32 %v3029, %v3046
        %v3063 = vmul.f32 %v3030, %v3047
        %v3064 = vmul.f32 %v3030, %v3048
        %v3065 = vmul.f32 %v3030, %v3049
        %v3066 = vmul.f32 %v3030, %v3050
        %v3067 = vmul.f32 %v3031, %v3035
        %v3068 = vmul.f32 %v3031, %v3036
        %v3069 = vmul.f32 %v3031, %v3037
        %v3070 = vmul.f32 %v3031, %v3038
        %v3071 = vmul.f32 %v3032, %v3039
        %v3072 = vmul.f32 %v3032, %v3040
        %v3073 = vmul.f32 %v3032, %v3041
        %v3074 = vmul.f32 %v3032, %v3042
        %v3075 = vmul.f32 %v3033, %v3043
        %v3076 = vmul.f32 %v3033, %v3044
        %v3077 = vmul.f32 %v3033, %v3045
        %v3078 = vmul.f32 %v3033, %v3046
        %v3079 = vmul.f32 %v3034, %v3047
        %v3080 = vmul.f32 %v3034, %v3048
        %v3081 = vmul.f32 %v3034, %v3049
        %v3082 = vmul.f32 %v3034, %v3050
        %v3083 = vadd.f32 %v3051, %v3055
        %v3084 = vadd.f32 %v3083, %v3059
        %v3085 = vadd.f32 %v3084, %v3063
        %v3086 = vrot.slane %v3085, 4
        %v3087 = vadd.f32 %v3085, %v3086
        %v3088 = vrot.slane %v3087, 2
        %v3089 = vadd.f32 %v3087, %v3088
        %v3090 = vrot.slane %v3089, 1
        %v3091 = vadd.f32 %v3089, %v3090
        %v3092 = vadd.f32 %v3052, %v3056
        %v3093 = vadd.f32 %v3092, %v3060
        %v3094 = vadd.f32 %v3093, %v3064
        %v3095 = vrot.slane %v3094, 4
        %v3096 = vadd.f32 %v3094, %v3095
        %v3097 = vrot.slane %v3096, 2
        %v3098 = vadd.f32 %v3096, %v3097
        %v3099 = vrot.slane %v3098, 1
        %v3100 = vadd.f32 %v3098, %v3099
        %v3101 = vadd.f32 %v3053, %v3057
        %v3102 = vadd.f32 %v3101, %v3061
        %v3103 = vadd.f32 %v3102, %v3065
        %v3104 = vrot.slane %v3103, 4
        %v3105 = vadd.f32 %v3103, %v3104
        %v3106 = vrot.slane %v3105, 2
        %v3107 = vadd.f32 %v3105, %v3106
        %v3108 = vrot.slane %v3107, 1
        %v3109 = vadd.f32 %v3107, %v3108
        %v3110 = vadd.f32 %v3054, %v3058
        %v3111 = vadd.f32 %v3110, %v3062
        %v3112 = vadd.f32 %v3111, %v3066
        %v3113 = vrot.slane %v3112, 4
        %v3114 = vadd.f32 %v3112, %v3113
        %v3115 = vrot.slane %v3114, 2
        %v3116 = vadd.f32 %v3114, %v3115
        %v3117 = vrot.slane %v3116, 1
        %v3118 = vadd.f32 %v3116, %v3117
        %v3119 = vadd.f32 %v3067, %v3071
        %v3120 = vadd.f32 %v3119, %v3075
        %v3121 = vadd.f32 %v3120, %v3079
        %v3122 = vrot.slane %v3121, 4
        %v3123 = vadd.f32 %v3121, %v3122
        %v3124 = vrot.slane %v3123, 2
        %v3125 = vadd.f32 %v3123, %v3124
        %v3126 = vrot.slane %v3125, 1
        %v3127 = vadd.f32 %v3125, %v3126
        %v3128 = vadd.f32 %v3068, %v3072
        %v3129 = vadd.f32 %v3128, %v3076
        %v3130 = vadd.f32 %v3129, %v3080
        %v3131 = vrot.slane %v3130, 4
        %v3132 = vadd.f32 %v3130, %v3131
        %v3133 = vrot.slane %v3132, 2
        %v3134 = vadd.f32 %v3132, %v3133
        %v3135 = vrot.slane %v3134, 1
        %v3136 = vadd.f32 %v3134, %v3135
        %v3137 = vadd.f32 %v3069, %v3073
        %v3138 = vadd.f32 %v3137, %v3077
        %v3139 = vadd.f32 %v3138, %v3081
        %v3140 = vrot.slane %v3139, 4
        %v3141 = vadd.f32 %v3139, %v3140
        %v3142 = vrot.slane %v3141, 2
        %v3143 = vadd.f32 %v3141, %v3142
        %v3144 = vrot.slane %v3143, 1
        %v3145 = vadd.f32 %v3143, %v3144
        %v3146 = vadd.f32 %v3070, %v3074
        %v3147 = vadd.f32 %v3146, %v3078
        %v3148 = vadd.f32 %v3147, %v3082
        %v3149 = vrot.slane %v3148, 4
        %v3150 = vadd.f32 %v3148, %v3149
        %v3151 = vrot.slane %v3150, 2
        %v3152 = vadd.f32 %v3150, %v3151
        %v3153 = vrot.slane %v3152, 1
        %v3154 = vadd.f32 %v3152, %v3153
        %v3155 = vxor.u32 %v3091, 2147483648
        %v3156 = vxor.u32 %v3100, 2147483648
        %v3157 = vxor.u32 %v3109, 2147483648
        %v3158 = vxor.u32 %v3118, 2147483648
        %v3159 = vxor.u32 %v3127, 2147483648
        %v3160 = vxor.u32 %v3136, 2147483648
        %v3161 = vxor.u32 %v3145, 2147483648
        %v3162 = vxor.u32 %v3154, 2147483648
        %v3163 = vmul.f32 %v3155, 1.442695
        %v3164 = vpow.pop %v3163
        %v3165 = vmul.f32 %v3156, 1.442695
        %v3166 = vpow.pop %v3165
        %v3167 = vmul.f32 %v3157, 1.442695
        %v3168 = vpow.pop %v3167
        %v3169 = vmul.f32 %v3158, 1.442695
        %v3170 = vpow.pop %v3169
        %v3171 = vmul.f32 %v3159, 1.442695
        %v3172 = vpow.pop %v3171
        %v3173 = vmul.f32 %v3160, 1.442695
        %v3174 = vpow.pop %v3173
        %v3175 = vmul.f32 %v3161, 1.442695
        %v3176 = vpow.pop %v3175
        %v3177 = vmul.f32 %v3162, 1.442695
        %v3178 = vpow.pop %v3177
        %v3179 = vadd.f32 %v3164, 1.0
        %v3180 = vadd.f32 %v3166, 1.0
        %v3181 = vadd.f32 %v3168, 1.0
        %v3182 = vadd.f32 %v3170, 1.0
        %v3183 = vadd.f32 %v3172, 1.0
        %v3184 = vadd.f32 %v3174, 1.0
        %v3185 = vadd.f32 %v3176, 1.0
        %v3186 = vadd.f32 %v3178, 1.0
        %v3187 = vrcp.pop %v3179
        %v3188 = vmul.f32 1.0, %v3187
        %v3189 = vrcp.pop %v3180
        %v3190 = vmul.f32 1.0, %v3189
        %v3191 = vrcp.pop %v3181
        %v3192 = vmul.f32 1.0, %v3191
        %v3193 = vrcp.pop %v3182
        %v3194 = vmul.f32 1.0, %v3193
        %v3195 = vrcp.pop %v3183
        %v3196 = vmul.f32 1.0, %v3195
        %v3197 = vrcp.pop %v3184
        %v3198 = vmul.f32 1.0, %v3197
        %v3199 = vrcp.pop %v3185
        %v3200 = vmul.f32 1.0, %v3199
        %v3201 = vrcp.pop %v3186
        %v3202 = vmul.f32 1.0, %v3201
        %v3203 = vmul.f32 %v2762, %v3188
        %v3204 = vmul.f32 %v2763, %v3190
        %v3205 = vmul.f32 %v2764, %v3192
        %v3206 = vmul.f32 %v2765, %v3194
        %v3207 = vmul.f32 %v2766, %v3188
        %v3208 = vmul.f32 %v2767, %v3190
        %v3209 = vmul.f32 %v2768, %v3192
        %v3210 = vmul.f32 %v2769, %v3194
        %v3211 = vmul.f32 %v2770, %v3188
        %v3212 = vmul.f32 %v2771, %v3190
        %v3213 = vmul.f32 %v2772, %v3192
        %v3214 = vmul.f32 %v2773, %v3194
        %v3215 = vmul.f32 %v2774, %v3188
        %v3216 = vmul.f32 %v2775, %v3190
        %v3217 = vmul.f32 %v2776, %v3192
        %v3218 = vmul.f32 %v2777, %v3194
        %v3219 = vmul.f32 %v2778, %v3188
        %v3220 = vmul.f32 %v2779, %v3190
        %v3221 = vmul.f32 %v2780, %v3192
        %v3222 = vmul.f32 %v2781, %v3194
        %v3223 = vmul.f32 %v2782, %v3188
        %v3224 = vmul.f32 %v2783, %v3190
        %v3225 = vmul.f32 %v2784, %v3192
        %v3226 = vmul.f32 %v2785, %v3194
        %v3227 = vmul.f32 %v2786, %v3188
        %v3228 = vmul.f32 %v2787, %v3190
        %v3229 = vmul.f32 %v2788, %v3192
        %v3230 = vmul.f32 %v2789, %v3194
        %v3231 = vmul.f32 %v2790, %v3188
        %v3232 = vmul.f32 %v2791, %v3190
        %v3233 = vmul.f32 %v2792, %v3192
        %v3234 = vmul.f32 %v2793, %v3194
        %v3235 = vmul.f32 %v2794, %v3196
        %v3236 = vmul.f32 %v2795, %v3198
        %v3237 = vmul.f32 %v2796, %v3200
        %v3238 = vmul.f32 %v2797, %v3202
        %v3239 = vmul.f32 %v2798, %v3196
        %v3240 = vmul.f32 %v2799, %v3198
        %v3241 = vmul.f32 %v2800, %v3200
        %v3242 = vmul.f32 %v2801, %v3202
        %v3243 = vmul.f32 %v2802, %v3196
        %v3244 = vmul.f32 %v2803, %v3198
        %v3245 = vmul.f32 %v2804, %v3200
        %v3246 = vmul.f32 %v2805, %v3202
        %v3247 = vmul.f32 %v2806, %v3196
        %v3248 = vmul.f32 %v2807, %v3198
        %v3249 = vmul.f32 %v2808, %v3200
        %v3250 = vmul.f32 %v2809, %v3202
        %v3251 = vmul.f32 %v2810, %v3196
        %v3252 = vmul.f32 %v2811, %v3198
        %v3253 = vmul.f32 %v2812, %v3200
        %v3254 = vmul.f32 %v2813, %v3202
        %v3255 = vmul.f32 %v2814, %v3196
        %v3256 = vmul.f32 %v2815, %v3198
        %v3257 = vmul.f32 %v2816, %v3200
        %v3258 = vmul.f32 %v2817, %v3202
        %v3259 = vmul.f32 %v2818, %v3196
        %v3260 = vmul.f32 %v2819, %v3198
        %v3261 = vmul.f32 %v2820, %v3200
        %v3262 = vmul.f32 %v2821, %v3202
        %v3263 = vmul.f32 %v2822, %v3196
        %v3264 = vmul.f32 %v2823, %v3198
        %v3265 = vmul.f32 %v2824, %v3200
        %v3266 = vmul.f32 %v2825, %v3202
        %v3267 = vld [vmem:[%s462] sm:$0xff]
        %v3268 = vld [vmem:[%s462 + $0x8] sm:$0xff]
        %v3269 = vld [vmem:[%s462 + $0x10] sm:$0xff]
        %v3270 = vld [vmem:[%s462 + $0x18] sm:$0xff]
        %v3271 = vld [vmem:[%s462 + $0x20] sm:$0xff]
        %v3272 = vld [vmem:[%s462 + $0x28] sm:$0xff]
        %v3273 = vld [vmem:[%s462 + $0x30] sm:$0xff]
        %v3274 = vld [vmem:[%s462 + $0x38] sm:$0xff]
        %v3275 = vld [vmem:[%s462 + $0x40] sm:$0xff]
        %v3276 = vld [vmem:[%s462 + $0x48] sm:$0xff]
        %v3277 = vld [vmem:[%s462 + $0x50] sm:$0xff]
        %v3278 = vld [vmem:[%s462 + $0x58] sm:$0xff]
        %v3279 = vld [vmem:[%s462 + $0x60] sm:$0xff]
        %v3280 = vld [vmem:[%s462 + $0x68] sm:$0xff]
        %v3281 = vld [vmem:[%s462 + $0x70] sm:$0xff]
        %v3282 = vld [vmem:[%s462 + $0x78] sm:$0xff]
        %v3283 = vld [vmem:[%s462 + $0x80] sm:$0xff]
        %v3284 = vld [vmem:[%s462 + $0x88] sm:$0xff]
        %v3285 = vld [vmem:[%s462 + $0x90] sm:$0xff]
        %v3286 = vld [vmem:[%s462 + $0x98] sm:$0xff]
        %v3287 = vld [vmem:[%s462 + $0xa0] sm:$0xff]
        %v3288 = vld [vmem:[%s462 + $0xa8] sm:$0xff]
        %v3289 = vld [vmem:[%s462 + $0xb0] sm:$0xff]
        %v3290 = vld [vmem:[%s462 + $0xb8] sm:$0xff]
        %v3291 = vld [vmem:[%s462 + $0xc0] sm:$0xff]
        %v3292 = vld [vmem:[%s462 + $0xc8] sm:$0xff]
        %v3293 = vld [vmem:[%s462 + $0xd0] sm:$0xff]
        %v3294 = vld [vmem:[%s462 + $0xd8] sm:$0xff]
        %v3295 = vld [vmem:[%s462 + $0xe0] sm:$0xff]
        %v3296 = vld [vmem:[%s462 + $0xe8] sm:$0xff]
        %v3297 = vld [vmem:[%s462 + $0xf0] sm:$0xff]
        %v3298 = vld [vmem:[%s462 + $0xf8] sm:$0xff]
        %v3299 = vld [vmem:[%s462 + $0x100] sm:$0xff]
        %v3300 = vld [vmem:[%s462 + $0x108] sm:$0xff]
        %v3301 = vld [vmem:[%s462 + $0x110] sm:$0xff]
        %v3302 = vld [vmem:[%s462 + $0x118] sm:$0xff]
        %v3303 = vld [vmem:[%s462 + $0x120] sm:$0xff]
        %v3304 = vld [vmem:[%s462 + $0x128] sm:$0xff]
        %v3305 = vld [vmem:[%s462 + $0x130] sm:$0xff]
        %v3306 = vld [vmem:[%s462 + $0x138] sm:$0xff]
        %v3307 = vld [vmem:[%s462 + $0x140] sm:$0xff]
        %v3308 = vld [vmem:[%s462 + $0x148] sm:$0xff]
        %v3309 = vld [vmem:[%s462 + $0x150] sm:$0xff]
        %v3310 = vld [vmem:[%s462 + $0x158] sm:$0xff]
        %v3311 = vld [vmem:[%s462 + $0x160] sm:$0xff]
        %v3312 = vld [vmem:[%s462 + $0x168] sm:$0xff]
        %v3313 = vld [vmem:[%s462 + $0x170] sm:$0xff]
        %v3314 = vld [vmem:[%s462 + $0x178] sm:$0xff]
        %v3315 = vld [vmem:[%s462 + $0x180] sm:$0xff]
        %v3316 = vld [vmem:[%s462 + $0x188] sm:$0xff]
        %v3317 = vld [vmem:[%s462 + $0x190] sm:$0xff]
        %v3318 = vld [vmem:[%s462 + $0x198] sm:$0xff]
        %v3319 = vld [vmem:[%s462 + $0x1a0] sm:$0xff]
        %v3320 = vld [vmem:[%s462 + $0x1a8] sm:$0xff]
        %v3321 = vld [vmem:[%s462 + $0x1b0] sm:$0xff]
        %v3322 = vld [vmem:[%s462 + $0x1b8] sm:$0xff]
        %v3323 = vld [vmem:[%s462 + $0x1c0] sm:$0xff]
        %v3324 = vld [vmem:[%s462 + $0x1c8] sm:$0xff]
        %v3325 = vld [vmem:[%s462 + $0x1d0] sm:$0xff]
        %v3326 = vld [vmem:[%s462 + $0x1d8] sm:$0xff]
        %v3327 = vld [vmem:[%s462 + $0x1e0] sm:$0xff]
        %v3328 = vld [vmem:[%s462 + $0x1e8] sm:$0xff]
        %v3329 = vld [vmem:[%s462 + $0x1f0] sm:$0xff]
        %v3330 = vld [vmem:[%s462 + $0x1f8] sm:$0xff]
        %v3331 = vadd.f32 %v3203, %v3267
        %v3332 = vadd.f32 %v3204, %v3268
        %v3333 = vadd.f32 %v3205, %v3269
        %v3334 = vadd.f32 %v3206, %v3270
        %v3335 = vadd.f32 %v3207, %v3271
        %v3336 = vadd.f32 %v3208, %v3272
        %v3337 = vadd.f32 %v3209, %v3273
        %v3338 = vadd.f32 %v3210, %v3274
        %v3339 = vadd.f32 %v3211, %v3275
        %v3340 = vadd.f32 %v3212, %v3276
        %v3341 = vadd.f32 %v3213, %v3277
        %v3342 = vadd.f32 %v3214, %v3278
        %v3343 = vadd.f32 %v3215, %v3279
        %v3344 = vadd.f32 %v3216, %v3280
        %v3345 = vadd.f32 %v3217, %v3281
        %v3346 = vadd.f32 %v3218, %v3282
        %v3347 = vadd.f32 %v3219, %v3283
        %v3348 = vadd.f32 %v3220, %v3284
        %v3349 = vadd.f32 %v3221, %v3285
        %v3350 = vadd.f32 %v3222, %v3286
        %v3351 = vadd.f32 %v3223, %v3287
        %v3352 = vadd.f32 %v3224, %v3288
        %v3353 = vadd.f32 %v3225, %v3289
        %v3354 = vadd.f32 %v3226, %v3290
        %v3355 = vadd.f32 %v3227, %v3291
        %v3356 = vadd.f32 %v3228, %v3292
        %v3357 = vadd.f32 %v3229, %v3293
        %v3358 = vadd.f32 %v3230, %v3294
        %v3359 = vadd.f32 %v3231, %v3295
        %v3360 = vadd.f32 %v3232, %v3296
        %v3361 = vadd.f32 %v3233, %v3297
        %v3362 = vadd.f32 %v3234, %v3298
        %v3363 = vadd.f32 %v3235, %v3299
        %v3364 = vadd.f32 %v3236, %v3300
        %v3365 = vadd.f32 %v3237, %v3301
        %v3366 = vadd.f32 %v3238, %v3302
        %v3367 = vadd.f32 %v3239, %v3303
        %v3368 = vadd.f32 %v3240, %v3304
        %v3369 = vadd.f32 %v3241, %v3305
        %v3370 = vadd.f32 %v3242, %v3306
        %v3371 = vadd.f32 %v3243, %v3307
        %v3372 = vadd.f32 %v3244, %v3308
        %v3373 = vadd.f32 %v3245, %v3309
        %v3374 = vadd.f32 %v3246, %v3310
        %v3375 = vadd.f32 %v3247, %v3311
        %v3376 = vadd.f32 %v3248, %v3312
        %v3377 = vadd.f32 %v3249, %v3313
        %v3378 = vadd.f32 %v3250, %v3314
        %v3379 = vadd.f32 %v3251, %v3315
        %v3380 = vadd.f32 %v3252, %v3316
        %v3381 = vadd.f32 %v3253, %v3317
        %v3382 = vadd.f32 %v3254, %v3318
        %v3383 = vadd.f32 %v3255, %v3319
        %v3384 = vadd.f32 %v3256, %v3320
        %v3385 = vadd.f32 %v3257, %v3321
        %v3386 = vadd.f32 %v3258, %v3322
        %v3387 = vadd.f32 %v3259, %v3323
        %v3388 = vadd.f32 %v3260, %v3324
        %v3389 = vadd.f32 %v3261, %v3325
        %v3390 = vadd.f32 %v3262, %v3326
        %v3391 = vadd.f32 %v3263, %v3327
        %v3392 = vadd.f32 %v3264, %v3328
        %v3393 = vadd.f32 %v3265, %v3329
        %v3394 = vadd.f32 %v3266, %v3330
        %v3395 = vmax.f32 %v3331, 0.0
        %v3396 = vmax.f32 %v3332, 0.0
        %v3397 = vmax.f32 %v3333, 0.0
        %v3398 = vmax.f32 %v3334, 0.0
        %v3399 = vmax.f32 %v3335, 0.0
        %v3400 = vmax.f32 %v3336, 0.0
        %v3401 = vmax.f32 %v3337, 0.0
        %v3402 = vmax.f32 %v3338, 0.0
        %v3403 = vmax.f32 %v3339, 0.0
        %v3404 = vmax.f32 %v3340, 0.0
        %v3405 = vmax.f32 %v3341, 0.0
        %v3406 = vmax.f32 %v3342, 0.0
        %v3407 = vmax.f32 %v3343, 0.0
        %v3408 = vmax.f32 %v3344, 0.0
        %v3409 = vmax.f32 %v3345, 0.0
        %v3410 = vmax.f32 %v3346, 0.0
        %v3411 = vmax.f32 %v3347, 0.0
        %v3412 = vmax.f32 %v3348, 0.0
        %v3413 = vmax.f32 %v3349, 0.0
        %v3414 = vmax.f32 %v3350, 0.0
        %v3415 = vmax.f32 %v3351, 0.0
        %v3416 = vmax.f32 %v3352, 0.0
        %v3417 = vmax.f32 %v3353, 0.0
        %v3418 = vmax.f32 %v3354, 0.0
        %v3419 = vmax.f32 %v3355, 0.0
        %v3420 = vmax.f32 %v3356, 0.0
        %v3421 = vmax.f32 %v3357, 0.0
        %v3422 = vmax.f32 %v3358, 0.0
        %v3423 = vmax.f32 %v3359, 0.0
        %v3424 = vmax.f32 %v3360, 0.0
        %v3425 = vmax.f32 %v3361, 0.0
        %v3426 = vmax.f32 %v3362, 0.0
        %v3427 = vmax.f32 %v3363, 0.0
        %v3428 = vmax.f32 %v3364, 0.0
        %v3429 = vmax.f32 %v3365, 0.0
        %v3430 = vmax.f32 %v3366, 0.0
        %v3431 = vmax.f32 %v3367, 0.0
        %v3432 = vmax.f32 %v3368, 0.0
        %v3433 = vmax.f32 %v3369, 0.0
        %v3434 = vmax.f32 %v3370, 0.0
        %v3435 = vmax.f32 %v3371, 0.0
        %v3436 = vmax.f32 %v3372, 0.0
        %v3437 = vmax.f32 %v3373, 0.0
        %v3438 = vmax.f32 %v3374, 0.0
        %v3439 = vmax.f32 %v3375, 0.0
        %v3440 = vmax.f32 %v3376, 0.0
        %v3441 = vmax.f32 %v3377, 0.0
        %v3442 = vmax.f32 %v3378, 0.0
        %v3443 = vmax.f32 %v3379, 0.0
        %v3444 = vmax.f32 %v3380, 0.0
        %v3445 = vmax.f32 %v3381, 0.0
        %v3446 = vmax.f32 %v3382, 0.0
        %v3447 = vmax.f32 %v3383, 0.0
        %v3448 = vmax.f32 %v3384, 0.0
        %v3449 = vmax.f32 %v3385, 0.0
        %v3450 = vmax.f32 %v3386, 0.0
        %v3451 = vmax.f32 %v3387, 0.0
        %v3452 = vmax.f32 %v3388, 0.0
        %v3453 = vmax.f32 %v3389, 0.0
        %v3454 = vmax.f32 %v3390, 0.0
        %v3455 = vmax.f32 %v3391, 0.0
        %v3456 = vmax.f32 %v3392, 0.0
        %v3457 = vmax.f32 %v3393, 0.0
        %v3458 = vmax.f32 %v3394, 0.0
        %3459 = vst [vmem:[%s530] sm:$0xff] %v3395
        %3460 = vst [vmem:[%s530 + $0x8] sm:$0xff] %v3396
        %3461 = vst [vmem:[%s530 + $0x10] sm:$0xff] %v3397
        %3462 = vst [vmem:[%s530 + $0x18] sm:$0xff] %v3398
        %3463 = vst [vmem:[%s530 + $0x20] sm:$0xff] %v3399
        %3464 = vst [vmem:[%s530 + $0x28] sm:$0xff] %v3400
        %3465 = vst [vmem:[%s530 + $0x30] sm:$0xff] %v3401
        %3466 = vst [vmem:[%s530 + $0x38] sm:$0xff] %v3402
        %3467 = vst [vmem:[%s530 + $0x40] sm:$0xff] %v3403
        %3468 = vst [vmem:[%s530 + $0x48] sm:$0xff] %v3404
        %3469 = vst [vmem:[%s530 + $0x50] sm:$0xff] %v3405
        %3470 = vst [vmem:[%s530 + $0x58] sm:$0xff] %v3406
        %3471 = vst [vmem:[%s530 + $0x60] sm:$0xff] %v3407
        %3472 = vst [vmem:[%s530 + $0x68] sm:$0xff] %v3408
        %3473 = vst [vmem:[%s530 + $0x70] sm:$0xff] %v3409
        %3474 = vst [vmem:[%s530 + $0x78] sm:$0xff] %v3410
        %3475 = vst [vmem:[%s530 + $0x80] sm:$0xff] %v3411
        %3476 = vst [vmem:[%s530 + $0x88] sm:$0xff] %v3412
        %3477 = vst [vmem:[%s530 + $0x90] sm:$0xff] %v3413
        %3478 = vst [vmem:[%s530 + $0x98] sm:$0xff] %v3414
        %3479 = vst [vmem:[%s530 + $0xa0] sm:$0xff] %v3415
        %3480 = vst [vmem:[%s530 + $0xa8] sm:$0xff] %v3416
        %3481 = vst [vmem:[%s530 + $0xb0] sm:$0xff] %v3417
        %3482 = vst [vmem:[%s530 + $0xb8] sm:$0xff] %v3418
        %3483 = vst [vmem:[%s530 + $0xc0] sm:$0xff] %v3419
        %3484 = vst [vmem:[%s530 + $0xc8] sm:$0xff] %v3420
        %3485 = vst [vmem:[%s530 + $0xd0] sm:$0xff] %v3421
        %3486 = vst [vmem:[%s530 + $0xd8] sm:$0xff] %v3422
        %3487 = vst [vmem:[%s530 + $0xe0] sm:$0xff] %v3423
        %3488 = vst [vmem:[%s530 + $0xe8] sm:$0xff] %v3424
        %3489 = vst [vmem:[%s530 + $0xf0] sm:$0xff] %v3425
        %3490 = vst [vmem:[%s530 + $0xf8] sm:$0xff] %v3426
        %3491 = vst [vmem:[%s530 + $0x100] sm:$0xff] %v3427
        %3492 = vst [vmem:[%s530 + $0x108] sm:$0xff] %v3428
        %3493 = vst [vmem:[%s530 + $0x110] sm:$0xff] %v3429
        %3494 = vst [vmem:[%s530 + $0x118] sm:$0xff] %v3430
        %3495 = vst [vmem:[%s530 + $0x120] sm:$0xff] %v3431
        %3496 = vst [vmem:[%s530 + $0x128] sm:$0xff] %v3432
        %3497 = vst [vmem:[%s530 + $0x130] sm:$0xff] %v3433
        %3498 = vst [vmem:[%s530 + $0x138] sm:$0xff] %v3434
        %3499 = vst [vmem:[%s530 + $0x140] sm:$0xff] %v3435
        %3500 = vst [vmem:[%s530 + $0x148] sm:$0xff] %v3436
        %3501 = vst [vmem:[%s530 + $0x150] sm:$0xff] %v3437
        %3502 = vst [vmem:[%s530 + $0x158] sm:$0xff] %v3438
        %3503 = vst [vmem:[%s530 + $0x160] sm:$0xff] %v3439
        %3504 = vst [vmem:[%s530 + $0x168] sm:$0xff] %v3440
        %3505 = vst [vmem:[%s530 + $0x170] sm:$0xff] %v3441
        %3506 = vst [vmem:[%s530 + $0x178] sm:$0xff] %v3442
        %3507 = vst [vmem:[%s530 + $0x180] sm:$0xff] %v3443
        %3508 = vst [vmem:[%s530 + $0x188] sm:$0xff] %v3444
        %3509 = vst [vmem:[%s530 + $0x190] sm:$0xff] %v3445
        %3510 = vst [vmem:[%s530 + $0x198] sm:$0xff] %v3446
        %3511 = vst [vmem:[%s530 + $0x1a0] sm:$0xff] %v3447
        %3512 = vst [vmem:[%s530 + $0x1a8] sm:$0xff] %v3448
        %3513 = vst [vmem:[%s530 + $0x1b0] sm:$0xff] %v3449
        %3514 = vst [vmem:[%s530 + $0x1b8] sm:$0xff] %v3450
        %3515 = vst [vmem:[%s530 + $0x1c0] sm:$0xff] %v3451
        %3516 = vst [vmem:[%s530 + $0x1c8] sm:$0xff] %v3452
        %3517 = vst [vmem:[%s530 + $0x1d0] sm:$0xff] %v3453
        %3518 = vst [vmem:[%s530 + $0x1d8] sm:$0xff] %v3454
        %3519 = vst [vmem:[%s530 + $0x1e0] sm:$0xff] %v3455
        %3520 = vst [vmem:[%s530 + $0x1e8] sm:$0xff] %v3456
        %3521 = vst [vmem:[%s530 + $0x1f0] sm:$0xff] %v3457
        %3522 = vst [vmem:[%s530 + $0x1f8] sm:$0xff] %v3458
        %s3523 = sand.u32 %s298, 1
        %s3524 = scalar_lea.sflag [#allocation5], %s3523
        %s3525 = sand.u32 %s298, 1
        %s3526 = smul.addr %s3525, 512
        %s3527 = scalar_lea.vmem [#allocation17], %s3526
        // Predicated region
        $region101: #{tpu_custom_call.1} parent=67 // pred_check
          %p3528 = pneg %p308
        $region102: #{tpu_custom_call.1} parent=67 // pred_check_branch
          %3530 = sbr.rel (%p3528) target = $region104
        $region103: #{tpu_custom_call.1} parent=67 // pred_region
          %s3531 = smul.u32 2, %s33
          %s3533 = ssub.s32 8192, 8192
          %3534 = vsyncadd %s3524, %s3533
          %s3535 = smul.addr %s3531, 32
          %s3536 = smul.addr %s3535, 128
          %s3537 = scalar_lea.hbm %s12, %s3536
          %s3538 = sshll.u32 %s3527, 4
          %s3539 = int_to_ptr.vmem [resolvable:$true] %s3538
          %3544 = dma.vmem_to_hbm [thread:$0]  %s3539, 8192, %s3537, %s3524, 512, 512, 32
        $region104: #{tpu_custom_call.1} parent=67 // pred_fallthru
          _
      $region68: #{tpu_custom_call.1} parent=5 // pred_fallthru
        _
      %p3545 = scmp.le.s32.totalorder 2, %s28
      // Predicated region
      $region105: #{tpu_custom_call.1} parent=5 // pred_check
        %p3546 = pneg %p3545
      $region106: #{tpu_custom_call.1} parent=5 // pred_check_branch
        %3548 = sbr.rel (%p3546) target = $region108
      $region107: #{tpu_custom_call.1} parent=5 // pred_region
        %s3549 = ssub.s32 %s28, 2
        // Predicated region
        $region109: #{tpu_custom_call.1} parent=107 // pred_check
          %p3550 = pneg %p314
        $region110: #{tpu_custom_call.1} parent=107 // pred_check_branch
          %3552 = sbr.rel (%p3550) target = $region112
        $region111: #{tpu_custom_call.1} parent=107 // pred_region
          %s3553 = sand.u32 %s299, 1
          %s3554 = scalar_lea.sflag [#allocation5], %s3553
          %s3555 = sand.u32 %s299, 1
          %s3556 = smul.addr %s3555, 512
          %s3557 = scalar_lea.vmem [#allocation17], %s3556
          %3558 = dma.done %s3554, 8192
        $region112: #{tpu_custom_call.1} parent=107 // pred_fallthru
          _
      $region108: #{tpu_custom_call.1} parent=5 // pred_fallthru
        _
    $region6: #{tpu_custom_call.1} parent=1 // loop_footer
      %s32 = sadd.s32 1, %s28
    $region7: #{tpu_custom_call.1} parent=1 // loop_footer_branch
      %27 = sbr.rel target = $region3
    $region8: #{tpu_custom_call.1} parent=1 // loop_exit
      _
    %3559 = vsyncpa [#allocation4], 1
    %s3560 = scalar_lea.sflag [#allocation4], 1
    %3561 = vsyncpa %s3560, 1
    %3562 = vsyncpa [#allocation7], 1
    %3563 = vsyncpa [#allocation10], 1
    %3564 = vsyncpa [#allocation13], 1
    %3565 = vsyncpa [#allocation16], 1
    %3566 = vsyncpa [#allocation5], 1
    %s3567 = scalar_lea.sflag [#allocation5], 1
    %3568 = vsyncpa %s3567, 1

</llo_original>
